<compile_context>
chip_gen: v5e
topology: v5e:2x2
jax: 0.10.0
libtpu: 0.0.40
codegen_flags: <defaults>
</compile_context>

<pallas_src>
import functools

import numpy as np
import jax
import jax.numpy as jnp
from jax import lax
from jax.experimental import pallas as pl
from jax.experimental.pallas import tpu as pltpu

C_IN = 8    # fixed by the module: ConvTranspose2d(8, 1, ...)
N_IMG = 4   # B, G, R, mask deconvs per batch element (shared weights)


def _round_up(x, m):
    return -(-x // m) * m


def _axis_plan(K, stride, pad, n_in, n_out):
    """Static polyphase decomposition of one ConvTranspose axis.

    out[op + n*stride] = sum_j x[n + q0 - j] * w[j*stride + p]
        with p = (op+pad) % stride, q0 = (op+pad)//stride, 0 <= j < J.
    Returns (phase_len, phases, pad_lo, pad_hi, shifts) where
    phases[op] = (q0, [(j, ktap), ...]) and `shifts` are the distinct
    padded-window offsets (q0 - j + pad_lo) used by any phase/tap.
    """
    n_ph = -(-n_out // stride)                    # ceil(n_out / stride)
    phases = []
    for op in range(stride):
        p = (op + pad) % stride
        q0 = (op + pad) // stride
        J = -(-(K - p) // stride)                 # ceil((K - p) / stride)
        phases.append((q0, [(j, j * stride + p) for j in range(J)]))
    pad_lo = max([len(t) - 1 - q0 for (q0, t) in phases] + [0])
    pad_hi = max([q0 + n_ph - 1 - (n_in - 1) for (q0, _) in phases] + [0])
    shifts = sorted({q0 - j + pad_lo for (q0, taps) in phases for (j, _) in taps})
    return n_ph, phases, pad_lo, pad_hi, shifts


def _build_weight_blocks(w_pt, K, stride, plan_y, plan_x):
    """Per-shift weight blocks (n_shifts, PH, C) with the 1/255 folded in."""
    s = stride
    _, phases_y, padl_y, _, shifts_y = plan_y
    _, phases_x, padl_x, _, shifts_x = plan_x
    shifts2d = [(sy, sx) for sy in shifts_y for sx in shifts_x]
    sidx = {sh: i for i, sh in enumerate(shifts2d)}
    PH = max(s * s, 8)                            # pad phase rows to >= 1 sublane tile

    sel = np.zeros((len(shifts2d), PH, K * K), np.float32)
    for opy in range(s):
        q0y, ytaps = phases_y[opy]
        for opx in range(s):
            q0x, xtaps = phases_x[opx]
            ph = opy * s + opx
            for (jy, ky) in ytaps:
                sy = q0y - jy + padl_y
                for (jx, kx) in xtaps:
                    sx = q0x - jx + padl_x
                    sel[sidx[(sy, sx)], ph, ky * K + kx] = 1.0

    w_flat = w_pt[:, 0, :, :].reshape(C_IN, K * K) * (1.0 / 255.0)   # (C, K*K)
    wmat = jnp.einsum('spk,ck->spc', sel, w_flat)                    # (n_shifts, PH, C)
    return wmat.astype(jnp.float32), shifts2d, PH


def _ops_draw_kernel(mult_ref, d_ref, w_ref, out_ref, *, NB, offs, Spad, n_out_ph):
    """One grid step: NB batch elements x 4 deconv images.

    mult_ref: (NB, 4, Sext)   per-pixel multipliers [c0, c1, c2, thresh(m)]
    d_ref:    (NB, C, Sext)   padded+flattened d, channel on sublanes
    w_ref:    (n_shifts, PH, C) per-shift weight blocks (phases x channels)
    out_ref:  (NB, 4, s*s, Spad) phase-major, lane-dense outputs
    """
    n_sh = len(offs)
    wblk = [w_ref[si] for si in range(n_sh)]               # tiny (PH, C) tiles, hoisted
    for b in range(NB):
        dmat = d_ref[b]                                    # (C, Sext)
        for img in range(N_IMG):
            # stage 1: product image (c_i * d  /  thresh(m) * d), full-lane vregs
            x = mult_ref[b, img:img + 1, :] * dmat         # (C, Sext)
            # stage 2: polyphase transposed conv as per-shift MXU dots
            acc = None
            for si in range(n_sh):
                xs = x[:, offs[si]:offs[si] + Spad]        # shifted window (C, Spad)
                part = jnp.dot(wblk[si], xs,
                               preferred_element_type=jnp.float32)   # (PH, Spad)
                acc = part if acc is None else acc + part
            out_ref[b, img] = acc[:n_out_ph]               # (s*s, Spad) lane-dense store


def ops_draw_forward(c, d, m_, w_pt, K, stride, pad):
    N, _, H, W = c.shape
    assert d.shape[1] == C_IN and 0 <= pad <= K - 1
    s = stride
    HOUT = (H - 1) * s - 2 * pad + K
    WOUT = (W - 1) * s - 2 * pad + K

    plan_y = _axis_plan(K, s, pad, H, HOUT)
    plan_x = _axis_plan(K, s, pad, W, WOUT)
    Hp, _, padl_y, padhi_y, _ = plan_y
    Wp, _, padl_x, padhi_x, _ = plan_x
    Hpad = H + padl_y + padhi_y
    Wpad = W + padl_x + padhi_x
    Spad = Hpad * Wpad

    wmat, shifts2d, PH = _build_weight_blocks(w_pt, K, s, plan_y, plan_x)
    offs = tuple(sy * Wpad + sx for (sy, sx) in shifts2d)
    n_sh = len(offs)
    Sext = _round_up(Spad + max(offs), 128)        # zero-extended, lane-tile aligned

    # ---- wrapper-side layout plumbing (cheap XLA pads/reshapes) -------------
    mthr = jnp.where(m_ < 0.1, 0.0, m_)            # m_[m_ < 0.1] = 0
    mult = jnp.concatenate([c, mthr[:, :1]], axis=1)          # (N, 4, H, W)

    def pad_flat(x):
        xp = jnp.pad(x, ((0, 0), (0, 0), (padl_y, padhi_y), (padl_x, padhi_x)))
        xp = xp.reshape(N, x.shape[1], Spad)
        return jnp.pad(xp, ((0, 0), (0, 0), (0, Sext - Spad)))

    mult_p = pad_flat(mult).astype(jnp.float32)    # (N, 4, Sext)
    d_p = pad_flat(d).astype(jnp.float32)          # (N, C, Sext)

    # batch blocking: amortize per-grid-step overhead, keep >= 2 steps (v7x megacore)
    NB = 1
    for cand in (8, 4, 2):
        if N % cand == 0 and N // cand >= 2:
            NB = cand
            break

    kernel = functools.partial(_ops_draw_kernel, NB=NB, offs=offs, Spad=Spad,
                               n_out_ph=s * s)

    out = pl.pallas_call(
        kernel,
        out_shape=jax.ShapeDtypeStruct((N, N_IMG, s * s, Spad), jnp.float32),
        grid=(N // NB,),
        in_specs=[
            pl.BlockSpec((NB, N_IMG, Sext), lambda n: (n, 0, 0)),
            pl.BlockSpec((NB, C_IN, Sext), lambda n: (n, 0, 0)),
            pl.BlockSpec((n_sh, PH, C_IN), lambda n: (0, 0, 0)),
        ],
        out_specs=pl.BlockSpec((NB, N_IMG, s * s, Spad), lambda n: (n, 0, 0, 0)),
        compiler_params=pltpu.CompilerParams(dimension_semantics=("parallel",)),
    )(mult_p, d_p, wmat)

    # ---- depth-to-space + crop (wrapper, XLA) --------------------------------
    out = out.reshape(N, N_IMG, s, s, Hpad, Wpad)[:, :, :, :, :Hp, :Wp]
    out = jnp.transpose(out, (0, 1, 4, 2, 5, 3)).reshape(N, N_IMG, Hp * s, Wp * s)
    out = out[:, :, :HOUT, :WOUT]
    return out[:, :3], out[:, 3:4]


# ---------------------------------------------------------------------------
# Pure JAX/XLA reference (same math, via lax.conv_general_dilated)
# ---------------------------------------------------------------------------
def ops_draw_reference(c, d, m_, w_pt, K, stride, pad):
    rhs = jnp.transpose(jnp.flip(w_pt, axis=(2, 3)), (1, 0, 2, 3))  # (1, C, K, K) OIHW

    def deconv(x):
        return lax.conv_general_dilated(
            x, rhs, window_strides=(1, 1),
            padding=[(K - 1 - pad, K - 1 - pad)] * 2,
            lhs_dilation=(stride, stride),
            dimension_numbers=("NCHW", "OIHW", "NCHW"),
            precision=lax.Precision.HIGHEST)

    b = deconv(c[:, 0:1] * d)
    g = deconv(c[:, 1:2] * d)
    r = deconv(c[:, 2:3] * d)
    mt = jnp.where(m_ < 0.1, 0.0, m_)
    m = deconv(d * mt[:, :1]) / 255.0
    y = jnp.concatenate([b, g, r], axis=1) / 255.0
    return y, m


if __name__ == "__main__":
    key = jax.random.PRNGKey(0)

    def run_check(N, H, W, drawSize, stridev, padv, k):
        kc, kd, km, kw = jax.random.split(k, 4)
        c = jax.random.uniform(kc, (N, 3, H, W), jnp.float32)
        d = jax.random.uniform(kd, (N, C_IN, H, W), jnp.float32)
        m_ = jax.random.uniform(km, (N, 1, H, W), jnp.float32)
        # deterministic stand-in for loadKernal(...) grayscale images (0..255)
        # TODO(synk): original weights come from cv2-loaded image files; synthesized here.
        w_pt = jax.random.uniform(kw, (C_IN, 1, drawSize, drawSize), jnp.float32,
                                  0.0, 255.0)

        fwd = jax.jit(ops_draw_forward, static_argnums=(4, 5, 6))
        y, m = fwd(c, d, m_, w_pt, drawSize, stridev, padv)
        (y, m) = jax.block_until_ready((y, m))

        y_ref, m_ref = ops_draw_reference(c, d, m_, w_pt, drawSize, stridev, padv)
        HOUT = (H - 1) * stridev - 2 * padv + drawSize
        WOUT = (W - 1) * stridev - 2 * padv + drawSize
        assert y.shape == (N, 3, HOUT, WOUT) and m.shape == (N, 1, HOUT, WOUT)
        # tolerant of MXU multi-pass f32 rounding + different accumulation order
        assert jnp.allclose(y, y_ref, atol=2e-2, rtol=2e-3), \
            float(jnp.max(jnp.abs(y - y_ref)))
        assert jnp.allclose(m, m_ref, atol=2e-2, rtol=2e-3), \
            float(jnp.max(jnp.abs(m - m_ref)))

    k1, k2 = jax.random.split(key)
    run_check(2, 16, 16, 4, 2, 1, k1)   # main config: 16x16 -> 32x32
    run_check(2, 8, 8, 3, 2, 0, k2)     # pad=0, stride not dividing K: 8x8 -> 17x17
    print("KERNEL_OK")
</pallas_src>

<mosaic_0001>
module attributes {stable_mosaic.version = 11 : i64} {
  func.func @_ops_draw_kernel(%arg0: i32, %arg1: memref<1x4x384xf32, #tpu.memory_space<vmem>>, %arg2: memref<1x8x384xf32, #tpu.memory_space<vmem>>, %arg3: memref<9x8x8xf32, #tpu.memory_space<vmem>>, %arg4: memref<1x4x4x324xf32, #tpu.memory_space<vmem>>) attributes {dimension_semantics = [#tpu.dimension_semantics<parallel>], iteration_bounds = array<i64: 2>, scalar_prefetch = 0 : i64, scratch_operands = 0 : i64, tpu.core_type = #tpu.core_type<tc>, window_params = [{transform_indices = @transform_0, window_bounds = array<i64: 1, 4, 384>}, {transform_indices = @transform_1, window_bounds = array<i64: 1, 8, 384>}, {pipeline_mode = #tpu.pipeline_mode<synchronous>, transform_indices = @transform_2, window_bounds = array<i64: 9, 8, 8>}, {transform_indices = @transform_3, window_bounds = array<i64: 1, 4, 4, 324>}]} {
    %c0 = arith.constant 0 : index
    %c0_0 = arith.constant 0 : index
    %c0_1 = arith.constant 0 : index
    %0 = vector.load %arg3[%c0, %c0_0, %c0_1] : memref<9x8x8xf32, #tpu.memory_space<vmem>>, vector<1x8x8xf32>
    %1 = vector.shape_cast %0 : vector<1x8x8xf32> to vector<8x8xf32>
    %c1 = arith.constant 1 : index
    %c0_2 = arith.constant 0 : index
    %c0_3 = arith.constant 0 : index
    %2 = vector.load %arg3[%c1, %c0_2, %c0_3] : memref<9x8x8xf32, #tpu.memory_space<vmem>>, vector<1x8x8xf32>
    %3 = vector.shape_cast %2 : vector<1x8x8xf32> to vector<8x8xf32>
    %c2 = arith.constant 2 : index
    %c0_4 = arith.constant 0 : index
    %c0_5 = arith.constant 0 : index
    %4 = vector.load %arg3[%c2, %c0_4, %c0_5] : memref<9x8x8xf32, #tpu.memory_space<vmem>>, vector<1x8x8xf32>
    %5 = vector.shape_cast %4 : vector<1x8x8xf32> to vector<8x8xf32>
    %c3 = arith.constant 3 : index
    %c0_6 = arith.constant 0 : index
    %c0_7 = arith.constant 0 : index
    %6 = vector.load %arg3[%c3, %c0_6, %c0_7] : memref<9x8x8xf32, #tpu.memory_space<vmem>>, vector<1x8x8xf32>
    %7 = vector.shape_cast %6 : vector<1x8x8xf32> to vector<8x8xf32>
    %c4 = arith.constant 4 : index
    %c0_8 = arith.constant 0 : index
    %c0_9 = arith.constant 0 : index
    %8 = vector.load %arg3[%c4, %c0_8, %c0_9] : memref<9x8x8xf32, #tpu.memory_space<vmem>>, vector<1x8x8xf32>
    %9 = vector.shape_cast %8 : vector<1x8x8xf32> to vector<8x8xf32>
    %c5 = arith.constant 5 : index
    %c0_10 = arith.constant 0 : index
    %c0_11 = arith.constant 0 : index
    %10 = vector.load %arg3[%c5, %c0_10, %c0_11] : memref<9x8x8xf32, #tpu.memory_space<vmem>>, vector<1x8x8xf32>
    %11 = vector.shape_cast %10 : vector<1x8x8xf32> to vector<8x8xf32>
    %c6 = arith.constant 6 : index
    %c0_12 = arith.constant 0 : index
    %c0_13 = arith.constant 0 : index
    %12 = vector.load %arg3[%c6, %c0_12, %c0_13] : memref<9x8x8xf32, #tpu.memory_space<vmem>>, vector<1x8x8xf32>
    %13 = vector.shape_cast %12 : vector<1x8x8xf32> to vector<8x8xf32>
    %c7 = arith.constant 7 : index
    %c0_14 = arith.constant 0 : index
    %c0_15 = arith.constant 0 : index
    %14 = vector.load %arg3[%c7, %c0_14, %c0_15] : memref<9x8x8xf32, #tpu.memory_space<vmem>>, vector<1x8x8xf32>
    %15 = vector.shape_cast %14 : vector<1x8x8xf32> to vector<8x8xf32>
    %c8 = arith.constant 8 : index
    %c0_16 = arith.constant 0 : index
    %c0_17 = arith.constant 0 : index
    %16 = vector.load %arg3[%c8, %c0_16, %c0_17] : memref<9x8x8xf32, #tpu.memory_space<vmem>>, vector<1x8x8xf32>
    %17 = vector.shape_cast %16 : vector<1x8x8xf32> to vector<8x8xf32>
    %c0_18 = arith.constant 0 : index
    %c0_19 = arith.constant 0 : index
    %c0_20 = arith.constant 0 : index
    %18 = vector.load %arg2[%c0_18, %c0_19, %c0_20] : memref<1x8x384xf32, #tpu.memory_space<vmem>>, vector<1x8x384xf32>
    %19 = vector.shape_cast %18 : vector<1x8x384xf32> to vector<8x384xf32>
    %c0_21 = arith.constant 0 : index
    %c0_22 = arith.constant 0 : index
    %c0_23 = arith.constant 0 : index
    %20 = vector.load %arg1[%c0_21, %c0_22, %c0_23] : memref<1x4x384xf32, #tpu.memory_space<vmem>>, vector<1x1x384xf32>
    %21 = vector.shape_cast %20 : vector<1x1x384xf32> to vector<1x384xf32>
    %22 = vector.broadcast %21 : vector<1x384xf32> to vector<8x384xf32>
    %23 = arith.mulf %22, %19 : vector<8x384xf32>
    %24 = vector.extract_strided_slice %23 {offsets = [0, 0], sizes = [8, 324], strides = [1, 1]} : vector<8x384xf32> to vector<8x324xf32>
    %cst = arith.constant dense<0.000000e+00> : vector<8x324xf32>
    %25 = tpu.matmul %1, %24, %cst {dimension_numbers = #tpu.dot_dimension_numbers<[1], [0], [0], [1], [0, 0, 1, 1], [], []>} : vector<8x8xf32>, vector<8x324xf32>, vector<8x324xf32> -> vector<8x324xf32>
    %26 = vector.extract_strided_slice %23 {offsets = [0, 1], sizes = [8, 324], strides = [1, 1]} : vector<8x384xf32> to vector<8x324xf32>
    %cst_24 = arith.constant dense<0.000000e+00> : vector<8x324xf32>
    %27 = tpu.matmul %3, %26, %cst_24 {dimension_numbers = #tpu.dot_dimension_numbers<[1], [0], [0], [1], [0, 0, 1, 1], [], []>} : vector<8x8xf32>, vector<8x324xf32>, vector<8x324xf32> -> vector<8x324xf32>
    %28 = arith.addf %25, %27 : vector<8x324xf32>
    %29 = vector.extract_strided_slice %23 {offsets = [0, 2], sizes = [8, 324], strides = [1, 1]} : vector<8x384xf32> to vector<8x324xf32>
    %cst_25 = arith.constant dense<0.000000e+00> : vector<8x324xf32>
    %30 = tpu.matmul %5, %29, %cst_25 {dimension_numbers = #tpu.dot_dimension_numbers<[1], [0], [0], [1], [0, 0, 1, 1], [], []>} : vector<8x8xf32>, vector<8x324xf32>, vector<8x324xf32> -> vector<8x324xf32>
    %31 = arith.addf %28, %30 : vector<8x324xf32>
    %32 = vector.extract_strided_slice %23 {offsets = [0, 18], sizes = [8, 324], strides = [1, 1]} : vector<8x384xf32> to vector<8x324xf32>
    %cst_26 = arith.constant dense<0.000000e+00> : vector<8x324xf32>
    %33 = tpu.matmul %7, %32, %cst_26 {dimension_numbers = #tpu.dot_dimension_numbers<[1], [0], [0], [1], [0, 0, 1, 1], [], []>} : vector<8x8xf32>, vector<8x324xf32>, vector<8x324xf32> -> vector<8x324xf32>
    %34 = arith.addf %31, %33 : vector<8x324xf32>
    %35 = vector.extract_strided_slice %23 {offsets = [0, 19], sizes = [8, 324], strides = [1, 1]} : vector<8x384xf32> to vector<8x324xf32>
    %cst_27 = arith.constant dense<0.000000e+00> : vector<8x324xf32>
    %36 = tpu.matmul %9, %35, %cst_27 {dimension_numbers = #tpu.dot_dimension_numbers<[1], [0], [0], [1], [0, 0, 1, 1], [], []>} : vector<8x8xf32>, vector<8x324xf32>, vector<8x324xf32> -> vector<8x324xf32>
    %37 = arith.addf %34, %36 : vector<8x324xf32>
    %38 = vector.extract_strided_slice %23 {offsets = [0, 20], sizes = [8, 324], strides = [1, 1]} : vector<8x384xf32> to vector<8x324xf32>
    %cst_28 = arith.constant dense<0.000000e+00> : vector<8x324xf32>
    %39 = tpu.matmul %11, %38, %cst_28 {dimension_numbers = #tpu.dot_dimension_numbers<[1], [0], [0], [1], [0, 0, 1, 1], [], []>} : vector<8x8xf32>, vector<8x324xf32>, vector<8x324xf32> -> vector<8x324xf32>
    %40 = arith.addf %37, %39 : vector<8x324xf32>
    %41 = vector.extract_strided_slice %23 {offsets = [0, 36], sizes = [8, 324], strides = [1, 1]} : vector<8x384xf32> to vector<8x324xf32>
    %cst_29 = arith.constant dense<0.000000e+00> : vector<8x324xf32>
    %42 = tpu.matmul %13, %41, %cst_29 {dimension_numbers = #tpu.dot_dimension_numbers<[1], [0], [0], [1], [0, 0, 1, 1], [], []>} : vector<8x8xf32>, vector<8x324xf32>, vector<8x324xf32> -> vector<8x324xf32>
    %43 = arith.addf %40, %42 : vector<8x324xf32>
    %44 = vector.extract_strided_slice %23 {offsets = [0, 37], sizes = [8, 324], strides = [1, 1]} : vector<8x384xf32> to vector<8x324xf32>
    %cst_30 = arith.constant dense<0.000000e+00> : vector<8x324xf32>
    %45 = tpu.matmul %15, %44, %cst_30 {dimension_numbers = #tpu.dot_dimension_numbers<[1], [0], [0], [1], [0, 0, 1, 1], [], []>} : vector<8x8xf32>, vector<8x324xf32>, vector<8x324xf32> -> vector<8x324xf32>
    %46 = arith.addf %43, %45 : vector<8x324xf32>
    %47 = vector.extract_strided_slice %23 {offsets = [0, 38], sizes = [8, 324], strides = [1, 1]} : vector<8x384xf32> to vector<8x324xf32>
    %cst_31 = arith.constant dense<0.000000e+00> : vector<8x324xf32>
    %48 = tpu.matmul %17, %47, %cst_31 {dimension_numbers = #tpu.dot_dimension_numbers<[1], [0], [0], [1], [0, 0, 1, 1], [], []>} : vector<8x8xf32>, vector<8x324xf32>, vector<8x324xf32> -> vector<8x324xf32>
    %49 = arith.addf %46, %48 : vector<8x324xf32>
    %50 = vector.extract_strided_slice %49 {offsets = [0, 0], sizes = [4, 324], strides = [1, 1]} : vector<8x324xf32> to vector<4x324xf32>
    %c0_32 = arith.constant 0 : index
    %c0_33 = arith.constant 0 : index
    %c0_34 = arith.constant 0 : index
    %c0_35 = arith.constant 0 : index
    %51 = vector.load %arg4[%c0_32, %c0_33, %c0_34, %c0_35] : memref<1x4x4x324xf32, #tpu.memory_space<vmem>>, vector<1x1x4x324xf32>
    %52 = vector.shape_cast %51 : vector<1x1x4x324xf32> to vector<4x324xf32>
    %53 = vector.shape_cast %50 : vector<4x324xf32> to vector<1x1x4x324xf32>
    tpu.vector_store %arg4[%c0_32, %c0_33, %c0_34, %c0_35], %53 {strides = array<i32>} : memref<1x4x4x324xf32, #tpu.memory_space<vmem>>, vector<1x1x4x324xf32>,
    %c0_36 = arith.constant 0 : index
    %c1_37 = arith.constant 1 : index
    %c0_38 = arith.constant 0 : index
    %54 = vector.load %arg1[%c0_36, %c1_37, %c0_38] : memref<1x4x384xf32, #tpu.memory_space<vmem>>, vector<1x1x384xf32>
    %55 = vector.shape_cast %54 : vector<1x1x384xf32> to vector<1x384xf32>
    %56 = vector.broadcast %55 : vector<1x384xf32> to vector<8x384xf32>
    %57 = arith.mulf %56, %19 : vector<8x384xf32>
    %58 = vector.extract_strided_slice %57 {offsets = [0, 0], sizes = [8, 324], strides = [1, 1]} : vector<8x384xf32> to vector<8x324xf32>
    %cst_39 = arith.constant dense<0.000000e+00> : vector<8x324xf32>
    %59 = tpu.matmul %1, %58, %cst_39 {dimension_numbers = #tpu.dot_dimension_numbers<[1], [0], [0], [1], [0, 0, 1, 1], [], []>} : vector<8x8xf32>, vector<8x324xf32>, vector<8x324xf32> -> vector<8x324xf32>
    %60 = vector.extract_strided_slice %57 {offsets = [0, 1], sizes = [8, 324], strides = [1, 1]} : vector<8x384xf32> to vector<8x324xf32>
    %cst_40 = arith.constant dense<0.000000e+00> : vector<8x324xf32>
    %61 = tpu.matmul %3, %60, %cst_40 {dimension_numbers = #tpu.dot_dimension_numbers<[1], [0], [0], [1], [0, 0, 1, 1], [], []>} : vector<8x8xf32>, vector<8x324xf32>, vector<8x324xf32> -> vector<8x324xf32>
    %62 = arith.addf %59, %61 : vector<8x324xf32>
    %63 = vector.extract_strided_slice %57 {offsets = [0, 2], sizes = [8, 324], strides = [1, 1]} : vector<8x384xf32> to vector<8x324xf32>
    %cst_41 = arith.constant dense<0.000000e+00> : vector<8x324xf32>
    %64 = tpu.matmul %5, %63, %cst_41 {dimension_numbers = #tpu.dot_dimension_numbers<[1], [0], [0], [1], [0, 0, 1, 1], [], []>} : vector<8x8xf32>, vector<8x324xf32>, vector<8x324xf32> -> vector<8x324xf32>
    %65 = arith.addf %62, %64 : vector<8x324xf32>
    %66 = vector.extract_strided_slice %57 {offsets = [0, 18], sizes = [8, 324], strides = [1, 1]} : vector<8x384xf32> to vector<8x324xf32>
    %cst_42 = arith.constant dense<0.000000e+00> : vector<8x324xf32>
    %67 = tpu.matmul %7, %66, %cst_42 {dimension_numbers = #tpu.dot_dimension_numbers<[1], [0], [0], [1], [0, 0, 1, 1], [], []>} : vector<8x8xf32>, vector<8x324xf32>, vector<8x324xf32> -> vector<8x324xf32>
    %68 = arith.addf %65, %67 : vector<8x324xf32>
    %69 = vector.extract_strided_slice %57 {offsets = [0, 19], sizes = [8, 324], strides = [1, 1]} : vector<8x384xf32> to vector<8x324xf32>
    %cst_43 = arith.constant dense<0.000000e+00> : vector<8x324xf32>
    %70 = tpu.matmul %9, %69, %cst_43 {dimension_numbers = #tpu.dot_dimension_numbers<[1], [0], [0], [1], [0, 0, 1, 1], [], []>} : vector<8x8xf32>, vector<8x324xf32>, vector<8x324xf32> -> vector<8x324xf32>
    %71 = arith.addf %68, %70 : vector<8x324xf32>
    %72 = vector.extract_strided_slice %57 {offsets = [0, 20], sizes = [8, 324], strides = [1, 1]} : vector<8x384xf32> to vector<8x324xf32>
    %cst_44 = arith.constant dense<0.000000e+00> : vector<8x324xf32>
    %73 = tpu.matmul %11, %72, %cst_44 {dimension_numbers = #tpu.dot_dimension_numbers<[1], [0], [0], [1], [0, 0, 1, 1], [], []>} : vector<8x8xf32>, vector<8x324xf32>, vector<8x324xf32> -> vector<8x324xf32>
    %74 = arith.addf %71, %73 : vector<8x324xf32>
    %75 = vector.extract_strided_slice %57 {offsets = [0, 36], sizes = [8, 324], strides = [1, 1]} : vector<8x384xf32> to vector<8x324xf32>
    %cst_45 = arith.constant dense<0.000000e+00> : vector<8x324xf32>
    %76 = tpu.matmul %13, %75, %cst_45 {dimension_numbers = #tpu.dot_dimension_numbers<[1], [0], [0], [1], [0, 0, 1, 1], [], []>} : vector<8x8xf32>, vector<8x324xf32>, vector<8x324xf32> -> vector<8x324xf32>
    %77 = arith.addf %74, %76 : vector<8x324xf32>
    %78 = vector.extract_strided_slice %57 {offsets = [0, 37], sizes = [8, 324], strides = [1, 1]} : vector<8x384xf32> to vector<8x324xf32>
    %cst_46 = arith.constant dense<0.000000e+00> : vector<8x324xf32>
    %79 = tpu.matmul %15, %78, %cst_46 {dimension_numbers = #tpu.dot_dimension_numbers<[1], [0], [0], [1], [0, 0, 1, 1], [], []>} : vector<8x8xf32>, vector<8x324xf32>, vector<8x324xf32> -> vector<8x324xf32>
    %80 = arith.addf %77, %79 : vector<8x324xf32>
    %81 = vector.extract_strided_slice %57 {offsets = [0, 38], sizes = [8, 324], strides = [1, 1]} : vector<8x384xf32> to vector<8x324xf32>
    %cst_47 = arith.constant dense<0.000000e+00> : vector<8x324xf32>
    %82 = tpu.matmul %17, %81, %cst_47 {dimension_numbers = #tpu.dot_dimension_numbers<[1], [0], [0], [1], [0, 0, 1, 1], [], []>} : vector<8x8xf32>, vector<8x324xf32>, vector<8x324xf32> -> vector<8x324xf32>
    %83 = arith.addf %80, %82 : vector<8x324xf32>
    %84 = vector.extract_strided_slice %83 {offsets = [0, 0], sizes = [4, 324], strides = [1, 1]} : vector<8x324xf32> to vector<4x324xf32>
    %c0_48 = arith.constant 0 : index
    %c1_49 = arith.constant 1 : index
    %c0_50 = arith.constant 0 : index
    %c0_51 = arith.constant 0 : index
    %85 = vector.load %arg4[%c0_48, %c1_49, %c0_50, %c0_51] : memref<1x4x4x324xf32, #tpu.memory_space<vmem>>, vector<1x1x4x324xf32>
    %86 = vector.shape_cast %85 : vector<1x1x4x324xf32> to vector<4x324xf32>
    %87 = vector.shape_cast %84 : vector<4x324xf32> to vector<1x1x4x324xf32>
    tpu.vector_store %arg4[%c0_48, %c1_49, %c0_50, %c0_51], %87 {strides = array<i32>} : memref<1x4x4x324xf32, #tpu.memory_space<vmem>>, vector<1x1x4x324xf32>,
    %c0_52 = arith.constant 0 : index
    %c2_53 = arith.constant 2 : index
    %c0_54 = arith.constant 0 : index
    %88 = vector.load %arg1[%c0_52, %c2_53, %c0_54] : memref<1x4x384xf32, #tpu.memory_space<vmem>>, vector<1x1x384xf32>
    %89 = vector.shape_cast %88 : vector<1x1x384xf32> to vector<1x384xf32>
    %90 = vector.broadcast %89 : vector<1x384xf32> to vector<8x384xf32>
    %91 = arith.mulf %90, %19 : vector<8x384xf32>
    %92 = vector.extract_strided_slice %91 {offsets = [0, 0], sizes = [8, 324], strides = [1, 1]} : vector<8x384xf32> to vector<8x324xf32>
    %cst_55 = arith.constant dense<0.000000e+00> : vector<8x324xf32>
    %93 = tpu.matmul %1, %92, %cst_55 {dimension_numbers = #tpu.dot_dimension_numbers<[1], [0], [0], [1], [0, 0, 1, 1], [], []>} : vector<8x8xf32>, vector<8x324xf32>, vector<8x324xf32> -> vector<8x324xf32>
    %94 = vector.extract_strided_slice %91 {offsets = [0, 1], sizes = [8, 324], strides = [1, 1]} : vector<8x384xf32> to vector<8x324xf32>
    %cst_56 = arith.constant dense<0.000000e+00> : vector<8x324xf32>
    %95 = tpu.matmul %3, %94, %cst_56 {dimension_numbers = #tpu.dot_dimension_numbers<[1], [0], [0], [1], [0, 0, 1, 1], [], []>} : vector<8x8xf32>, vector<8x324xf32>, vector<8x324xf32> -> vector<8x324xf32>
    %96 = arith.addf %93, %95 : vector<8x324xf32>
    %97 = vector.extract_strided_slice %91 {offsets = [0, 2], sizes = [8, 324], strides = [1, 1]} : vector<8x384xf32> to vector<8x324xf32>
    %cst_57 = arith.constant dense<0.000000e+00> : vector<8x324xf32>
    %98 = tpu.matmul %5, %97, %cst_57 {dimension_numbers = #tpu.dot_dimension_numbers<[1], [0], [0], [1], [0, 0, 1, 1], [], []>} : vector<8x8xf32>, vector<8x324xf32>, vector<8x324xf32> -> vector<8x324xf32>
    %99 = arith.addf %96, %98 : vector<8x324xf32>
    %100 = vector.extract_strided_slice %91 {offsets = [0, 18], sizes = [8, 324], strides = [1, 1]} : vector<8x384xf32> to vector<8x324xf32>
    %cst_58 = arith.constant dense<0.000000e+00> : vector<8x324xf32>
    %101 = tpu.matmul %7, %100, %cst_58 {dimension_numbers = #tpu.dot_dimension_numbers<[1], [0], [0], [1], [0, 0, 1, 1], [], []>} : vector<8x8xf32>, vector<8x324xf32>, vector<8x324xf32> -> vector<8x324xf32>
    %102 = arith.addf %99, %101 : vector<8x324xf32>
    %103 = vector.extract_strided_slice %91 {offsets = [0, 19], sizes = [8, 324], strides = [1, 1]} : vector<8x384xf32> to vector<8x324xf32>
    %cst_59 = arith.constant dense<0.000000e+00> : vector<8x324xf32>
    %104 = tpu.matmul %9, %103, %cst_59 {dimension_numbers = #tpu.dot_dimension_numbers<[1], [0], [0], [1], [0, 0, 1, 1], [], []>} : vector<8x8xf32>, vector<8x324xf32>, vector<8x324xf32> -> vector<8x324xf32>
    %105 = arith.addf %102, %104 : vector<8x324xf32>
    %106 = vector.extract_strided_slice %91 {offsets = [0, 20], sizes = [8, 324], strides = [1, 1]} : vector<8x384xf32> to vector<8x324xf32>
    %cst_60 = arith.constant dense<0.000000e+00> : vector<8x324xf32>
    %107 = tpu.matmul %11, %106, %cst_60 {dimension_numbers = #tpu.dot_dimension_numbers<[1], [0], [0], [1], [0, 0, 1, 1], [], []>} : vector<8x8xf32>, vector<8x324xf32>, vector<8x324xf32> -> vector<8x324xf32>
    %108 = arith.addf %105, %107 : vector<8x324xf32>
    %109 = vector.extract_strided_slice %91 {offsets = [0, 36], sizes = [8, 324], strides = [1, 1]} : vector<8x384xf32> to vector<8x324xf32>
    %cst_61 = arith.constant dense<0.000000e+00> : vector<8x324xf32>
    %110 = tpu.matmul %13, %109, %cst_61 {dimension_numbers = #tpu.dot_dimension_numbers<[1], [0], [0], [1], [0, 0, 1, 1], [], []>} : vector<8x8xf32>, vector<8x324xf32>, vector<8x324xf32> -> vector<8x324xf32>
    %111 = arith.addf %108, %110 : vector<8x324xf32>
    %112 = vector.extract_strided_slice %91 {offsets = [0, 37], sizes = [8, 324], strides = [1, 1]} : vector<8x384xf32> to vector<8x324xf32>
    %cst_62 = arith.constant dense<0.000000e+00> : vector<8x324xf32>
    %113 = tpu.matmul %15, %112, %cst_62 {dimension_numbers = #tpu.dot_dimension_numbers<[1], [0], [0], [1], [0, 0, 1, 1], [], []>} : vector<8x8xf32>, vector<8x324xf32>, vector<8x324xf32> -> vector<8x324xf32>
    %114 = arith.addf %111, %113 : vector<8x324xf32>
    %115 = vector.extract_strided_slice %91 {offsets = [0, 38], sizes = [8, 324], strides = [1, 1]} : vector<8x384xf32> to vector<8x324xf32>
    %cst_63 = arith.constant dense<0.000000e+00> : vector<8x324xf32>
    %116 = tpu.matmul %17, %115, %cst_63 {dimension_numbers = #tpu.dot_dimension_numbers<[1], [0], [0], [1], [0, 0, 1, 1], [], []>} : vector<8x8xf32>, vector<8x324xf32>, vector<8x324xf32> -> vector<8x324xf32>
    %117 = arith.addf %114, %116 : vector<8x324xf32>
    %118 = vector.extract_strided_slice %117 {offsets = [0, 0], sizes = [4, 324], strides = [1, 1]} : vector<8x324xf32> to vector<4x324xf32>
    %c0_64 = arith.constant 0 : index
    %c2_65 = arith.constant 2 : index
    %c0_66 = arith.constant 0 : index
    %c0_67 = arith.constant 0 : index
    %119 = vector.load %arg4[%c0_64, %c2_65, %c0_66, %c0_67] : memref<1x4x4x324xf32, #tpu.memory_space<vmem>>, vector<1x1x4x324xf32>
    %120 = vector.shape_cast %119 : vector<1x1x4x324xf32> to vector<4x324xf32>
    %121 = vector.shape_cast %118 : vector<4x324xf32> to vector<1x1x4x324xf32>
    tpu.vector_store %arg4[%c0_64, %c2_65, %c0_66, %c0_67], %121 {strides = array<i32>} : memref<1x4x4x324xf32, #tpu.memory_space<vmem>>, vector<1x1x4x324xf32>,
    %c0_68 = arith.constant 0 : index
    %c3_69 = arith.constant 3 : index
    %c0_70 = arith.constant 0 : index
    %122 = vector.load %arg1[%c0_68, %c3_69, %c0_70] : memref<1x4x384xf32, #tpu.memory_space<vmem>>, vector<1x1x384xf32>
    %123 = vector.shape_cast %122 : vector<1x1x384xf32> to vector<1x384xf32>
    %124 = vector.broadcast %123 : vector<1x384xf32> to vector<8x384xf32>
    %125 = arith.mulf %124, %19 : vector<8x384xf32>
    %126 = vector.extract_strided_slice %125 {offsets = [0, 0], sizes = [8, 324], strides = [1, 1]} : vector<8x384xf32> to vector<8x324xf32>
    %cst_71 = arith.constant dense<0.000000e+00> : vector<8x324xf32>
    %127 = tpu.matmul %1, %126, %cst_71 {dimension_numbers = #tpu.dot_dimension_numbers<[1], [0], [0], [1], [0, 0, 1, 1], [], []>} : vector<8x8xf32>, vector<8x324xf32>, vector<8x324xf32> -> vector<8x324xf32>
    %128 = vector.extract_strided_slice %125 {offsets = [0, 1], sizes = [8, 324], strides = [1, 1]} : vector<8x384xf32> to vector<8x324xf32>
    %cst_72 = arith.constant dense<0.000000e+00> : vector<8x324xf32>
    %129 = tpu.matmul %3, %128, %cst_72 {dimension_numbers = #tpu.dot_dimension_numbers<[1], [0], [0], [1], [0, 0, 1, 1], [], []>} : vector<8x8xf32>, vector<8x324xf32>, vector<8x324xf32> -> vector<8x324xf32>
    %130 = arith.addf %127, %129 : vector<8x324xf32>
    %131 = vector.extract_strided_slice %125 {offsets = [0, 2], sizes = [8, 324], strides = [1, 1]} : vector<8x384xf32> to vector<8x324xf32>
    %cst_73 = arith.constant dense<0.000000e+00> : vector<8x324xf32>
    %132 = tpu.matmul %5, %131, %cst_73 {dimension_numbers = #tpu.dot_dimension_numbers<[1], [0], [0], [1], [0, 0, 1, 1], [], []>} : vector<8x8xf32>, vector<8x324xf32>, vector<8x324xf32> -> vector<8x324xf32>
    %133 = arith.addf %130, %132 : vector<8x324xf32>
    %134 = vector.extract_strided_slice %125 {offsets = [0, 18], sizes = [8, 324], strides = [1, 1]} : vector<8x384xf32> to vector<8x324xf32>
    %cst_74 = arith.constant dense<0.000000e+00> : vector<8x324xf32>
    %135 = tpu.matmul %7, %134, %cst_74 {dimension_numbers = #tpu.dot_dimension_numbers<[1], [0], [0], [1], [0, 0, 1, 1], [], []>} : vector<8x8xf32>, vector<8x324xf32>, vector<8x324xf32> -> vector<8x324xf32>
    %136 = arith.addf %133, %135 : vector<8x324xf32>
    %137 = vector.extract_strided_slice %125 {offsets = [0, 19], sizes = [8, 324], strides = [1, 1]} : vector<8x384xf32> to vector<8x324xf32>
    %cst_75 = arith.constant dense<0.000000e+00> : vector<8x324xf32>
    %138 = tpu.matmul %9, %137, %cst_75 {dimension_numbers = #tpu.dot_dimension_numbers<[1], [0], [0], [1], [0, 0, 1, 1], [], []>} : vector<8x8xf32>, vector<8x324xf32>, vector<8x324xf32> -> vector<8x324xf32>
    %139 = arith.addf %136, %138 : vector<8x324xf32>
    %140 = vector.extract_strided_slice %125 {offsets = [0, 20], sizes = [8, 324], strides = [1, 1]} : vector<8x384xf32> to vector<8x324xf32>
    %cst_76 = arith.constant dense<0.000000e+00> : vector<8x324xf32>
    %141 = tpu.matmul %11, %140, %cst_76 {dimension_numbers = #tpu.dot_dimension_numbers<[1], [0], [0], [1], [0, 0, 1, 1], [], []>} : vector<8x8xf32>, vector<8x324xf32>, vector<8x324xf32> -> vector<8x324xf32>
    %142 = arith.addf %139, %141 : vector<8x324xf32>
    %143 = vector.extract_strided_slice %125 {offsets = [0, 36], sizes = [8, 324], strides = [1, 1]} : vector<8x384xf32> to vector<8x324xf32>
    %cst_77 = arith.constant dense<0.000000e+00> : vector<8x324xf32>
    %144 = tpu.matmul %13, %143, %cst_77 {dimension_numbers = #tpu.dot_dimension_numbers<[1], [0], [0], [1], [0, 0, 1, 1], [], []>} : vector<8x8xf32>, vector<8x324xf32>, vector<8x324xf32> -> vector<8x324xf32>
    %145 = arith.addf %142, %144 : vector<8x324xf32>
    %146 = vector.extract_strided_slice %125 {offsets = [0, 37], sizes = [8, 324], strides = [1, 1]} : vector<8x384xf32> to vector<8x324xf32>
    %cst_78 = arith.constant dense<0.000000e+00> : vector<8x324xf32>
    %147 = tpu.matmul %15, %146, %cst_78 {dimension_numbers = #tpu.dot_dimension_numbers<[1], [0], [0], [1], [0, 0, 1, 1], [], []>} : vector<8x8xf32>, vector<8x324xf32>, vector<8x324xf32> -> vector<8x324xf32>
    %148 = arith.addf %145, %147 : vector<8x324xf32>
    %149 = vector.extract_strided_slice %125 {offsets = [0, 38], sizes = [8, 324], strides = [1, 1]} : vector<8x384xf32> to vector<8x324xf32>
    %cst_79 = arith.constant dense<0.000000e+00> : vector<8x324xf32>
    %150 = tpu.matmul %17, %149, %cst_79 {dimension_numbers = #tpu.dot_dimension_numbers<[1], [0], [0], [1], [0, 0, 1, 1], [], []>} : vector<8x8xf32>, vector<8x324xf32>, vector<8x324xf32> -> vector<8x324xf32>
    %151 = arith.addf %148, %150 : vector<8x324xf32>
    %152 = vector.extract_strided_slice %151 {offsets = [0, 0], sizes = [4, 324], strides = [1, 1]} : vector<8x324xf32> to vector<4x324xf32>
    %c0_80 = arith.constant 0 : index
    %c3_81 = arith.constant 3 : index
    %c0_82 = arith.constant 0 : index
    %c0_83 = arith.constant 0 : index
    %153 = vector.load %arg4[%c0_80, %c3_81, %c0_82, %c0_83] : memref<1x4x4x324xf32, #tpu.memory_space<vmem>>, vector<1x1x4x324xf32>
    %154 = vector.shape_cast %153 : vector<1x1x4x324xf32> to vector<4x324xf32>
    %155 = vector.shape_cast %152 : vector<4x324xf32> to vector<1x1x4x324xf32>
    tpu.vector_store %arg4[%c0_80, %c3_81, %c0_82, %c0_83], %155 {strides = array<i32>} : memref<1x4x4x324xf32, #tpu.memory_space<vmem>>, vector<1x1x4x324xf32>,
    return
  }
  func.func @transform_0(%arg0: i32) -> (i32, i32, i32) {
    %c0_i32 = arith.constant 0 : i32
    %c0_i32_0 = arith.constant 0 : i32
    %c0_i32_1 = arith.constant 0 : i32
    return %arg0, %c0_i32, %c0_i32_0 : i32, i32, i32
  }
  func.func @transform_1(%arg0: i32) -> (i32, i32, i32) {
    %c0_i32 = arith.constant 0 : i32
    %c0_i32_0 = arith.constant 0 : i32
    %c0_i32_1 = arith.constant 0 : i32
    return %arg0, %c0_i32, %c0_i32_0 : i32, i32, i32
  }
  func.func @transform_2(%arg0: i32) -> (i32, i32, i32) {
    %c0_i32 = arith.constant 0 : i32
    %c0_i32_0 = arith.constant 0 : i32
    %c0_i32_1 = arith.constant 0 : i32
    %c0_i32_2 = arith.constant 0 : i32
    return %c0_i32, %c0_i32_0, %c0_i32_1 : i32, i32, i32
  }
  func.func @transform_3(%arg0: i32) -> (i32, i32, i32, i32) {
    %c0_i32 = arith.constant 0 : i32
    %c0_i32_0 = arith.constant 0 : i32
    %c0_i32_1 = arith.constant 0 : i32
    %c0_i32_2 = arith.constant 0 : i32
    return %arg0, %c0_i32, %c0_i32_0, %c0_i32_1 : i32, i32, i32, i32
  }
}

</mosaic_0001>

<llo_original>
// kernel: ops_draw_forward.1
$region0: #{ops_draw_forward.1}
  #allocation0 [shape = 'u32[]', space=smem, size = 0x4, offset = 0x4, fixed_abs, tag = 'smem constant byte address 0x4 - core index']
  #allocation1 [shape = 'u32[72,128]{1,0:T(1,128)}', space=vmem, size = 0x9000, scoped, tag = 'internal scratch']
  %s0 = inlined_call_operand.vmem [shape: f32[2,4,384], index: 0, kind: input, shape index: {}]
  %s1 = inlined_call_operand.vmem [shape: f32[2,8,384], index: 1, kind: input, shape index: {}]
  %s2 = inlined_call_operand.vmem [shape: f32[9,8,8], index: 2, kind: input, shape index: {}]
  %s3 = inlined_call_operand.vmem [shape: f32[2,4,4,324], index: 3, kind: output, shape index: {}]
  %s4 = sld [smem:[#allocation0]]
  $region45: #{ops_draw_forward.1} parent=0
    _
  %s6 = ssub.s32 1, %s4
  %s7 = scalar_select 0, %s6, %s4
  loop: start=0, step=1, limit=4
  $region2: #{ops_draw_forward.1} parent=0 // loop_pre_header
    _
  $region3: #{ops_draw_forward.1} parent=0 // loop_header
    %s9 = sphi 0, %s13
    %p10 = scmp.ge.s32.totalorder %s9, 4
    %s19 = sphi 0, %s21
    %s22 = sphi 0, %s19
    %s23 = sphi 0, %s22
    %s39 = sphi 0, %s23
    %s45 = sphi 0, %s47
    %s48 = sphi 0, %s45
    %s49 = sphi 0, %s48
    %s65 = sphi 0, %s49
    %s69 = sphi 0, %s69
    %s71 = sphi 0, %s69
    %s72 = sphi 0, %s71
    %s86 = sphi 0, %s72
    %s92 = sphi 0, %s94
    %s95 = sphi 0, %s92
    %s96 = sphi 0, %s95
    %s112 = sphi 0, %s96
  $region4: #{ops_draw_forward.1} parent=0 // loop_header_branch
    %12 = sbr.rel (%p10) target = $region8
  $region5: #{ops_draw_forward.1} parent=0 // loop_body
    %s14 = ssub.s32 %s9, 1
    %s15 = ssub.s32 %s9, 2
    %s16 = sadd.s32 %s9, 1
    %s17 = ssub.s32 %s9, %s16
    %p18 = scmp.eq.s32.totalorder %s17, 0
    %s20 = sadd.s32 %s19, 1
    %s21 = scalar_select %p18, %s19, %s20
    %p24 = pneg %p18
    %p25 = scmp.eq.s32.totalorder %s9, 1
    %p26 = por %p24, %p25
    %p27 = scmp.ne.s32.totalorder %s19, %s22
    %p28 = scmp.eq.s32.totalorder %s9, 0
    %p29 = por %p27, %p28
    %p30 = scmp.ne.s32.totalorder %s19, %s22
    %p31 = scmp.eq.s32.totalorder %s14, 1
    %p32 = por %p30, %p31
    %p33 = scmp.ne.s32.totalorder %s22, %s23
    %p34 = scmp.eq.s32.totalorder %s14, 0
    %p35 = por %p33, %p34
    %p36 = scmp.ne.s32.totalorder %s22, %s23
    %p37 = scmp.eq.s32.totalorder %s15, 1
    %p38 = por %p36, %p37
    %p40 = scmp.ne.s32.totalorder %s23, %s39
    %p41 = scmp.eq.s32.totalorder %s15, 0
    %p42 = por %p40, %p41
    %s43 = ssub.s32 %s9, %s16
    %p44 = scmp.eq.s32.totalorder %s43, 0
    %s46 = sadd.s32 %s45, 1
    %s47 = scalar_select %p44, %s45, %s46
    %p50 = pneg %p44
    %p51 = scmp.eq.s32.totalorder %s9, 1
    %p52 = por %p50, %p51
    %p53 = scmp.ne.s32.totalorder %s45, %s48
    %p54 = scmp.eq.s32.totalorder %s9, 0
    %p55 = por %p53, %p54
    %p56 = scmp.ne.s32.totalorder %s45, %s48
    %p57 = scmp.eq.s32.totalorder %s14, 1
    %p58 = por %p56, %p57
    %p59 = scmp.ne.s32.totalorder %s48, %s49
    %p60 = scmp.eq.s32.totalorder %s14, 0
    %p61 = por %p59, %p60
    %p62 = scmp.ne.s32.totalorder %s48, %s49
    %p63 = scmp.eq.s32.totalorder %s15, 1
    %p64 = por %p62, %p63
    %p66 = scmp.ne.s32.totalorder %s49, %s65
    %p67 = scmp.eq.s32.totalorder %s15, 0
    %p68 = por %p66, %p67
    %s70 = sadd.s32 %s69, 1
    %p73 = scmp.eq.s32.totalorder %s9, 1
    %p74 = scmp.ne.s32.totalorder %s69, %s71
    %p75 = scmp.eq.s32.totalorder %s9, 0
    %p76 = por %p74, %p75
    %p77 = scmp.ne.s32.totalorder %s69, %s71
    %p78 = scmp.eq.s32.totalorder %s14, 1
    %p79 = por %p77, %p78
    %p80 = scmp.ne.s32.totalorder %s71, %s72
    %p81 = scmp.eq.s32.totalorder %s14, 0
    %p82 = por %p80, %p81
    %p83 = scmp.ne.s32.totalorder %s71, %s72
    %p84 = scmp.eq.s32.totalorder %s15, 1
    %p85 = por %p83, %p84
    %p87 = scmp.ne.s32.totalorder %s72, %s86
    %p88 = scmp.eq.s32.totalorder %s15, 0
    %p89 = por %p87, %p88
    %s90 = ssub.s32 %s9, %s16
    %p91 = scmp.eq.s32.totalorder %s90, 0
    %s93 = sadd.s32 %s92, 1
    %s94 = scalar_select %p91, %s92, %s93
    %p97 = pneg %p91
    %p98 = scmp.eq.s32.totalorder %s9, 1
    %p99 = por %p97, %p98
    %p100 = scmp.ne.s32.totalorder %s92, %s95
    %p101 = scmp.eq.s32.totalorder %s9, 0
    %p102 = por %p100, %p101
    %p103 = scmp.ne.s32.totalorder %s92, %s95
    %p104 = scmp.eq.s32.totalorder %s14, 1
    %p105 = por %p103, %p104
    %p106 = scmp.ne.s32.totalorder %s95, %s96
    %p107 = scmp.eq.s32.totalorder %s14, 0
    %p108 = por %p106, %p107
    %p109 = scmp.ne.s32.totalorder %s95, %s96
    %p110 = scmp.eq.s32.totalorder %s15, 1
    %p111 = por %p109, %p110
    %p113 = scmp.ne.s32.totalorder %s96, %s112
    %p114 = scmp.eq.s32.totalorder %s15, 0
    %p115 = por %p113, %p114
    %p116 = scmp.le.s32.totalorder 1, %s9
    %p117 = scmp.lt.s32.totalorder %s9, 3
    %p118 = pnand %p116, %p117
    %p119 = pneg %p118
    // Predicated region
    $region9: #{ops_draw_forward.1} parent=5 // pred_check
      _
    $region10: #{ops_draw_forward.1} parent=5 // pred_check_branch
      %121 = sbr.rel (%p118) target = $region12
    $region11: #{ops_draw_forward.1} parent=5 // pred_region
      %s122 = ssub.s32 %s9, 1
      // Predicated region
      $region13: #{ops_draw_forward.1} parent=11 // pred_check
        %p123 = pneg %p82
      $region14: #{ops_draw_forward.1} parent=11 // pred_check_branch
        %125 = sbr.rel (%p123) target = $region16
      $region15: #{ops_draw_forward.1} parent=11 // pred_region
        _
      $region16: #{ops_draw_forward.1} parent=11 // pred_fallthru
        _
    $region12: #{ops_draw_forward.1} parent=5 // pred_fallthru
      _
    %p126 = scmp.lt.s32.totalorder %s9, 2
    // Predicated region
    $region17: #{ops_draw_forward.1} parent=5 // pred_check
      %p127 = pneg %p126
    $region18: #{ops_draw_forward.1} parent=5 // pred_check_branch
      %129 = sbr.rel (%p127) target = $region20
    $region19: #{ops_draw_forward.1} parent=5 // pred_region
      // Predicated region
      $region21: #{ops_draw_forward.1} parent=19 // pred_check
        %p130 = pneg %p29
      $region22: #{ops_draw_forward.1} parent=19 // pred_check_branch
        %132 = sbr.rel (%p130) target = $region24
      $region23: #{ops_draw_forward.1} parent=19 // pred_region
        %p133 = scmp.lt.s32.totalorder %s9, 1
        %s134 = scalar_select %p133, %s9, 1
        %s135 = smul.addr %s134, 3
        %s136 = smul.addr %s135, 4
        %s137 = scalar_lea.vmem %s0, %s136
      $region24: #{ops_draw_forward.1} parent=19 // pred_fallthru
        _
      // Predicated region
      $region25: #{ops_draw_forward.1} parent=19 // pred_check
        %p138 = pneg %p55
      $region26: #{ops_draw_forward.1} parent=19 // pred_check_branch
        %140 = sbr.rel (%p138) target = $region28
      $region27: #{ops_draw_forward.1} parent=19 // pred_region
        %p141 = scmp.lt.s32.totalorder %s9, 1
        %s142 = scalar_select %p141, %s9, 1
        %s143 = smul.addr %s142, 3
        %s144 = smul.addr %s143, 8
        %s145 = scalar_lea.vmem %s1, %s144
      $region28: #{ops_draw_forward.1} parent=19 // pred_fallthru
        _
    $region20: #{ops_draw_forward.1} parent=5 // pred_fallthru
      _
    %p146 = scmp.le.s32.totalorder 1, %s9
    %p147 = scmp.lt.s32.totalorder %s9, 3
    %p148 = pnand %p146, %p147
    %p149 = pneg %p148
    // Predicated region
    $region29: #{ops_draw_forward.1} parent=5 // pred_check
      _
    $region30: #{ops_draw_forward.1} parent=5 // pred_check_branch
      %151 = sbr.rel (%p148) target = $region32
    $region31: #{ops_draw_forward.1} parent=5 // pred_region
      %s152 = ssub.s32 %s9, 1
      %p153 = scmp.lt.s32.totalorder %s14, 1
      %s154 = scalar_select %p153, %s14, 1
      %s155 = smul.addr %s154, 3
      %s156 = smul.addr %s155, 4
      %s157 = scalar_lea.vmem %s0, %s156
      %p158 = pneg %p35
      %p159 = pneg %p32
      %p160 = scmp.lt.s32.totalorder %s14, 1
      %s161 = scalar_select %p160, %s14, 1
      %s162 = smul.addr %s161, 3
      %s163 = smul.addr %s162, 8
      %s164 = scalar_lea.vmem %s1, %s163
      %p165 = pneg %p61
      %p166 = pneg %p58
      %p167 = pneg %p82
      %p168 = pneg %p79
      %p169 = pneg %p108
      %p170 = pneg %p105
      %p171 = scmp.lt.s32.totalorder %s14, 1
      %s172 = scalar_select %p171, %s14, 1
      %s173 = smul.addr %s172, 12
      %s174 = smul.addr %s173, 4
      %s175 = scalar_lea.vmem %s3, %s174
      %p176 = scmp.lt.s32.totalorder %s14, 1
      %s177 = scalar_select %p176, %s14, 1
      %s178 = smul.addr %s177, 3
      %s179 = smul.addr %s178, 4
      %s180 = scalar_lea.vmem %s0, %s179
      %p181 = scmp.lt.s32.totalorder %s14, 1
      %s182 = scalar_select %p181, %s14, 1
      %s183 = smul.addr %s182, 3
      %s184 = smul.addr %s183, 8
      %s185 = scalar_lea.vmem %s1, %s184
      %p186 = scmp.lt.s32.totalorder %s14, 1
      %s187 = scalar_select %p186, %s14, 1
      %s188 = smul.addr %s187, 12
      %s189 = smul.addr %s188, 4
      %s190 = scalar_lea.vmem %s3, %s189
      %v191 = vld [vmem:[%s2] sm:$0xff]
      %s192 = scalar_lea.vmem %s2, 8
      %v193 = vld [vmem:[%s192] sm:$0xff]
      %s194 = scalar_lea.vmem %s2, 16
      %v195 = vld [vmem:[%s194] sm:$0xff]
      %s196 = scalar_lea.vmem %s2, 24
      %v197 = vld [vmem:[%s196] sm:$0xff]
      %s198 = scalar_lea.vmem %s2, 32
      %v199 = vld [vmem:[%s198] sm:$0xff]
      %s200 = scalar_lea.vmem %s2, 40
      %v201 = vld [vmem:[%s200] sm:$0xff]
      %s202 = scalar_lea.vmem %s2, 48
      %v203 = vld [vmem:[%s202] sm:$0xff]
      %s204 = scalar_lea.vmem %s2, 56
      %v205 = vld [vmem:[%s204] sm:$0xff]
      %s206 = scalar_lea.vmem %s2, 64
      %v207 = vld [vmem:[%s206] sm:$0xff]
      %v208 = vld [vmem:[%s185] sm:$0xff]
      %v209 = vld [vmem:[%s185 + $0x8] sm:$0xff]
      %v210 = vld [vmem:[%s185 + $0x10] sm:$0xff]
      %v211 = vld [vmem:[%s180] ss:$4 sm:$0x7]
      %v213 = vperm.slane %v211, 0
      %v214 = vperm.slane %v211, 1
      %v215 = vperm.slane %v211, 2
      %v219 = vmul.f32 %v213, %v208
      %v220 = vmul.f32 %v214, %v209
      %v221 = vmul.f32 %v215, %v210
      %225 = vrot.lane.b32.xlu0 %v219, 127
      %v226 = vpop.permute.xlu0 %225
      %227 = vrot.lane.b32.xlu0 %v220, 127
      %v228 = vpop.permute.xlu0 %227
      %229 = vrot.lane.b32.xlu0 %v221, 127
      %v230 = vpop.permute.xlu0 %229
      %vm231 = vcmask 1039360
      %v232 = vsel %vm231, %v226, %v228
      %v233 = vsel %vm231, %v228, %v230
      %vm237 = vcmask 64512
      %v239 = vsel %vm237, %v193, 0
      %241 = vmatpush.msra.mxu0 0.0
      %242 = vmatpush.msra.mxu0 0.0
      %243 = vmatpush.msra.mxu0 0.0
      %244 = vmatpush.msra.mxu0 0.0
      %245 = vmatpush.msra.mxu0 0.0
      %246 = vmatpush.msra.mxu0 0.0
      %247 = vmatpush.msra.mxu0 0.0
      %248 = vmatpush.msra.mxu0 0.0
      %249 = vmatpush.msra.mxu0 0.0
      %250 = vmatpush.msra.mxu0 0.0
      %251 = vmatpush.msra.mxu0 0.0
      %252 = vmatpush.msra.mxu0 0.0
      %253 = vmatpush.msra.mxu0 0.0
      %254 = vmatpush.msra.mxu0 0.0
      %255 = vmatpush.msra.mxu0 0.0
      %256 = vmatpush.msra.mxu0 %v232
      %257 = vmatmul.f32.gmra.mxu0 %v239
      %v258 = vpop.f32.mrf.mxu0
      %v259 = vadd.f32 0.0, %v258
      %260 = vdwg.mxu0
      %261 = vmatpush.msra.mxu0 0.0
      %262 = vmatpush.msra.mxu0 0.0
      %263 = vmatpush.msra.mxu0 0.0
      %264 = vmatpush.msra.mxu0 0.0
      %265 = vmatpush.msra.mxu0 0.0
      %266 = vmatpush.msra.mxu0 0.0
      %267 = vmatpush.msra.mxu0 0.0
      %268 = vmatpush.msra.mxu0 0.0
      %269 = vmatpush.msra.mxu0 0.0
      %270 = vmatpush.msra.mxu0 0.0
      %271 = vmatpush.msra.mxu0 0.0
      %272 = vmatpush.msra.mxu0 0.0
      %273 = vmatpush.msra.mxu0 0.0
      %274 = vmatpush.msra.mxu0 0.0
      %275 = vmatpush.msra.mxu0 0.0
      %276 = vmatpush.msra.mxu0 %v233
      %277 = vmatmul.f32.gmra.mxu0 %v239
      %v278 = vpop.f32.mrf.mxu0
      %v279 = vadd.f32 0.0, %v278
      %280 = vdwg.mxu0
      %281 = vmatpush.msra.mxu0 0.0
      %282 = vmatpush.msra.mxu0 0.0
      %283 = vmatpush.msra.mxu0 0.0
      %284 = vmatpush.msra.mxu0 0.0
      %285 = vmatpush.msra.mxu0 0.0
      %286 = vmatpush.msra.mxu0 0.0
      %287 = vmatpush.msra.mxu0 0.0
      %288 = vmatpush.msra.mxu0 0.0
      %289 = vmatpush.msra.mxu0 0.0
      %290 = vmatpush.msra.mxu0 0.0
      %291 = vmatpush.msra.mxu0 0.0
      %292 = vmatpush.msra.mxu0 0.0
      %293 = vmatpush.msra.mxu0 0.0
      %294 = vmatpush.msra.mxu0 0.0
      %295 = vmatpush.msra.mxu0 0.0
      %296 = vmatpush.msra.mxu0 %v230
      %297 = vmatmul.f32.gmra.mxu0 %v239
      %v298 = vpop.f32.mrf.mxu0
      %v299 = vadd.f32 0.0, %v298
      %300 = vdwg.mxu0
      %v302 = vsel %vm237, %v191, 0
      %304 = vmatpush.msra.mxu0 0.0
      %305 = vmatpush.msra.mxu0 0.0
      %306 = vmatpush.msra.mxu0 0.0
      %307 = vmatpush.msra.mxu0 0.0
      %308 = vmatpush.msra.mxu0 0.0
      %309 = vmatpush.msra.mxu0 0.0
      %310 = vmatpush.msra.mxu0 0.0
      %311 = vmatpush.msra.mxu0 0.0
      %312 = vmatpush.msra.mxu0 0.0
      %313 = vmatpush.msra.mxu0 0.0
      %314 = vmatpush.msra.mxu0 0.0
      %315 = vmatpush.msra.mxu0 0.0
      %316 = vmatpush.msra.mxu0 0.0
      %317 = vmatpush.msra.mxu0 0.0
      %318 = vmatpush.msra.mxu0 0.0
      %319 = vmatpush.msra.mxu0 %v219
      %320 = vmatmul.f32.gmra.mxu0 %v302
      %v321 = vpop.f32.mrf.mxu0
      %v322 = vadd.f32 %v259, %v321
      %323 = vdwg.mxu0
      %324 = vmatpush.msra.mxu0 0.0
      %325 = vmatpush.msra.mxu0 0.0
      %326 = vmatpush.msra.mxu0 0.0
      %327 = vmatpush.msra.mxu0 0.0
      %328 = vmatpush.msra.mxu0 0.0
      %329 = vmatpush.msra.mxu0 0.0
      %330 = vmatpush.msra.mxu0 0.0
      %331 = vmatpush.msra.mxu0 0.0
      %332 = vmatpush.msra.mxu0 0.0
      %333 = vmatpush.msra.mxu0 0.0
      %334 = vmatpush.msra.mxu0 0.0
      %335 = vmatpush.msra.mxu0 0.0
      %336 = vmatpush.msra.mxu0 0.0
      %337 = vmatpush.msra.mxu0 0.0
      %338 = vmatpush.msra.mxu0 0.0
      %339 = vmatpush.msra.mxu0 %v220
      %340 = vmatmul.f32.gmra.mxu0 %v302
      %v341 = vpop.f32.mrf.mxu0
      %v342 = vadd.f32 %v279, %v341
      %343 = vdwg.mxu0
      %344 = vmatpush.msra.mxu0 0.0
      %345 = vmatpush.msra.mxu0 0.0
      %346 = vmatpush.msra.mxu0 0.0
      %347 = vmatpush.msra.mxu0 0.0
      %348 = vmatpush.msra.mxu0 0.0
      %349 = vmatpush.msra.mxu0 0.0
      %350 = vmatpush.msra.mxu0 0.0
      %351 = vmatpush.msra.mxu0 0.0
      %352 = vmatpush.msra.mxu0 0.0
      %353 = vmatpush.msra.mxu0 0.0
      %354 = vmatpush.msra.mxu0 0.0
      %355 = vmatpush.msra.mxu0 0.0
      %356 = vmatpush.msra.mxu0 0.0
      %357 = vmatpush.msra.mxu0 0.0
      %358 = vmatpush.msra.mxu0 0.0
      %359 = vmatpush.msra.mxu0 %v221
      %360 = vmatmul.f32.gmra.mxu0 %v302
      %v361 = vpop.f32.mrf.mxu0
      %v362 = vadd.f32 %v299, %v361
      %363 = vdwg.mxu0
      %364 = vrot.lane.b32.xlu0 %v219, 126
      %v365 = vpop.permute.xlu0 %364
      %366 = vrot.lane.b32.xlu0 %v220, 126
      %v367 = vpop.permute.xlu0 %366
      %368 = vrot.lane.b32.xlu0 %v221, 126
      %v369 = vpop.permute.xlu0 %368
      %vm370 = vcmask 1031168
      %v371 = vsel %vm370, %v365, %v367
      %v372 = vsel %vm370, %v367, %v369
      %v377 = vsel %vm237, %v195, 0
      %379 = vmatpush.msra.mxu0 0.0
      %380 = vmatpush.msra.mxu0 0.0
      %381 = vmatpush.msra.mxu0 0.0
      %382 = vmatpush.msra.mxu0 0.0
      %383 = vmatpush.msra.mxu0 0.0
      %384 = vmatpush.msra.mxu0 0.0
      %385 = vmatpush.msra.mxu0 0.0
      %386 = vmatpush.msra.mxu0 0.0
      %387 = vmatpush.msra.mxu0 0.0
      %388 = vmatpush.msra.mxu0 0.0
      %389 = vmatpush.msra.mxu0 0.0
      %390 = vmatpush.msra.mxu0 0.0
      %391 = vmatpush.msra.mxu0 0.0
      %392 = vmatpush.msra.mxu0 0.0
      %393 = vmatpush.msra.mxu0 0.0
      %394 = vmatpush.msra.mxu0 %v371
      %395 = vmatmul.f32.gmra.mxu0 %v377
      %v396 = vpop.f32.mrf.mxu0
      %v397 = vadd.f32 0.0, %v396
      %398 = vdwg.mxu0
      %399 = vmatpush.msra.mxu0 0.0
      %400 = vmatpush.msra.mxu0 0.0
      %401 = vmatpush.msra.mxu0 0.0
      %402 = vmatpush.msra.mxu0 0.0
      %403 = vmatpush.msra.mxu0 0.0
      %404 = vmatpush.msra.mxu0 0.0
      %405 = vmatpush.msra.mxu0 0.0
      %406 = vmatpush.msra.mxu0 0.0
      %407 = vmatpush.msra.mxu0 0.0
      %408 = vmatpush.msra.mxu0 0.0
      %409 = vmatpush.msra.mxu0 0.0
      %410 = vmatpush.msra.mxu0 0.0
      %411 = vmatpush.msra.mxu0 0.0
      %412 = vmatpush.msra.mxu0 0.0
      %413 = vmatpush.msra.mxu0 0.0
      %414 = vmatpush.msra.mxu0 %v372
      %415 = vmatmul.f32.gmra.mxu0 %v377
      %v416 = vpop.f32.mrf.mxu0
      %v417 = vadd.f32 0.0, %v416
      %418 = vdwg.mxu0
      %419 = vmatpush.msra.mxu0 0.0
      %420 = vmatpush.msra.mxu0 0.0
      %421 = vmatpush.msra.mxu0 0.0
      %422 = vmatpush.msra.mxu0 0.0
      %423 = vmatpush.msra.mxu0 0.0
      %424 = vmatpush.msra.mxu0 0.0
      %425 = vmatpush.msra.mxu0 0.0
      %426 = vmatpush.msra.mxu0 0.0
      %427 = vmatpush.msra.mxu0 0.0
      %428 = vmatpush.msra.mxu0 0.0
      %429 = vmatpush.msra.mxu0 0.0
      %430 = vmatpush.msra.mxu0 0.0
      %431 = vmatpush.msra.mxu0 0.0
      %432 = vmatpush.msra.mxu0 0.0
      %433 = vmatpush.msra.mxu0 0.0
      %434 = vmatpush.msra.mxu0 %v369
      %435 = vmatmul.f32.gmra.mxu0 %v377
      %v436 = vpop.f32.mrf.mxu0
      %v437 = vadd.f32 0.0, %v436
      %438 = vdwg.mxu0
      %v439 = vadd.f32 %v322, %v397
      %v440 = vadd.f32 %v342, %v417
      %v441 = vadd.f32 %v362, %v437
      %442 = vrot.lane.b32.xlu0 %v219, 110
      %v443 = vpop.permute.xlu0 %442
      %444 = vrot.lane.b32.xlu0 %v220, 110
      %v445 = vpop.permute.xlu0 %444
      %446 = vrot.lane.b32.xlu0 %v221, 110
      %v447 = vpop.permute.xlu0 %446
      %vm448 = vcmask 900096
      %v449 = vsel %vm448, %v443, %v445
      %v450 = vsel %vm448, %v445, %v447
      %v455 = vsel %vm237, %v197, 0
      %457 = vmatpush.msra.mxu0 0.0
      %458 = vmatpush.msra.mxu0 0.0
      %459 = vmatpush.msra.mxu0 0.0
      %460 = vmatpush.msra.mxu0 0.0
      %461 = vmatpush.msra.mxu0 0.0
      %462 = vmatpush.msra.mxu0 0.0
      %463 = vmatpush.msra.mxu0 0.0
      %464 = vmatpush.msra.mxu0 0.0
      %465 = vmatpush.msra.mxu0 0.0
      %466 = vmatpush.msra.mxu0 0.0
      %467 = vmatpush.msra.mxu0 0.0
      %468 = vmatpush.msra.mxu0 0.0
      %469 = vmatpush.msra.mxu0 0.0
      %470 = vmatpush.msra.mxu0 0.0
      %471 = vmatpush.msra.mxu0 0.0
      %472 = vmatpush.msra.mxu0 %v449
      %473 = vmatmul.f32.gmra.mxu0 %v455
      %v474 = vpop.f32.mrf.mxu0
      %v475 = vadd.f32 0.0, %v474
      %476 = vdwg.mxu0
      %477 = vmatpush.msra.mxu0 0.0
      %478 = vmatpush.msra.mxu0 0.0
      %479 = vmatpush.msra.mxu0 0.0
      %480 = vmatpush.msra.mxu0 0.0
      %481 = vmatpush.msra.mxu0 0.0
      %482 = vmatpush.msra.mxu0 0.0
      %483 = vmatpush.msra.mxu0 0.0
      %484 = vmatpush.msra.mxu0 0.0
      %485 = vmatpush.msra.mxu0 0.0
      %486 = vmatpush.msra.mxu0 0.0
      %487 = vmatpush.msra.mxu0 0.0
      %488 = vmatpush.msra.mxu0 0.0
      %489 = vmatpush.msra.mxu0 0.0
      %490 = vmatpush.msra.mxu0 0.0
      %491 = vmatpush.msra.mxu0 0.0
      %492 = vmatpush.msra.mxu0 %v450
      %493 = vmatmul.f32.gmra.mxu0 %v455
      %v494 = vpop.f32.mrf.mxu0
      %v495 = vadd.f32 0.0, %v494
      %496 = vdwg.mxu0
      %497 = vmatpush.msra.mxu0 0.0
      %498 = vmatpush.msra.mxu0 0.0
      %499 = vmatpush.msra.mxu0 0.0
      %500 = vmatpush.msra.mxu0 0.0
      %501 = vmatpush.msra.mxu0 0.0
      %502 = vmatpush.msra.mxu0 0.0
      %503 = vmatpush.msra.mxu0 0.0
      %504 = vmatpush.msra.mxu0 0.0
      %505 = vmatpush.msra.mxu0 0.0
      %506 = vmatpush.msra.mxu0 0.0
      %507 = vmatpush.msra.mxu0 0.0
      %508 = vmatpush.msra.mxu0 0.0
      %509 = vmatpush.msra.mxu0 0.0
      %510 = vmatpush.msra.mxu0 0.0
      %511 = vmatpush.msra.mxu0 0.0
      %512 = vmatpush.msra.mxu0 %v447
      %513 = vmatmul.f32.gmra.mxu0 %v455
      %v514 = vpop.f32.mrf.mxu0
      %v515 = vadd.f32 0.0, %v514
      %516 = vdwg.mxu0
      %v517 = vadd.f32 %v439, %v475
      %v518 = vadd.f32 %v440, %v495
      %v519 = vadd.f32 %v441, %v515
      %520 = vrot.lane.b32.xlu0 %v219, 109
      %v521 = vpop.permute.xlu0 %520
      %522 = vrot.lane.b32.xlu0 %v220, 109
      %v523 = vpop.permute.xlu0 %522
      %524 = vrot.lane.b32.xlu0 %v221, 109
      %v525 = vpop.permute.xlu0 %524
      %vm526 = vcmask 891904
      %v527 = vsel %vm526, %v521, %v523
      %v528 = vsel %vm526, %v523, %v525
      %v533 = vsel %vm237, %v199, 0
      %535 = vmatpush.msra.mxu0 0.0
      %536 = vmatpush.msra.mxu0 0.0
      %537 = vmatpush.msra.mxu0 0.0
      %538 = vmatpush.msra.mxu0 0.0
      %539 = vmatpush.msra.mxu0 0.0
      %540 = vmatpush.msra.mxu0 0.0
      %541 = vmatpush.msra.mxu0 0.0
      %542 = vmatpush.msra.mxu0 0.0
      %543 = vmatpush.msra.mxu0 0.0
      %544 = vmatpush.msra.mxu0 0.0
      %545 = vmatpush.msra.mxu0 0.0
      %546 = vmatpush.msra.mxu0 0.0
      %547 = vmatpush.msra.mxu0 0.0
      %548 = vmatpush.msra.mxu0 0.0
      %549 = vmatpush.msra.mxu0 0.0
      %550 = vmatpush.msra.mxu0 %v527
      %551 = vmatmul.f32.gmra.mxu0 %v533
      %v552 = vpop.f32.mrf.mxu0
      %v553 = vadd.f32 0.0, %v552
      %554 = vdwg.mxu0
      %555 = vmatpush.msra.mxu0 0.0
      %556 = vmatpush.msra.mxu0 0.0
      %557 = vmatpush.msra.mxu0 0.0
      %558 = vmatpush.msra.mxu0 0.0
      %559 = vmatpush.msra.mxu0 0.0
      %560 = vmatpush.msra.mxu0 0.0
      %561 = vmatpush.msra.mxu0 0.0
      %562 = vmatpush.msra.mxu0 0.0
      %563 = vmatpush.msra.mxu0 0.0
      %564 = vmatpush.msra.mxu0 0.0
      %565 = vmatpush.msra.mxu0 0.0
      %566 = vmatpush.msra.mxu0 0.0
      %567 = vmatpush.msra.mxu0 0.0
      %568 = vmatpush.msra.mxu0 0.0
      %569 = vmatpush.msra.mxu0 0.0
      %570 = vmatpush.msra.mxu0 %v528
      %571 = vmatmul.f32.gmra.mxu0 %v533
      %v572 = vpop.f32.mrf.mxu0
      %v573 = vadd.f32 0.0, %v572
      %574 = vdwg.mxu0
      %575 = vmatpush.msra.mxu0 0.0
      %576 = vmatpush.msra.mxu0 0.0
      %577 = vmatpush.msra.mxu0 0.0
      %578 = vmatpush.msra.mxu0 0.0
      %579 = vmatpush.msra.mxu0 0.0
      %580 = vmatpush.msra.mxu0 0.0
      %581 = vmatpush.msra.mxu0 0.0
      %582 = vmatpush.msra.mxu0 0.0
      %583 = vmatpush.msra.mxu0 0.0
      %584 = vmatpush.msra.mxu0 0.0
      %585 = vmatpush.msra.mxu0 0.0
      %586 = vmatpush.msra.mxu0 0.0
      %587 = vmatpush.msra.mxu0 0.0
      %588 = vmatpush.msra.mxu0 0.0
      %589 = vmatpush.msra.mxu0 0.0
      %590 = vmatpush.msra.mxu0 %v525
      %591 = vmatmul.f32.gmra.mxu0 %v533
      %v592 = vpop.f32.mrf.mxu0
      %v593 = vadd.f32 0.0, %v592
      %594 = vdwg.mxu0
      %v595 = vadd.f32 %v517, %v553
      %v596 = vadd.f32 %v518, %v573
      %v597 = vadd.f32 %v519, %v593
      %598 = vrot.lane.b32.xlu0 %v219, 108
      %v599 = vpop.permute.xlu0 %598
      %600 = vrot.lane.b32.xlu0 %v220, 108
      %v601 = vpop.permute.xlu0 %600
      %602 = vrot.lane.b32.xlu0 %v221, 108
      %v603 = vpop.permute.xlu0 %602
      %vm604 = vcmask 883712
      %v605 = vsel %vm604, %v599, %v601
      %v606 = vsel %vm604, %v601, %v603
      %v611 = vsel %vm237, %v201, 0
      %613 = vmatpush.msra.mxu0 0.0
      %614 = vmatpush.msra.mxu0 0.0
      %615 = vmatpush.msra.mxu0 0.0
      %616 = vmatpush.msra.mxu0 0.0
      %617 = vmatpush.msra.mxu0 0.0
      %618 = vmatpush.msra.mxu0 0.0
      %619 = vmatpush.msra.mxu0 0.0
      %620 = vmatpush.msra.mxu0 0.0
      %621 = vmatpush.msra.mxu0 0.0
      %622 = vmatpush.msra.mxu0 0.0
      %623 = vmatpush.msra.mxu0 0.0
      %624 = vmatpush.msra.mxu0 0.0
      %625 = vmatpush.msra.mxu0 0.0
      %626 = vmatpush.msra.mxu0 0.0
      %627 = vmatpush.msra.mxu0 0.0
      %628 = vmatpush.msra.mxu0 %v605
      %629 = vmatmul.f32.gmra.mxu0 %v611
      %v630 = vpop.f32.mrf.mxu0
      %v631 = vadd.f32 0.0, %v630
      %632 = vdwg.mxu0
      %633 = vmatpush.msra.mxu0 0.0
      %634 = vmatpush.msra.mxu0 0.0
      %635 = vmatpush.msra.mxu0 0.0
      %636 = vmatpush.msra.mxu0 0.0
      %637 = vmatpush.msra.mxu0 0.0
      %638 = vmatpush.msra.mxu0 0.0
      %639 = vmatpush.msra.mxu0 0.0
      %640 = vmatpush.msra.mxu0 0.0
      %641 = vmatpush.msra.mxu0 0.0
      %642 = vmatpush.msra.mxu0 0.0
      %643 = vmatpush.msra.mxu0 0.0
      %644 = vmatpush.msra.mxu0 0.0
      %645 = vmatpush.msra.mxu0 0.0
      %646 = vmatpush.msra.mxu0 0.0
      %647 = vmatpush.msra.mxu0 0.0
      %648 = vmatpush.msra.mxu0 %v606
      %649 = vmatmul.f32.gmra.mxu0 %v611
      %v650 = vpop.f32.mrf.mxu0
      %v651 = vadd.f32 0.0, %v650
      %652 = vdwg.mxu0
      %653 = vmatpush.msra.mxu0 0.0
      %654 = vmatpush.msra.mxu0 0.0
      %655 = vmatpush.msra.mxu0 0.0
      %656 = vmatpush.msra.mxu0 0.0
      %657 = vmatpush.msra.mxu0 0.0
      %658 = vmatpush.msra.mxu0 0.0
      %659 = vmatpush.msra.mxu0 0.0
      %660 = vmatpush.msra.mxu0 0.0
      %661 = vmatpush.msra.mxu0 0.0
      %662 = vmatpush.msra.mxu0 0.0
      %663 = vmatpush.msra.mxu0 0.0
      %664 = vmatpush.msra.mxu0 0.0
      %665 = vmatpush.msra.mxu0 0.0
      %666 = vmatpush.msra.mxu0 0.0
      %667 = vmatpush.msra.mxu0 0.0
      %668 = vmatpush.msra.mxu0 %v603
      %669 = vmatmul.f32.gmra.mxu0 %v611
      %v670 = vpop.f32.mrf.mxu0
      %v671 = vadd.f32 0.0, %v670
      %672 = vdwg.mxu0
      %v673 = vadd.f32 %v595, %v631
      %v674 = vadd.f32 %v596, %v651
      %v675 = vadd.f32 %v597, %v671
      %676 = vrot.lane.b32.xlu0 %v219, 92
      %v677 = vpop.permute.xlu0 %676
      %678 = vrot.lane.b32.xlu0 %v220, 92
      %v679 = vpop.permute.xlu0 %678
      %680 = vrot.lane.b32.xlu0 %v221, 92
      %v681 = vpop.permute.xlu0 %680
      %vm682 = vcmask 752640
      %v683 = vsel %vm682, %v677, %v679
      %v684 = vsel %vm682, %v679, %v681
      %v689 = vsel %vm237, %v203, 0
      %691 = vmatpush.msra.mxu0 0.0
      %692 = vmatpush.msra.mxu0 0.0
      %693 = vmatpush.msra.mxu0 0.0
      %694 = vmatpush.msra.mxu0 0.0
      %695 = vmatpush.msra.mxu0 0.0
      %696 = vmatpush.msra.mxu0 0.0
      %697 = vmatpush.msra.mxu0 0.0
      %698 = vmatpush.msra.mxu0 0.0
      %699 = vmatpush.msra.mxu0 0.0
      %700 = vmatpush.msra.mxu0 0.0
      %701 = vmatpush.msra.mxu0 0.0
      %702 = vmatpush.msra.mxu0 0.0
      %703 = vmatpush.msra.mxu0 0.0
      %704 = vmatpush.msra.mxu0 0.0
      %705 = vmatpush.msra.mxu0 0.0
      %706 = vmatpush.msra.mxu0 %v683
      %707 = vmatmul.f32.gmra.mxu0 %v689
      %v708 = vpop.f32.mrf.mxu0
      %v709 = vadd.f32 0.0, %v708
      %710 = vdwg.mxu0
      %711 = vmatpush.msra.mxu0 0.0
      %712 = vmatpush.msra.mxu0 0.0
      %713 = vmatpush.msra.mxu0 0.0
      %714 = vmatpush.msra.mxu0 0.0
      %715 = vmatpush.msra.mxu0 0.0
      %716 = vmatpush.msra.mxu0 0.0
      %717 = vmatpush.msra.mxu0 0.0
      %718 = vmatpush.msra.mxu0 0.0
      %719 = vmatpush.msra.mxu0 0.0
      %720 = vmatpush.msra.mxu0 0.0
      %721 = vmatpush.msra.mxu0 0.0
      %722 = vmatpush.msra.mxu0 0.0
      %723 = vmatpush.msra.mxu0 0.0
      %724 = vmatpush.msra.mxu0 0.0
      %725 = vmatpush.msra.mxu0 0.0
      %726 = vmatpush.msra.mxu0 %v684
      %727 = vmatmul.f32.gmra.mxu0 %v689
      %v728 = vpop.f32.mrf.mxu0
      %v729 = vadd.f32 0.0, %v728
      %730 = vdwg.mxu0
      %731 = vmatpush.msra.mxu0 0.0
      %732 = vmatpush.msra.mxu0 0.0
      %733 = vmatpush.msra.mxu0 0.0
      %734 = vmatpush.msra.mxu0 0.0
      %735 = vmatpush.msra.mxu0 0.0
      %736 = vmatpush.msra.mxu0 0.0
      %737 = vmatpush.msra.mxu0 0.0
      %738 = vmatpush.msra.mxu0 0.0
      %739 = vmatpush.msra.mxu0 0.0
      %740 = vmatpush.msra.mxu0 0.0
      %741 = vmatpush.msra.mxu0 0.0
      %742 = vmatpush.msra.mxu0 0.0
      %743 = vmatpush.msra.mxu0 0.0
      %744 = vmatpush.msra.mxu0 0.0
      %745 = vmatpush.msra.mxu0 0.0
      %746 = vmatpush.msra.mxu0 %v681
      %747 = vmatmul.f32.gmra.mxu0 %v689
      %v748 = vpop.f32.mrf.mxu0
      %v749 = vadd.f32 0.0, %v748
      %750 = vdwg.mxu0
      %v751 = vadd.f32 %v673, %v709
      %v752 = vadd.f32 %v674, %v729
      %v753 = vadd.f32 %v675, %v749
      %754 = vrot.lane.b32.xlu0 %v219, 91
      %v755 = vpop.permute.xlu0 %754
      %756 = vrot.lane.b32.xlu0 %v220, 91
      %v757 = vpop.permute.xlu0 %756
      %758 = vrot.lane.b32.xlu0 %v221, 91
      %v759 = vpop.permute.xlu0 %758
      %vm760 = vcmask 744448
      %v761 = vsel %vm760, %v755, %v757
      %v762 = vsel %vm760, %v757, %v759
      %v767 = vsel %vm237, %v205, 0
      %769 = vmatpush.msra.mxu0 0.0
      %770 = vmatpush.msra.mxu0 0.0
      %771 = vmatpush.msra.mxu0 0.0
      %772 = vmatpush.msra.mxu0 0.0
      %773 = vmatpush.msra.mxu0 0.0
      %774 = vmatpush.msra.mxu0 0.0
      %775 = vmatpush.msra.mxu0 0.0
      %776 = vmatpush.msra.mxu0 0.0
      %777 = vmatpush.msra.mxu0 0.0
      %778 = vmatpush.msra.mxu0 0.0
      %779 = vmatpush.msra.mxu0 0.0
      %780 = vmatpush.msra.mxu0 0.0
      %781 = vmatpush.msra.mxu0 0.0
      %782 = vmatpush.msra.mxu0 0.0
      %783 = vmatpush.msra.mxu0 0.0
      %784 = vmatpush.msra.mxu0 %v761
      %785 = vmatmul.f32.gmra.mxu0 %v767
      %v786 = vpop.f32.mrf.mxu0
      %v787 = vadd.f32 0.0, %v786
      %788 = vdwg.mxu0
      %789 = vmatpush.msra.mxu0 0.0
      %790 = vmatpush.msra.mxu0 0.0
      %791 = vmatpush.msra.mxu0 0.0
      %792 = vmatpush.msra.mxu0 0.0
      %793 = vmatpush.msra.mxu0 0.0
      %794 = vmatpush.msra.mxu0 0.0
      %795 = vmatpush.msra.mxu0 0.0
      %796 = vmatpush.msra.mxu0 0.0
      %797 = vmatpush.msra.mxu0 0.0
      %798 = vmatpush.msra.mxu0 0.0
      %799 = vmatpush.msra.mxu0 0.0
      %800 = vmatpush.msra.mxu0 0.0
      %801 = vmatpush.msra.mxu0 0.0
      %802 = vmatpush.msra.mxu0 0.0
      %803 = vmatpush.msra.mxu0 0.0
      %804 = vmatpush.msra.mxu0 %v762
      %805 = vmatmul.f32.gmra.mxu0 %v767
      %v806 = vpop.f32.mrf.mxu0
      %v807 = vadd.f32 0.0, %v806
      %808 = vdwg.mxu0
      %809 = vmatpush.msra.mxu0 0.0
      %810 = vmatpush.msra.mxu0 0.0
      %811 = vmatpush.msra.mxu0 0.0
      %812 = vmatpush.msra.mxu0 0.0
      %813 = vmatpush.msra.mxu0 0.0
      %814 = vmatpush.msra.mxu0 0.0
      %815 = vmatpush.msra.mxu0 0.0
      %816 = vmatpush.msra.mxu0 0.0
      %817 = vmatpush.msra.mxu0 0.0
      %818 = vmatpush.msra.mxu0 0.0
      %819 = vmatpush.msra.mxu0 0.0
      %820 = vmatpush.msra.mxu0 0.0
      %821 = vmatpush.msra.mxu0 0.0
      %822 = vmatpush.msra.mxu0 0.0
      %823 = vmatpush.msra.mxu0 0.0
      %824 = vmatpush.msra.mxu0 %v759
      %825 = vmatmul.f32.gmra.mxu0 %v767
      %v826 = vpop.f32.mrf.mxu0
      %v827 = vadd.f32 0.0, %v826
      %828 = vdwg.mxu0
      %v829 = vadd.f32 %v751, %v787
      %v830 = vadd.f32 %v752, %v807
      %v831 = vadd.f32 %v753, %v827
      %832 = vrot.lane.b32.xlu0 %v219, 90
      %v833 = vpop.permute.xlu0 %832
      %834 = vrot.lane.b32.xlu0 %v220, 90
      %v835 = vpop.permute.xlu0 %834
      %836 = vrot.lane.b32.xlu0 %v221, 90
      %v837 = vpop.permute.xlu0 %836
      %vm838 = vcmask 736256
      %v839 = vsel %vm838, %v833, %v835
      %v840 = vsel %vm838, %v835, %v837
      %v845 = vsel %vm237, %v207, 0
      %847 = vmatpush.msra.mxu0 0.0
      %848 = vmatpush.msra.mxu0 0.0
      %849 = vmatpush.msra.mxu0 0.0
      %850 = vmatpush.msra.mxu0 0.0
      %851 = vmatpush.msra.mxu0 0.0
      %852 = vmatpush.msra.mxu0 0.0
      %853 = vmatpush.msra.mxu0 0.0
      %854 = vmatpush.msra.mxu0 0.0
      %855 = vmatpush.msra.mxu0 0.0
      %856 = vmatpush.msra.mxu0 0.0
      %857 = vmatpush.msra.mxu0 0.0
      %858 = vmatpush.msra.mxu0 0.0
      %859 = vmatpush.msra.mxu0 0.0
      %860 = vmatpush.msra.mxu0 0.0
      %861 = vmatpush.msra.mxu0 0.0
      %862 = vmatpush.msra.mxu0 %v839
      %863 = vmatmul.f32.gmra.mxu0 %v845
      %v864 = vpop.f32.mrf.mxu0
      %v865 = vadd.f32 0.0, %v864
      %866 = vdwg.mxu0
      %867 = vmatpush.msra.mxu0 0.0
      %868 = vmatpush.msra.mxu0 0.0
      %869 = vmatpush.msra.mxu0 0.0
      %870 = vmatpush.msra.mxu0 0.0
      %871 = vmatpush.msra.mxu0 0.0
      %872 = vmatpush.msra.mxu0 0.0
      %873 = vmatpush.msra.mxu0 0.0
      %874 = vmatpush.msra.mxu0 0.0
      %875 = vmatpush.msra.mxu0 0.0
      %876 = vmatpush.msra.mxu0 0.0
      %877 = vmatpush.msra.mxu0 0.0
      %878 = vmatpush.msra.mxu0 0.0
      %879 = vmatpush.msra.mxu0 0.0
      %880 = vmatpush.msra.mxu0 0.0
      %881 = vmatpush.msra.mxu0 0.0
      %882 = vmatpush.msra.mxu0 %v840
      %883 = vmatmul.f32.gmra.mxu0 %v845
      %v884 = vpop.f32.mrf.mxu0
      %v885 = vadd.f32 0.0, %v884
      %886 = vdwg.mxu0
      %887 = vmatpush.msra.mxu0 0.0
      %888 = vmatpush.msra.mxu0 0.0
      %889 = vmatpush.msra.mxu0 0.0
      %890 = vmatpush.msra.mxu0 0.0
      %891 = vmatpush.msra.mxu0 0.0
      %892 = vmatpush.msra.mxu0 0.0
      %893 = vmatpush.msra.mxu0 0.0
      %894 = vmatpush.msra.mxu0 0.0
      %895 = vmatpush.msra.mxu0 0.0
      %896 = vmatpush.msra.mxu0 0.0
      %897 = vmatpush.msra.mxu0 0.0
      %898 = vmatpush.msra.mxu0 0.0
      %899 = vmatpush.msra.mxu0 0.0
      %900 = vmatpush.msra.mxu0 0.0
      %901 = vmatpush.msra.mxu0 0.0
      %902 = vmatpush.msra.mxu0 %v837
      %903 = vmatmul.f32.gmra.mxu0 %v845
      %v904 = vpop.f32.mrf.mxu0
      %v905 = vadd.f32 0.0, %v904
      %906 = vdwg.mxu0
      %v907 = vadd.f32 %v829, %v865
      %v908 = vadd.f32 %v830, %v885
      %v909 = vadd.f32 %v831, %v905
      %v912 = vrot.slane %v908, 4
      %vm913 = vcmask 1043456
      %v914 = vsel %vm913, %v907, %v912
      %916 = vst [vmem:[%s190] sm:$0xff] %v914
      %vm917 = vcmask 551936
      %918 = vst.msk [vmem:[%s190 + $0x8] sm:$0xf] %vm917, %v909
      %s919 = scalar_lea.vmem %s180, 1
      %v920 = vld [vmem:[%s919] ss:$4 sm:$0x7]
      %v922 = vperm.slane %v920, 0
      %v923 = vperm.slane %v920, 1
      %v924 = vperm.slane %v920, 2
      %v928 = vmul.f32 %v922, %v208
      %v929 = vmul.f32 %v923, %v209
      %v930 = vmul.f32 %v924, %v210
      %934 = vrot.lane.b32.xlu0 %v928, 127
      %v935 = vpop.permute.xlu0 %934
      %936 = vrot.lane.b32.xlu0 %v929, 127
      %v937 = vpop.permute.xlu0 %936
      %938 = vrot.lane.b32.xlu0 %v930, 127
      %v939 = vpop.permute.xlu0 %938
      %v940 = vsel %vm231, %v935, %v937
      %v941 = vsel %vm231, %v937, %v939
      %945 = vmatpush.msra.mxu0 0.0
      %946 = vmatpush.msra.mxu0 0.0
      %947 = vmatpush.msra.mxu0 0.0
      %948 = vmatpush.msra.mxu0 0.0
      %949 = vmatpush.msra.mxu0 0.0
      %950 = vmatpush.msra.mxu0 0.0
      %951 = vmatpush.msra.mxu0 0.0
      %952 = vmatpush.msra.mxu0 0.0
      %953 = vmatpush.msra.mxu0 0.0
      %954 = vmatpush.msra.mxu0 0.0
      %955 = vmatpush.msra.mxu0 0.0
      %956 = vmatpush.msra.mxu0 0.0
      %957 = vmatpush.msra.mxu0 0.0
      %958 = vmatpush.msra.mxu0 0.0
      %959 = vmatpush.msra.mxu0 0.0
      %960 = vmatpush.msra.mxu0 %v940
      %961 = vmatmul.f32.gmra.mxu0 %v239
      %v962 = vpop.f32.mrf.mxu0
      %v963 = vadd.f32 0.0, %v962
      %964 = vdwg.mxu0
      %965 = vmatpush.msra.mxu0 0.0
      %966 = vmatpush.msra.mxu0 0.0
      %967 = vmatpush.msra.mxu0 0.0
      %968 = vmatpush.msra.mxu0 0.0
      %969 = vmatpush.msra.mxu0 0.0
      %970 = vmatpush.msra.mxu0 0.0
      %971 = vmatpush.msra.mxu0 0.0
      %972 = vmatpush.msra.mxu0 0.0
      %973 = vmatpush.msra.mxu0 0.0
      %974 = vmatpush.msra.mxu0 0.0
      %975 = vmatpush.msra.mxu0 0.0
      %976 = vmatpush.msra.mxu0 0.0
      %977 = vmatpush.msra.mxu0 0.0
      %978 = vmatpush.msra.mxu0 0.0
      %979 = vmatpush.msra.mxu0 0.0
      %980 = vmatpush.msra.mxu0 %v941
      %981 = vmatmul.f32.gmra.mxu0 %v239
      %v982 = vpop.f32.mrf.mxu0
      %v983 = vadd.f32 0.0, %v982
      %984 = vdwg.mxu0
      %985 = vmatpush.msra.mxu0 0.0
      %986 = vmatpush.msra.mxu0 0.0
      %987 = vmatpush.msra.mxu0 0.0
      %988 = vmatpush.msra.mxu0 0.0
      %989 = vmatpush.msra.mxu0 0.0
      %990 = vmatpush.msra.mxu0 0.0
      %991 = vmatpush.msra.mxu0 0.0
      %992 = vmatpush.msra.mxu0 0.0
      %993 = vmatpush.msra.mxu0 0.0
      %994 = vmatpush.msra.mxu0 0.0
      %995 = vmatpush.msra.mxu0 0.0
      %996 = vmatpush.msra.mxu0 0.0
      %997 = vmatpush.msra.mxu0 0.0
      %998 = vmatpush.msra.mxu0 0.0
      %999 = vmatpush.msra.mxu0 0.0
      %1000 = vmatpush.msra.mxu0 %v939
      %1001 = vmatmul.f32.gmra.mxu0 %v239
      %v1002 = vpop.f32.mrf.mxu0
      %v1003 = vadd.f32 0.0, %v1002
      %1004 = vdwg.mxu0
      %1005 = vmatpush.msra.mxu0 0.0
      %1006 = vmatpush.msra.mxu0 0.0
      %1007 = vmatpush.msra.mxu0 0.0
      %1008 = vmatpush.msra.mxu0 0.0
      %1009 = vmatpush.msra.mxu0 0.0
      %1010 = vmatpush.msra.mxu0 0.0
      %1011 = vmatpush.msra.mxu0 0.0
      %1012 = vmatpush.msra.mxu0 0.0
      %1013 = vmatpush.msra.mxu0 0.0
      %1014 = vmatpush.msra.mxu0 0.0
      %1015 = vmatpush.msra.mxu0 0.0
      %1016 = vmatpush.msra.mxu0 0.0
      %1017 = vmatpush.msra.mxu0 0.0
      %1018 = vmatpush.msra.mxu0 0.0
      %1019 = vmatpush.msra.mxu0 0.0
      %1020 = vmatpush.msra.mxu0 %v928
      %1021 = vmatmul.f32.gmra.mxu0 %v302
      %v1022 = vpop.f32.mrf.mxu0
      %v1023 = vadd.f32 %v963, %v1022
      %1024 = vdwg.mxu0
      %1025 = vmatpush.msra.mxu0 0.0
      %1026 = vmatpush.msra.mxu0 0.0
      %1027 = vmatpush.msra.mxu0 0.0
      %1028 = vmatpush.msra.mxu0 0.0
      %1029 = vmatpush.msra.mxu0 0.0
      %1030 = vmatpush.msra.mxu0 0.0
      %1031 = vmatpush.msra.mxu0 0.0
      %1032 = vmatpush.msra.mxu0 0.0
      %1033 = vmatpush.msra.mxu0 0.0
      %1034 = vmatpush.msra.mxu0 0.0
      %1035 = vmatpush.msra.mxu0 0.0
      %1036 = vmatpush.msra.mxu0 0.0
      %1037 = vmatpush.msra.mxu0 0.0
      %1038 = vmatpush.msra.mxu0 0.0
      %1039 = vmatpush.msra.mxu0 0.0
      %1040 = vmatpush.msra.mxu0 %v929
      %1041 = vmatmul.f32.gmra.mxu0 %v302
      %v1042 = vpop.f32.mrf.mxu0
      %v1043 = vadd.f32 %v983, %v1042
      %1044 = vdwg.mxu0
      %1045 = vmatpush.msra.mxu0 0.0
      %1046 = vmatpush.msra.mxu0 0.0
      %1047 = vmatpush.msra.mxu0 0.0
      %1048 = vmatpush.msra.mxu0 0.0
      %1049 = vmatpush.msra.mxu0 0.0
      %1050 = vmatpush.msra.mxu0 0.0
      %1051 = vmatpush.msra.mxu0 0.0
      %1052 = vmatpush.msra.mxu0 0.0
      %1053 = vmatpush.msra.mxu0 0.0
      %1054 = vmatpush.msra.mxu0 0.0
      %1055 = vmatpush.msra.mxu0 0.0
      %1056 = vmatpush.msra.mxu0 0.0
      %1057 = vmatpush.msra.mxu0 0.0
      %1058 = vmatpush.msra.mxu0 0.0
      %1059 = vmatpush.msra.mxu0 0.0
      %1060 = vmatpush.msra.mxu0 %v930
      %1061 = vmatmul.f32.gmra.mxu0 %v302
      %v1062 = vpop.f32.mrf.mxu0
      %v1063 = vadd.f32 %v1003, %v1062
      %1064 = vdwg.mxu0
      %1065 = vrot.lane.b32.xlu0 %v928, 126
      %v1066 = vpop.permute.xlu0 %1065
      %1067 = vrot.lane.b32.xlu0 %v929, 126
      %v1068 = vpop.permute.xlu0 %1067
      %1069 = vrot.lane.b32.xlu0 %v930, 126
      %v1070 = vpop.permute.xlu0 %1069
      %v1071 = vsel %vm370, %v1066, %v1068
      %v1072 = vsel %vm370, %v1068, %v1070
      %1076 = vmatpush.msra.mxu0 0.0
      %1077 = vmatpush.msra.mxu0 0.0
      %1078 = vmatpush.msra.mxu0 0.0
      %1079 = vmatpush.msra.mxu0 0.0
      %1080 = vmatpush.msra.mxu0 0.0
      %1081 = vmatpush.msra.mxu0 0.0
      %1082 = vmatpush.msra.mxu0 0.0
      %1083 = vmatpush.msra.mxu0 0.0
      %1084 = vmatpush.msra.mxu0 0.0
      %1085 = vmatpush.msra.mxu0 0.0
      %1086 = vmatpush.msra.mxu0 0.0
      %1087 = vmatpush.msra.mxu0 0.0
      %1088 = vmatpush.msra.mxu0 0.0
      %1089 = vmatpush.msra.mxu0 0.0
      %1090 = vmatpush.msra.mxu0 0.0
      %1091 = vmatpush.msra.mxu0 %v1071
      %1092 = vmatmul.f32.gmra.mxu0 %v377
      %v1093 = vpop.f32.mrf.mxu0
      %v1094 = vadd.f32 0.0, %v1093
      %1095 = vdwg.mxu0
      %1096 = vmatpush.msra.mxu0 0.0
      %1097 = vmatpush.msra.mxu0 0.0
      %1098 = vmatpush.msra.mxu0 0.0
      %1099 = vmatpush.msra.mxu0 0.0
      %1100 = vmatpush.msra.mxu0 0.0
      %1101 = vmatpush.msra.mxu0 0.0
      %1102 = vmatpush.msra.mxu0 0.0
      %1103 = vmatpush.msra.mxu0 0.0
      %1104 = vmatpush.msra.mxu0 0.0
      %1105 = vmatpush.msra.mxu0 0.0
      %1106 = vmatpush.msra.mxu0 0.0
      %1107 = vmatpush.msra.mxu0 0.0
      %1108 = vmatpush.msra.mxu0 0.0
      %1109 = vmatpush.msra.mxu0 0.0
      %1110 = vmatpush.msra.mxu0 0.0
      %1111 = vmatpush.msra.mxu0 %v1072
      %1112 = vmatmul.f32.gmra.mxu0 %v377
      %v1113 = vpop.f32.mrf.mxu0
      %v1114 = vadd.f32 0.0, %v1113
      %1115 = vdwg.mxu0
      %1116 = vmatpush.msra.mxu0 0.0
      %1117 = vmatpush.msra.mxu0 0.0
      %1118 = vmatpush.msra.mxu0 0.0
      %1119 = vmatpush.msra.mxu0 0.0
      %1120 = vmatpush.msra.mxu0 0.0
      %1121 = vmatpush.msra.mxu0 0.0
      %1122 = vmatpush.msra.mxu0 0.0
      %1123 = vmatpush.msra.mxu0 0.0
      %1124 = vmatpush.msra.mxu0 0.0
      %1125 = vmatpush.msra.mxu0 0.0
      %1126 = vmatpush.msra.mxu0 0.0
      %1127 = vmatpush.msra.mxu0 0.0
      %1128 = vmatpush.msra.mxu0 0.0
      %1129 = vmatpush.msra.mxu0 0.0
      %1130 = vmatpush.msra.mxu0 0.0
      %1131 = vmatpush.msra.mxu0 %v1070
      %1132 = vmatmul.f32.gmra.mxu0 %v377
      %v1133 = vpop.f32.mrf.mxu0
      %v1134 = vadd.f32 0.0, %v1133
      %1135 = vdwg.mxu0
      %v1136 = vadd.f32 %v1023, %v1094
      %v1137 = vadd.f32 %v1043, %v1114
      %v1138 = vadd.f32 %v1063, %v1134
      %1139 = vrot.lane.b32.xlu0 %v928, 110
      %v1140 = vpop.permute.xlu0 %1139
      %1141 = vrot.lane.b32.xlu0 %v929, 110
      %v1142 = vpop.permute.xlu0 %1141
      %1143 = vrot.lane.b32.xlu0 %v930, 110
      %v1144 = vpop.permute.xlu0 %1143
      %v1145 = vsel %vm448, %v1140, %v1142
      %v1146 = vsel %vm448, %v1142, %v1144
      %1150 = vmatpush.msra.mxu0 0.0
      %1151 = vmatpush.msra.mxu0 0.0
      %1152 = vmatpush.msra.mxu0 0.0
      %1153 = vmatpush.msra.mxu0 0.0
      %1154 = vmatpush.msra.mxu0 0.0
      %1155 = vmatpush.msra.mxu0 0.0
      %1156 = vmatpush.msra.mxu0 0.0
      %1157 = vmatpush.msra.mxu0 0.0
      %1158 = vmatpush.msra.mxu0 0.0
      %1159 = vmatpush.msra.mxu0 0.0
      %1160 = vmatpush.msra.mxu0 0.0
      %1161 = vmatpush.msra.mxu0 0.0
      %1162 = vmatpush.msra.mxu0 0.0
      %1163 = vmatpush.msra.mxu0 0.0
      %1164 = vmatpush.msra.mxu0 0.0
      %1165 = vmatpush.msra.mxu0 %v1145
      %1166 = vmatmul.f32.gmra.mxu0 %v455
      %v1167 = vpop.f32.mrf.mxu0
      %v1168 = vadd.f32 0.0, %v1167
      %1169 = vdwg.mxu0
      %1170 = vmatpush.msra.mxu0 0.0
      %1171 = vmatpush.msra.mxu0 0.0
      %1172 = vmatpush.msra.mxu0 0.0
      %1173 = vmatpush.msra.mxu0 0.0
      %1174 = vmatpush.msra.mxu0 0.0
      %1175 = vmatpush.msra.mxu0 0.0
      %1176 = vmatpush.msra.mxu0 0.0
      %1177 = vmatpush.msra.mxu0 0.0
      %1178 = vmatpush.msra.mxu0 0.0
      %1179 = vmatpush.msra.mxu0 0.0
      %1180 = vmatpush.msra.mxu0 0.0
      %1181 = vmatpush.msra.mxu0 0.0
      %1182 = vmatpush.msra.mxu0 0.0
      %1183 = vmatpush.msra.mxu0 0.0
      %1184 = vmatpush.msra.mxu0 0.0
      %1185 = vmatpush.msra.mxu0 %v1146
      %1186 = vmatmul.f32.gmra.mxu0 %v455
      %v1187 = vpop.f32.mrf.mxu0
      %v1188 = vadd.f32 0.0, %v1187
      %1189 = vdwg.mxu0
      %1190 = vmatpush.msra.mxu0 0.0
      %1191 = vmatpush.msra.mxu0 0.0
      %1192 = vmatpush.msra.mxu0 0.0
      %1193 = vmatpush.msra.mxu0 0.0
      %1194 = vmatpush.msra.mxu0 0.0
      %1195 = vmatpush.msra.mxu0 0.0
      %1196 = vmatpush.msra.mxu0 0.0
      %1197 = vmatpush.msra.mxu0 0.0
      %1198 = vmatpush.msra.mxu0 0.0
      %1199 = vmatpush.msra.mxu0 0.0
      %1200 = vmatpush.msra.mxu0 0.0
      %1201 = vmatpush.msra.mxu0 0.0
      %1202 = vmatpush.msra.mxu0 0.0
      %1203 = vmatpush.msra.mxu0 0.0
      %1204 = vmatpush.msra.mxu0 0.0
      %1205 = vmatpush.msra.mxu0 %v1144
      %1206 = vmatmul.f32.gmra.mxu0 %v455
      %v1207 = vpop.f32.mrf.mxu0
      %v1208 = vadd.f32 0.0, %v1207
      %1209 = vdwg.mxu0
      %v1210 = vadd.f32 %v1136, %v1168
      %v1211 = vadd.f32 %v1137, %v1188
      %v1212 = vadd.f32 %v1138, %v1208
      %1213 = vrot.lane.b32.xlu0 %v928, 109
      %v1214 = vpop.permute.xlu0 %1213
      %1215 = vrot.lane.b32.xlu0 %v929, 109
      %v1216 = vpop.permute.xlu0 %1215
      %1217 = vrot.lane.b32.xlu0 %v930, 109
      %v1218 = vpop.permute.xlu0 %1217
      %v1219 = vsel %vm526, %v1214, %v1216
      %v1220 = vsel %vm526, %v1216, %v1218
      %1224 = vmatpush.msra.mxu0 0.0
      %1225 = vmatpush.msra.mxu0 0.0
      %1226 = vmatpush.msra.mxu0 0.0
      %1227 = vmatpush.msra.mxu0 0.0
      %1228 = vmatpush.msra.mxu0 0.0
      %1229 = vmatpush.msra.mxu0 0.0
      %1230 = vmatpush.msra.mxu0 0.0
      %1231 = vmatpush.msra.mxu0 0.0
      %1232 = vmatpush.msra.mxu0 0.0
      %1233 = vmatpush.msra.mxu0 0.0
      %1234 = vmatpush.msra.mxu0 0.0
      %1235 = vmatpush.msra.mxu0 0.0
      %1236 = vmatpush.msra.mxu0 0.0
      %1237 = vmatpush.msra.mxu0 0.0
      %1238 = vmatpush.msra.mxu0 0.0
      %1239 = vmatpush.msra.mxu0 %v1219
      %1240 = vmatmul.f32.gmra.mxu0 %v533
      %v1241 = vpop.f32.mrf.mxu0
      %v1242 = vadd.f32 0.0, %v1241
      %1243 = vdwg.mxu0
      %1244 = vmatpush.msra.mxu0 0.0
      %1245 = vmatpush.msra.mxu0 0.0
      %1246 = vmatpush.msra.mxu0 0.0
      %1247 = vmatpush.msra.mxu0 0.0
      %1248 = vmatpush.msra.mxu0 0.0
      %1249 = vmatpush.msra.mxu0 0.0
      %1250 = vmatpush.msra.mxu0 0.0
      %1251 = vmatpush.msra.mxu0 0.0
      %1252 = vmatpush.msra.mxu0 0.0
      %1253 = vmatpush.msra.mxu0 0.0
      %1254 = vmatpush.msra.mxu0 0.0
      %1255 = vmatpush.msra.mxu0 0.0
      %1256 = vmatpush.msra.mxu0 0.0
      %1257 = vmatpush.msra.mxu0 0.0
      %1258 = vmatpush.msra.mxu0 0.0
      %1259 = vmatpush.msra.mxu0 %v1220
      %1260 = vmatmul.f32.gmra.mxu0 %v533
      %v1261 = vpop.f32.mrf.mxu0
      %v1262 = vadd.f32 0.0, %v1261
      %1263 = vdwg.mxu0
      %1264 = vmatpush.msra.mxu0 0.0
      %1265 = vmatpush.msra.mxu0 0.0
      %1266 = vmatpush.msra.mxu0 0.0
      %1267 = vmatpush.msra.mxu0 0.0
      %1268 = vmatpush.msra.mxu0 0.0
      %1269 = vmatpush.msra.mxu0 0.0
      %1270 = vmatpush.msra.mxu0 0.0
      %1271 = vmatpush.msra.mxu0 0.0
      %1272 = vmatpush.msra.mxu0 0.0
      %1273 = vmatpush.msra.mxu0 0.0
      %1274 = vmatpush.msra.mxu0 0.0
      %1275 = vmatpush.msra.mxu0 0.0
      %1276 = vmatpush.msra.mxu0 0.0
      %1277 = vmatpush.msra.mxu0 0.0
      %1278 = vmatpush.msra.mxu0 0.0
      %1279 = vmatpush.msra.mxu0 %v1218
      %1280 = vmatmul.f32.gmra.mxu0 %v533
      %v1281 = vpop.f32.mrf.mxu0
      %v1282 = vadd.f32 0.0, %v1281
      %1283 = vdwg.mxu0
      %v1284 = vadd.f32 %v1210, %v1242
      %v1285 = vadd.f32 %v1211, %v1262
      %v1286 = vadd.f32 %v1212, %v1282
      %1287 = vrot.lane.b32.xlu0 %v928, 108
      %v1288 = vpop.permute.xlu0 %1287
      %1289 = vrot.lane.b32.xlu0 %v929, 108
      %v1290 = vpop.permute.xlu0 %1289
      %1291 = vrot.lane.b32.xlu0 %v930, 108
      %v1292 = vpop.permute.xlu0 %1291
      %v1293 = vsel %vm604, %v1288, %v1290
      %v1294 = vsel %vm604, %v1290, %v1292
      %1298 = vmatpush.msra.mxu0 0.0
      %1299 = vmatpush.msra.mxu0 0.0
      %1300 = vmatpush.msra.mxu0 0.0
      %1301 = vmatpush.msra.mxu0 0.0
      %1302 = vmatpush.msra.mxu0 0.0
      %1303 = vmatpush.msra.mxu0 0.0
      %1304 = vmatpush.msra.mxu0 0.0
      %1305 = vmatpush.msra.mxu0 0.0
      %1306 = vmatpush.msra.mxu0 0.0
      %1307 = vmatpush.msra.mxu0 0.0
      %1308 = vmatpush.msra.mxu0 0.0
      %1309 = vmatpush.msra.mxu0 0.0
      %1310 = vmatpush.msra.mxu0 0.0
      %1311 = vmatpush.msra.mxu0 0.0
      %1312 = vmatpush.msra.mxu0 0.0
      %1313 = vmatpush.msra.mxu0 %v1293
      %1314 = vmatmul.f32.gmra.mxu0 %v611
      %v1315 = vpop.f32.mrf.mxu0
      %v1316 = vadd.f32 0.0, %v1315
      %1317 = vdwg.mxu0
      %1318 = vmatpush.msra.mxu0 0.0
      %1319 = vmatpush.msra.mxu0 0.0
      %1320 = vmatpush.msra.mxu0 0.0
      %1321 = vmatpush.msra.mxu0 0.0
      %1322 = vmatpush.msra.mxu0 0.0
      %1323 = vmatpush.msra.mxu0 0.0
      %1324 = vmatpush.msra.mxu0 0.0
      %1325 = vmatpush.msra.mxu0 0.0
      %1326 = vmatpush.msra.mxu0 0.0
      %1327 = vmatpush.msra.mxu0 0.0
      %1328 = vmatpush.msra.mxu0 0.0
      %1329 = vmatpush.msra.mxu0 0.0
      %1330 = vmatpush.msra.mxu0 0.0
      %1331 = vmatpush.msra.mxu0 0.0
      %1332 = vmatpush.msra.mxu0 0.0
      %1333 = vmatpush.msra.mxu0 %v1294
      %1334 = vmatmul.f32.gmra.mxu0 %v611
      %v1335 = vpop.f32.mrf.mxu0
      %v1336 = vadd.f32 0.0, %v1335
      %1337 = vdwg.mxu0
      %1338 = vmatpush.msra.mxu0 0.0
      %1339 = vmatpush.msra.mxu0 0.0
      %1340 = vmatpush.msra.mxu0 0.0
      %1341 = vmatpush.msra.mxu0 0.0
      %1342 = vmatpush.msra.mxu0 0.0
      %1343 = vmatpush.msra.mxu0 0.0
      %1344 = vmatpush.msra.mxu0 0.0
      %1345 = vmatpush.msra.mxu0 0.0
      %1346 = vmatpush.msra.mxu0 0.0
      %1347 = vmatpush.msra.mxu0 0.0
      %1348 = vmatpush.msra.mxu0 0.0
      %1349 = vmatpush.msra.mxu0 0.0
      %1350 = vmatpush.msra.mxu0 0.0
      %1351 = vmatpush.msra.mxu0 0.0
      %1352 = vmatpush.msra.mxu0 0.0
      %1353 = vmatpush.msra.mxu0 %v1292
      %1354 = vmatmul.f32.gmra.mxu0 %v611
      %v1355 = vpop.f32.mrf.mxu0
      %v1356 = vadd.f32 0.0, %v1355
      %1357 = vdwg.mxu0
      %v1358 = vadd.f32 %v1284, %v1316
      %v1359 = vadd.f32 %v1285, %v1336
      %v1360 = vadd.f32 %v1286, %v1356
      %1361 = vrot.lane.b32.xlu0 %v928, 92
      %v1362 = vpop.permute.xlu0 %1361
      %1363 = vrot.lane.b32.xlu0 %v929, 92
      %v1364 = vpop.permute.xlu0 %1363
      %1365 = vrot.lane.b32.xlu0 %v930, 92
      %v1366 = vpop.permute.xlu0 %1365
      %v1367 = vsel %vm682, %v1362, %v1364
      %v1368 = vsel %vm682, %v1364, %v1366
      %1372 = vmatpush.msra.mxu0 0.0
      %1373 = vmatpush.msra.mxu0 0.0
      %1374 = vmatpush.msra.mxu0 0.0
      %1375 = vmatpush.msra.mxu0 0.0
      %1376 = vmatpush.msra.mxu0 0.0
      %1377 = vmatpush.msra.mxu0 0.0
      %1378 = vmatpush.msra.mxu0 0.0
      %1379 = vmatpush.msra.mxu0 0.0
      %1380 = vmatpush.msra.mxu0 0.0
      %1381 = vmatpush.msra.mxu0 0.0
      %1382 = vmatpush.msra.mxu0 0.0
      %1383 = vmatpush.msra.mxu0 0.0
      %1384 = vmatpush.msra.mxu0 0.0
      %1385 = vmatpush.msra.mxu0 0.0
      %1386 = vmatpush.msra.mxu0 0.0
      %1387 = vmatpush.msra.mxu0 %v1367
      %1388 = vmatmul.f32.gmra.mxu0 %v689
      %v1389 = vpop.f32.mrf.mxu0
      %v1390 = vadd.f32 0.0, %v1389
      %1391 = vdwg.mxu0
      %1392 = vmatpush.msra.mxu0 0.0
      %1393 = vmatpush.msra.mxu0 0.0
      %1394 = vmatpush.msra.mxu0 0.0
      %1395 = vmatpush.msra.mxu0 0.0
      %1396 = vmatpush.msra.mxu0 0.0
      %1397 = vmatpush.msra.mxu0 0.0
      %1398 = vmatpush.msra.mxu0 0.0
      %1399 = vmatpush.msra.mxu0 0.0
      %1400 = vmatpush.msra.mxu0 0.0
      %1401 = vmatpush.msra.mxu0 0.0
      %1402 = vmatpush.msra.mxu0 0.0
      %1403 = vmatpush.msra.mxu0 0.0
      %1404 = vmatpush.msra.mxu0 0.0
      %1405 = vmatpush.msra.mxu0 0.0
      %1406 = vmatpush.msra.mxu0 0.0
      %1407 = vmatpush.msra.mxu0 %v1368
      %1408 = vmatmul.f32.gmra.mxu0 %v689
      %v1409 = vpop.f32.mrf.mxu0
      %v1410 = vadd.f32 0.0, %v1409
      %1411 = vdwg.mxu0
      %1412 = vmatpush.msra.mxu0 0.0
      %1413 = vmatpush.msra.mxu0 0.0
      %1414 = vmatpush.msra.mxu0 0.0
      %1415 = vmatpush.msra.mxu0 0.0
      %1416 = vmatpush.msra.mxu0 0.0
      %1417 = vmatpush.msra.mxu0 0.0
      %1418 = vmatpush.msra.mxu0 0.0
      %1419 = vmatpush.msra.mxu0 0.0
      %1420 = vmatpush.msra.mxu0 0.0
      %1421 = vmatpush.msra.mxu0 0.0
      %1422 = vmatpush.msra.mxu0 0.0
      %1423 = vmatpush.msra.mxu0 0.0
      %1424 = vmatpush.msra.mxu0 0.0
      %1425 = vmatpush.msra.mxu0 0.0
      %1426 = vmatpush.msra.mxu0 0.0
      %1427 = vmatpush.msra.mxu0 %v1366
      %1428 = vmatmul.f32.gmra.mxu0 %v689
      %v1429 = vpop.f32.mrf.mxu0
      %v1430 = vadd.f32 0.0, %v1429
      %1431 = vdwg.mxu0
      %v1432 = vadd.f32 %v1358, %v1390
      %v1433 = vadd.f32 %v1359, %v1410
      %v1434 = vadd.f32 %v1360, %v1430
      %1435 = vrot.lane.b32.xlu0 %v928, 91
      %v1436 = vpop.permute.xlu0 %1435
      %1437 = vrot.lane.b32.xlu0 %v929, 91
      %v1438 = vpop.permute.xlu0 %1437
      %1439 = vrot.lane.b32.xlu0 %v930, 91
      %v1440 = vpop.permute.xlu0 %1439
      %v1441 = vsel %vm760, %v1436, %v1438
      %v1442 = vsel %vm760, %v1438, %v1440
      %1446 = vmatpush.msra.mxu0 0.0
      %1447 = vmatpush.msra.mxu0 0.0
      %1448 = vmatpush.msra.mxu0 0.0
      %1449 = vmatpush.msra.mxu0 0.0
      %1450 = vmatpush.msra.mxu0 0.0
      %1451 = vmatpush.msra.mxu0 0.0
      %1452 = vmatpush.msra.mxu0 0.0
      %1453 = vmatpush.msra.mxu0 0.0
      %1454 = vmatpush.msra.mxu0 0.0
      %1455 = vmatpush.msra.mxu0 0.0
      %1456 = vmatpush.msra.mxu0 0.0
      %1457 = vmatpush.msra.mxu0 0.0
      %1458 = vmatpush.msra.mxu0 0.0
      %1459 = vmatpush.msra.mxu0 0.0
      %1460 = vmatpush.msra.mxu0 0.0
      %1461 = vmatpush.msra.mxu0 %v1441
      %1462 = vmatmul.f32.gmra.mxu0 %v767
      %v1463 = vpop.f32.mrf.mxu0
      %v1464 = vadd.f32 0.0, %v1463
      %1465 = vdwg.mxu0
      %1466 = vmatpush.msra.mxu0 0.0
      %1467 = vmatpush.msra.mxu0 0.0
      %1468 = vmatpush.msra.mxu0 0.0
      %1469 = vmatpush.msra.mxu0 0.0
      %1470 = vmatpush.msra.mxu0 0.0
      %1471 = vmatpush.msra.mxu0 0.0
      %1472 = vmatpush.msra.mxu0 0.0
      %1473 = vmatpush.msra.mxu0 0.0
      %1474 = vmatpush.msra.mxu0 0.0
      %1475 = vmatpush.msra.mxu0 0.0
      %1476 = vmatpush.msra.mxu0 0.0
      %1477 = vmatpush.msra.mxu0 0.0
      %1478 = vmatpush.msra.mxu0 0.0
      %1479 = vmatpush.msra.mxu0 0.0
      %1480 = vmatpush.msra.mxu0 0.0
      %1481 = vmatpush.msra.mxu0 %v1442
      %1482 = vmatmul.f32.gmra.mxu0 %v767
      %v1483 = vpop.f32.mrf.mxu0
      %v1484 = vadd.f32 0.0, %v1483
      %1485 = vdwg.mxu0
      %1486 = vmatpush.msra.mxu0 0.0
      %1487 = vmatpush.msra.mxu0 0.0
      %1488 = vmatpush.msra.mxu0 0.0
      %1489 = vmatpush.msra.mxu0 0.0
      %1490 = vmatpush.msra.mxu0 0.0
      %1491 = vmatpush.msra.mxu0 0.0
      %1492 = vmatpush.msra.mxu0 0.0
      %1493 = vmatpush.msra.mxu0 0.0
      %1494 = vmatpush.msra.mxu0 0.0
      %1495 = vmatpush.msra.mxu0 0.0
      %1496 = vmatpush.msra.mxu0 0.0
      %1497 = vmatpush.msra.mxu0 0.0
      %1498 = vmatpush.msra.mxu0 0.0
      %1499 = vmatpush.msra.mxu0 0.0
      %1500 = vmatpush.msra.mxu0 0.0
      %1501 = vmatpush.msra.mxu0 %v1440
      %1502 = vmatmul.f32.gmra.mxu0 %v767
      %v1503 = vpop.f32.mrf.mxu0
      %v1504 = vadd.f32 0.0, %v1503
      %1505 = vdwg.mxu0
      %v1506 = vadd.f32 %v1432, %v1464
      %v1507 = vadd.f32 %v1433, %v1484
      %v1508 = vadd.f32 %v1434, %v1504
      %1509 = vrot.lane.b32.xlu0 %v928, 90
      %v1510 = vpop.permute.xlu0 %1509
      %1511 = vrot.lane.b32.xlu0 %v929, 90
      %v1512 = vpop.permute.xlu0 %1511
      %1513 = vrot.lane.b32.xlu0 %v930, 90
      %v1514 = vpop.permute.xlu0 %1513
      %v1515 = vsel %vm838, %v1510, %v1512
      %v1516 = vsel %vm838, %v1512, %v1514
      %1520 = vmatpush.msra.mxu0 0.0
      %1521 = vmatpush.msra.mxu0 0.0
      %1522 = vmatpush.msra.mxu0 0.0
      %1523 = vmatpush.msra.mxu0 0.0
      %1524 = vmatpush.msra.mxu0 0.0
      %1525 = vmatpush.msra.mxu0 0.0
      %1526 = vmatpush.msra.mxu0 0.0
      %1527 = vmatpush.msra.mxu0 0.0
      %1528 = vmatpush.msra.mxu0 0.0
      %1529 = vmatpush.msra.mxu0 0.0
      %1530 = vmatpush.msra.mxu0 0.0
      %1531 = vmatpush.msra.mxu0 0.0
      %1532 = vmatpush.msra.mxu0 0.0
      %1533 = vmatpush.msra.mxu0 0.0
      %1534 = vmatpush.msra.mxu0 0.0
      %1535 = vmatpush.msra.mxu0 %v1515
      %1536 = vmatmul.f32.gmra.mxu0 %v845
      %v1537 = vpop.f32.mrf.mxu0
      %v1538 = vadd.f32 0.0, %v1537
      %1539 = vdwg.mxu0
      %1540 = vmatpush.msra.mxu0 0.0
      %1541 = vmatpush.msra.mxu0 0.0
      %1542 = vmatpush.msra.mxu0 0.0
      %1543 = vmatpush.msra.mxu0 0.0
      %1544 = vmatpush.msra.mxu0 0.0
      %1545 = vmatpush.msra.mxu0 0.0
      %1546 = vmatpush.msra.mxu0 0.0
      %1547 = vmatpush.msra.mxu0 0.0
      %1548 = vmatpush.msra.mxu0 0.0
      %1549 = vmatpush.msra.mxu0 0.0
      %1550 = vmatpush.msra.mxu0 0.0
      %1551 = vmatpush.msra.mxu0 0.0
      %1552 = vmatpush.msra.mxu0 0.0
      %1553 = vmatpush.msra.mxu0 0.0
      %1554 = vmatpush.msra.mxu0 0.0
      %1555 = vmatpush.msra.mxu0 %v1516
      %1556 = vmatmul.f32.gmra.mxu0 %v845
      %v1557 = vpop.f32.mrf.mxu0
      %v1558 = vadd.f32 0.0, %v1557
      %1559 = vdwg.mxu0
      %1560 = vmatpush.msra.mxu0 0.0
      %1561 = vmatpush.msra.mxu0 0.0
      %1562 = vmatpush.msra.mxu0 0.0
      %1563 = vmatpush.msra.mxu0 0.0
      %1564 = vmatpush.msra.mxu0 0.0
      %1565 = vmatpush.msra.mxu0 0.0
      %1566 = vmatpush.msra.mxu0 0.0
      %1567 = vmatpush.msra.mxu0 0.0
      %1568 = vmatpush.msra.mxu0 0.0
      %1569 = vmatpush.msra.mxu0 0.0
      %1570 = vmatpush.msra.mxu0 0.0
      %1571 = vmatpush.msra.mxu0 0.0
      %1572 = vmatpush.msra.mxu0 0.0
      %1573 = vmatpush.msra.mxu0 0.0
      %1574 = vmatpush.msra.mxu0 0.0
      %1575 = vmatpush.msra.mxu0 %v1514
      %1576 = vmatmul.f32.gmra.mxu0 %v845
      %v1577 = vpop.f32.mrf.mxu0
      %v1578 = vadd.f32 0.0, %v1577
      %1579 = vdwg.mxu0
      %v1580 = vadd.f32 %v1506, %v1538
      %v1581 = vadd.f32 %v1507, %v1558
      %v1582 = vadd.f32 %v1508, %v1578
      %v1585 = vrot.slane %v1581, 4
      %v1586 = vsel %vm913, %v1580, %v1585
      %s1588 = scalar_lea.vmem %s190, 12
      %1589 = vst [vmem:[%s1588] sm:$0xff] %v1586
      %1590 = vst.msk [vmem:[%s1588 + $0x8] sm:$0xf] %vm917, %v1582
      %s1591 = scalar_lea.vmem %s180, 2
      %v1592 = vld [vmem:[%s1591] ss:$4 sm:$0x7]
      %v1594 = vperm.slane %v1592, 0
      %v1595 = vperm.slane %v1592, 1
      %v1596 = vperm.slane %v1592, 2
      %v1600 = vmul.f32 %v1594, %v208
      %v1601 = vmul.f32 %v1595, %v209
      %v1602 = vmul.f32 %v1596, %v210
      %1606 = vrot.lane.b32.xlu0 %v1600, 127
      %v1607 = vpop.permute.xlu0 %1606
      %1608 = vrot.lane.b32.xlu0 %v1601, 127
      %v1609 = vpop.permute.xlu0 %1608
      %1610 = vrot.lane.b32.xlu0 %v1602, 127
      %v1611 = vpop.permute.xlu0 %1610
      %v1612 = vsel %vm231, %v1607, %v1609
      %v1613 = vsel %vm231, %v1609, %v1611
      %1617 = vmatpush.msra.mxu0 0.0
      %1618 = vmatpush.msra.mxu0 0.0
      %1619 = vmatpush.msra.mxu0 0.0
      %1620 = vmatpush.msra.mxu0 0.0
      %1621 = vmatpush.msra.mxu0 0.0
      %1622 = vmatpush.msra.mxu0 0.0
      %1623 = vmatpush.msra.mxu0 0.0
      %1624 = vmatpush.msra.mxu0 0.0
      %1625 = vmatpush.msra.mxu0 0.0
      %1626 = vmatpush.msra.mxu0 0.0
      %1627 = vmatpush.msra.mxu0 0.0
      %1628 = vmatpush.msra.mxu0 0.0
      %1629 = vmatpush.msra.mxu0 0.0
      %1630 = vmatpush.msra.mxu0 0.0
      %1631 = vmatpush.msra.mxu0 0.0
      %1632 = vmatpush.msra.mxu0 %v1612
      %1633 = vmatmul.f32.gmra.mxu0 %v239
      %v1634 = vpop.f32.mrf.mxu0
      %v1635 = vadd.f32 0.0, %v1634
      %1636 = vdwg.mxu0
      %1637 = vmatpush.msra.mxu0 0.0
      %1638 = vmatpush.msra.mxu0 0.0
      %1639 = vmatpush.msra.mxu0 0.0
      %1640 = vmatpush.msra.mxu0 0.0
      %1641 = vmatpush.msra.mxu0 0.0
      %1642 = vmatpush.msra.mxu0 0.0
      %1643 = vmatpush.msra.mxu0 0.0
      %1644 = vmatpush.msra.mxu0 0.0
      %1645 = vmatpush.msra.mxu0 0.0
      %1646 = vmatpush.msra.mxu0 0.0
      %1647 = vmatpush.msra.mxu0 0.0
      %1648 = vmatpush.msra.mxu0 0.0
      %1649 = vmatpush.msra.mxu0 0.0
      %1650 = vmatpush.msra.mxu0 0.0
      %1651 = vmatpush.msra.mxu0 0.0
      %1652 = vmatpush.msra.mxu0 %v1613
      %1653 = vmatmul.f32.gmra.mxu0 %v239
      %v1654 = vpop.f32.mrf.mxu0
      %v1655 = vadd.f32 0.0, %v1654
      %1656 = vdwg.mxu0
      %1657 = vmatpush.msra.mxu0 0.0
      %1658 = vmatpush.msra.mxu0 0.0
      %1659 = vmatpush.msra.mxu0 0.0
      %1660 = vmatpush.msra.mxu0 0.0
      %1661 = vmatpush.msra.mxu0 0.0
      %1662 = vmatpush.msra.mxu0 0.0
      %1663 = vmatpush.msra.mxu0 0.0
      %1664 = vmatpush.msra.mxu0 0.0
      %1665 = vmatpush.msra.mxu0 0.0
      %1666 = vmatpush.msra.mxu0 0.0
      %1667 = vmatpush.msra.mxu0 0.0
      %1668 = vmatpush.msra.mxu0 0.0
      %1669 = vmatpush.msra.mxu0 0.0
      %1670 = vmatpush.msra.mxu0 0.0
      %1671 = vmatpush.msra.mxu0 0.0
      %1672 = vmatpush.msra.mxu0 %v1611
      %1673 = vmatmul.f32.gmra.mxu0 %v239
      %v1674 = vpop.f32.mrf.mxu0
      %v1675 = vadd.f32 0.0, %v1674
      %1676 = vdwg.mxu0
      %1677 = vmatpush.msra.mxu0 0.0
      %1678 = vmatpush.msra.mxu0 0.0
      %1679 = vmatpush.msra.mxu0 0.0
      %1680 = vmatpush.msra.mxu0 0.0
      %1681 = vmatpush.msra.mxu0 0.0
      %1682 = vmatpush.msra.mxu0 0.0
      %1683 = vmatpush.msra.mxu0 0.0
      %1684 = vmatpush.msra.mxu0 0.0
      %1685 = vmatpush.msra.mxu0 0.0
      %1686 = vmatpush.msra.mxu0 0.0
      %1687 = vmatpush.msra.mxu0 0.0
      %1688 = vmatpush.msra.mxu0 0.0
      %1689 = vmatpush.msra.mxu0 0.0
      %1690 = vmatpush.msra.mxu0 0.0
      %1691 = vmatpush.msra.mxu0 0.0
      %1692 = vmatpush.msra.mxu0 %v1600
      %1693 = vmatmul.f32.gmra.mxu0 %v302
      %v1694 = vpop.f32.mrf.mxu0
      %v1695 = vadd.f32 %v1635, %v1694
      %1696 = vdwg.mxu0
      %1697 = vmatpush.msra.mxu0 0.0
      %1698 = vmatpush.msra.mxu0 0.0
      %1699 = vmatpush.msra.mxu0 0.0
      %1700 = vmatpush.msra.mxu0 0.0
      %1701 = vmatpush.msra.mxu0 0.0
      %1702 = vmatpush.msra.mxu0 0.0
      %1703 = vmatpush.msra.mxu0 0.0
      %1704 = vmatpush.msra.mxu0 0.0
      %1705 = vmatpush.msra.mxu0 0.0
      %1706 = vmatpush.msra.mxu0 0.0
      %1707 = vmatpush.msra.mxu0 0.0
      %1708 = vmatpush.msra.mxu0 0.0
      %1709 = vmatpush.msra.mxu0 0.0
      %1710 = vmatpush.msra.mxu0 0.0
      %1711 = vmatpush.msra.mxu0 0.0
      %1712 = vmatpush.msra.mxu0 %v1601
      %1713 = vmatmul.f32.gmra.mxu0 %v302
      %v1714 = vpop.f32.mrf.mxu0
      %v1715 = vadd.f32 %v1655, %v1714
      %1716 = vdwg.mxu0
      %1717 = vmatpush.msra.mxu0 0.0
      %1718 = vmatpush.msra.mxu0 0.0
      %1719 = vmatpush.msra.mxu0 0.0
      %1720 = vmatpush.msra.mxu0 0.0
      %1721 = vmatpush.msra.mxu0 0.0
      %1722 = vmatpush.msra.mxu0 0.0
      %1723 = vmatpush.msra.mxu0 0.0
      %1724 = vmatpush.msra.mxu0 0.0
      %1725 = vmatpush.msra.mxu0 0.0
      %1726 = vmatpush.msra.mxu0 0.0
      %1727 = vmatpush.msra.mxu0 0.0
      %1728 = vmatpush.msra.mxu0 0.0
      %1729 = vmatpush.msra.mxu0 0.0
      %1730 = vmatpush.msra.mxu0 0.0
      %1731 = vmatpush.msra.mxu0 0.0
      %1732 = vmatpush.msra.mxu0 %v1602
      %1733 = vmatmul.f32.gmra.mxu0 %v302
      %v1734 = vpop.f32.mrf.mxu0
      %v1735 = vadd.f32 %v1675, %v1734
      %1736 = vdwg.mxu0
      %1737 = vrot.lane.b32.xlu0 %v1600, 126
      %v1738 = vpop.permute.xlu0 %1737
      %1739 = vrot.lane.b32.xlu0 %v1601, 126
      %v1740 = vpop.permute.xlu0 %1739
      %1741 = vrot.lane.b32.xlu0 %v1602, 126
      %v1742 = vpop.permute.xlu0 %1741
      %v1743 = vsel %vm370, %v1738, %v1740
      %v1744 = vsel %vm370, %v1740, %v1742
      %1748 = vmatpush.msra.mxu0 0.0
      %1749 = vmatpush.msra.mxu0 0.0
      %1750 = vmatpush.msra.mxu0 0.0
      %1751 = vmatpush.msra.mxu0 0.0
      %1752 = vmatpush.msra.mxu0 0.0
      %1753 = vmatpush.msra.mxu0 0.0
      %1754 = vmatpush.msra.mxu0 0.0
      %1755 = vmatpush.msra.mxu0 0.0
      %1756 = vmatpush.msra.mxu0 0.0
      %1757 = vmatpush.msra.mxu0 0.0
      %1758 = vmatpush.msra.mxu0 0.0
      %1759 = vmatpush.msra.mxu0 0.0
      %1760 = vmatpush.msra.mxu0 0.0
      %1761 = vmatpush.msra.mxu0 0.0
      %1762 = vmatpush.msra.mxu0 0.0
      %1763 = vmatpush.msra.mxu0 %v1743
      %1764 = vmatmul.f32.gmra.mxu0 %v377
      %v1765 = vpop.f32.mrf.mxu0
      %v1766 = vadd.f32 0.0, %v1765
      %1767 = vdwg.mxu0
      %1768 = vmatpush.msra.mxu0 0.0
      %1769 = vmatpush.msra.mxu0 0.0
      %1770 = vmatpush.msra.mxu0 0.0
      %1771 = vmatpush.msra.mxu0 0.0
      %1772 = vmatpush.msra.mxu0 0.0
      %1773 = vmatpush.msra.mxu0 0.0
      %1774 = vmatpush.msra.mxu0 0.0
      %1775 = vmatpush.msra.mxu0 0.0
      %1776 = vmatpush.msra.mxu0 0.0
      %1777 = vmatpush.msra.mxu0 0.0
      %1778 = vmatpush.msra.mxu0 0.0
      %1779 = vmatpush.msra.mxu0 0.0
      %1780 = vmatpush.msra.mxu0 0.0
      %1781 = vmatpush.msra.mxu0 0.0
      %1782 = vmatpush.msra.mxu0 0.0
      %1783 = vmatpush.msra.mxu0 %v1744
      %1784 = vmatmul.f32.gmra.mxu0 %v377
      %v1785 = vpop.f32.mrf.mxu0
      %v1786 = vadd.f32 0.0, %v1785
      %1787 = vdwg.mxu0
      %1788 = vmatpush.msra.mxu0 0.0
      %1789 = vmatpush.msra.mxu0 0.0
      %1790 = vmatpush.msra.mxu0 0.0
      %1791 = vmatpush.msra.mxu0 0.0
      %1792 = vmatpush.msra.mxu0 0.0
      %1793 = vmatpush.msra.mxu0 0.0
      %1794 = vmatpush.msra.mxu0 0.0
      %1795 = vmatpush.msra.mxu0 0.0
      %1796 = vmatpush.msra.mxu0 0.0
      %1797 = vmatpush.msra.mxu0 0.0
      %1798 = vmatpush.msra.mxu0 0.0
      %1799 = vmatpush.msra.mxu0 0.0
      %1800 = vmatpush.msra.mxu0 0.0
      %1801 = vmatpush.msra.mxu0 0.0
      %1802 = vmatpush.msra.mxu0 0.0
      %1803 = vmatpush.msra.mxu0 %v1742
      %1804 = vmatmul.f32.gmra.mxu0 %v377
      %v1805 = vpop.f32.mrf.mxu0
      %v1806 = vadd.f32 0.0, %v1805
      %1807 = vdwg.mxu0
      %v1808 = vadd.f32 %v1695, %v1766
      %v1809 = vadd.f32 %v1715, %v1786
      %v1810 = vadd.f32 %v1735, %v1806
      %1811 = vrot.lane.b32.xlu0 %v1600, 110
      %v1812 = vpop.permute.xlu0 %1811
      %1813 = vrot.lane.b32.xlu0 %v1601, 110
      %v1814 = vpop.permute.xlu0 %1813
      %1815 = vrot.lane.b32.xlu0 %v1602, 110
      %v1816 = vpop.permute.xlu0 %1815
      %v1817 = vsel %vm448, %v1812, %v1814
      %v1818 = vsel %vm448, %v1814, %v1816
      %1822 = vmatpush.msra.mxu0 0.0
      %1823 = vmatpush.msra.mxu0 0.0
      %1824 = vmatpush.msra.mxu0 0.0
      %1825 = vmatpush.msra.mxu0 0.0
      %1826 = vmatpush.msra.mxu0 0.0
      %1827 = vmatpush.msra.mxu0 0.0
      %1828 = vmatpush.msra.mxu0 0.0
      %1829 = vmatpush.msra.mxu0 0.0
      %1830 = vmatpush.msra.mxu0 0.0
      %1831 = vmatpush.msra.mxu0 0.0
      %1832 = vmatpush.msra.mxu0 0.0
      %1833 = vmatpush.msra.mxu0 0.0
      %1834 = vmatpush.msra.mxu0 0.0
      %1835 = vmatpush.msra.mxu0 0.0
      %1836 = vmatpush.msra.mxu0 0.0
      %1837 = vmatpush.msra.mxu0 %v1817
      %1838 = vmatmul.f32.gmra.mxu0 %v455
      %v1839 = vpop.f32.mrf.mxu0
      %v1840 = vadd.f32 0.0, %v1839
      %1841 = vdwg.mxu0
      %1842 = vmatpush.msra.mxu0 0.0
      %1843 = vmatpush.msra.mxu0 0.0
      %1844 = vmatpush.msra.mxu0 0.0
      %1845 = vmatpush.msra.mxu0 0.0
      %1846 = vmatpush.msra.mxu0 0.0
      %1847 = vmatpush.msra.mxu0 0.0
      %1848 = vmatpush.msra.mxu0 0.0
      %1849 = vmatpush.msra.mxu0 0.0
      %1850 = vmatpush.msra.mxu0 0.0
      %1851 = vmatpush.msra.mxu0 0.0
      %1852 = vmatpush.msra.mxu0 0.0
      %1853 = vmatpush.msra.mxu0 0.0
      %1854 = vmatpush.msra.mxu0 0.0
      %1855 = vmatpush.msra.mxu0 0.0
      %1856 = vmatpush.msra.mxu0 0.0
      %1857 = vmatpush.msra.mxu0 %v1818
      %1858 = vmatmul.f32.gmra.mxu0 %v455
      %v1859 = vpop.f32.mrf.mxu0
      %v1860 = vadd.f32 0.0, %v1859
      %1861 = vdwg.mxu0
      %1862 = vmatpush.msra.mxu0 0.0
      %1863 = vmatpush.msra.mxu0 0.0
      %1864 = vmatpush.msra.mxu0 0.0
      %1865 = vmatpush.msra.mxu0 0.0
      %1866 = vmatpush.msra.mxu0 0.0
      %1867 = vmatpush.msra.mxu0 0.0
      %1868 = vmatpush.msra.mxu0 0.0
      %1869 = vmatpush.msra.mxu0 0.0
      %1870 = vmatpush.msra.mxu0 0.0
      %1871 = vmatpush.msra.mxu0 0.0
      %1872 = vmatpush.msra.mxu0 0.0
      %1873 = vmatpush.msra.mxu0 0.0
      %1874 = vmatpush.msra.mxu0 0.0
      %1875 = vmatpush.msra.mxu0 0.0
      %1876 = vmatpush.msra.mxu0 0.0
      %1877 = vmatpush.msra.mxu0 %v1816
      %1878 = vmatmul.f32.gmra.mxu0 %v455
      %v1879 = vpop.f32.mrf.mxu0
      %v1880 = vadd.f32 0.0, %v1879
      %1881 = vdwg.mxu0
      %v1882 = vadd.f32 %v1808, %v1840
      %v1883 = vadd.f32 %v1809, %v1860
      %v1884 = vadd.f32 %v1810, %v1880
      %1885 = vrot.lane.b32.xlu0 %v1600, 109
      %v1886 = vpop.permute.xlu0 %1885
      %1887 = vrot.lane.b32.xlu0 %v1601, 109
      %v1888 = vpop.permute.xlu0 %1887
      %1889 = vrot.lane.b32.xlu0 %v1602, 109
      %v1890 = vpop.permute.xlu0 %1889
      %v1891 = vsel %vm526, %v1886, %v1888
      %v1892 = vsel %vm526, %v1888, %v1890
      %1896 = vmatpush.msra.mxu0 0.0
      %1897 = vmatpush.msra.mxu0 0.0
      %1898 = vmatpush.msra.mxu0 0.0
      %1899 = vmatpush.msra.mxu0 0.0
      %1900 = vmatpush.msra.mxu0 0.0
      %1901 = vmatpush.msra.mxu0 0.0
      %1902 = vmatpush.msra.mxu0 0.0
      %1903 = vmatpush.msra.mxu0 0.0
      %1904 = vmatpush.msra.mxu0 0.0
      %1905 = vmatpush.msra.mxu0 0.0
      %1906 = vmatpush.msra.mxu0 0.0
      %1907 = vmatpush.msra.mxu0 0.0
      %1908 = vmatpush.msra.mxu0 0.0
      %1909 = vmatpush.msra.mxu0 0.0
      %1910 = vmatpush.msra.mxu0 0.0
      %1911 = vmatpush.msra.mxu0 %v1891
      %1912 = vmatmul.f32.gmra.mxu0 %v533
      %v1913 = vpop.f32.mrf.mxu0
      %v1914 = vadd.f32 0.0, %v1913
      %1915 = vdwg.mxu0
      %1916 = vmatpush.msra.mxu0 0.0
      %1917 = vmatpush.msra.mxu0 0.0
      %1918 = vmatpush.msra.mxu0 0.0
      %1919 = vmatpush.msra.mxu0 0.0
      %1920 = vmatpush.msra.mxu0 0.0
      %1921 = vmatpush.msra.mxu0 0.0
      %1922 = vmatpush.msra.mxu0 0.0
      %1923 = vmatpush.msra.mxu0 0.0
      %1924 = vmatpush.msra.mxu0 0.0
      %1925 = vmatpush.msra.mxu0 0.0
      %1926 = vmatpush.msra.mxu0 0.0
      %1927 = vmatpush.msra.mxu0 0.0
      %1928 = vmatpush.msra.mxu0 0.0
      %1929 = vmatpush.msra.mxu0 0.0
      %1930 = vmatpush.msra.mxu0 0.0
      %1931 = vmatpush.msra.mxu0 %v1892
      %1932 = vmatmul.f32.gmra.mxu0 %v533
      %v1933 = vpop.f32.mrf.mxu0
      %v1934 = vadd.f32 0.0, %v1933
      %1935 = vdwg.mxu0
      %1936 = vmatpush.msra.mxu0 0.0
      %1937 = vmatpush.msra.mxu0 0.0
      %1938 = vmatpush.msra.mxu0 0.0
      %1939 = vmatpush.msra.mxu0 0.0
      %1940 = vmatpush.msra.mxu0 0.0
      %1941 = vmatpush.msra.mxu0 0.0
      %1942 = vmatpush.msra.mxu0 0.0
      %1943 = vmatpush.msra.mxu0 0.0
      %1944 = vmatpush.msra.mxu0 0.0
      %1945 = vmatpush.msra.mxu0 0.0
      %1946 = vmatpush.msra.mxu0 0.0
      %1947 = vmatpush.msra.mxu0 0.0
      %1948 = vmatpush.msra.mxu0 0.0
      %1949 = vmatpush.msra.mxu0 0.0
      %1950 = vmatpush.msra.mxu0 0.0
      %1951 = vmatpush.msra.mxu0 %v1890
      %1952 = vmatmul.f32.gmra.mxu0 %v533
      %v1953 = vpop.f32.mrf.mxu0
      %v1954 = vadd.f32 0.0, %v1953
      %1955 = vdwg.mxu0
      %v1956 = vadd.f32 %v1882, %v1914
      %v1957 = vadd.f32 %v1883, %v1934
      %v1958 = vadd.f32 %v1884, %v1954
      %1959 = vrot.lane.b32.xlu0 %v1600, 108
      %v1960 = vpop.permute.xlu0 %1959
      %1961 = vrot.lane.b32.xlu0 %v1601, 108
      %v1962 = vpop.permute.xlu0 %1961
      %1963 = vrot.lane.b32.xlu0 %v1602, 108
      %v1964 = vpop.permute.xlu0 %1963
      %v1965 = vsel %vm604, %v1960, %v1962
      %v1966 = vsel %vm604, %v1962, %v1964
      %1970 = vmatpush.msra.mxu0 0.0
      %1971 = vmatpush.msra.mxu0 0.0
      %1972 = vmatpush.msra.mxu0 0.0
      %1973 = vmatpush.msra.mxu0 0.0
      %1974 = vmatpush.msra.mxu0 0.0
      %1975 = vmatpush.msra.mxu0 0.0
      %1976 = vmatpush.msra.mxu0 0.0
      %1977 = vmatpush.msra.mxu0 0.0
      %1978 = vmatpush.msra.mxu0 0.0
      %1979 = vmatpush.msra.mxu0 0.0
      %1980 = vmatpush.msra.mxu0 0.0
      %1981 = vmatpush.msra.mxu0 0.0
      %1982 = vmatpush.msra.mxu0 0.0
      %1983 = vmatpush.msra.mxu0 0.0
      %1984 = vmatpush.msra.mxu0 0.0
      %1985 = vmatpush.msra.mxu0 %v1965
      %1986 = vmatmul.f32.gmra.mxu0 %v611
      %v1987 = vpop.f32.mrf.mxu0
      %v1988 = vadd.f32 0.0, %v1987
      %1989 = vdwg.mxu0
      %1990 = vmatpush.msra.mxu0 0.0
      %1991 = vmatpush.msra.mxu0 0.0
      %1992 = vmatpush.msra.mxu0 0.0
      %1993 = vmatpush.msra.mxu0 0.0
      %1994 = vmatpush.msra.mxu0 0.0
      %1995 = vmatpush.msra.mxu0 0.0
      %1996 = vmatpush.msra.mxu0 0.0
      %1997 = vmatpush.msra.mxu0 0.0
      %1998 = vmatpush.msra.mxu0 0.0
      %1999 = vmatpush.msra.mxu0 0.0
      %2000 = vmatpush.msra.mxu0 0.0
      %2001 = vmatpush.msra.mxu0 0.0
      %2002 = vmatpush.msra.mxu0 0.0
      %2003 = vmatpush.msra.mxu0 0.0
      %2004 = vmatpush.msra.mxu0 0.0
      %2005 = vmatpush.msra.mxu0 %v1966
      %2006 = vmatmul.f32.gmra.mxu0 %v611
      %v2007 = vpop.f32.mrf.mxu0
      %v2008 = vadd.f32 0.0, %v2007
      %2009 = vdwg.mxu0
      %2010 = vmatpush.msra.mxu0 0.0
      %2011 = vmatpush.msra.mxu0 0.0
      %2012 = vmatpush.msra.mxu0 0.0
      %2013 = vmatpush.msra.mxu0 0.0
      %2014 = vmatpush.msra.mxu0 0.0
      %2015 = vmatpush.msra.mxu0 0.0
      %2016 = vmatpush.msra.mxu0 0.0
      %2017 = vmatpush.msra.mxu0 0.0
      %2018 = vmatpush.msra.mxu0 0.0
      %2019 = vmatpush.msra.mxu0 0.0
      %2020 = vmatpush.msra.mxu0 0.0
      %2021 = vmatpush.msra.mxu0 0.0
      %2022 = vmatpush.msra.mxu0 0.0
      %2023 = vmatpush.msra.mxu0 0.0
      %2024 = vmatpush.msra.mxu0 0.0
      %2025 = vmatpush.msra.mxu0 %v1964
      %2026 = vmatmul.f32.gmra.mxu0 %v611
      %v2027 = vpop.f32.mrf.mxu0
      %v2028 = vadd.f32 0.0, %v2027
      %2029 = vdwg.mxu0
      %v2030 = vadd.f32 %v1956, %v1988
      %v2031 = vadd.f32 %v1957, %v2008
      %v2032 = vadd.f32 %v1958, %v2028
      %2033 = vrot.lane.b32.xlu0 %v1600, 92
      %v2034 = vpop.permute.xlu0 %2033
      %2035 = vrot.lane.b32.xlu0 %v1601, 92
      %v2036 = vpop.permute.xlu0 %2035
      %2037 = vrot.lane.b32.xlu0 %v1602, 92
      %v2038 = vpop.permute.xlu0 %2037
      %v2039 = vsel %vm682, %v2034, %v2036
      %v2040 = vsel %vm682, %v2036, %v2038
      %2044 = vmatpush.msra.mxu0 0.0
      %2045 = vmatpush.msra.mxu0 0.0
      %2046 = vmatpush.msra.mxu0 0.0
      %2047 = vmatpush.msra.mxu0 0.0
      %2048 = vmatpush.msra.mxu0 0.0
      %2049 = vmatpush.msra.mxu0 0.0
      %2050 = vmatpush.msra.mxu0 0.0
      %2051 = vmatpush.msra.mxu0 0.0
      %2052 = vmatpush.msra.mxu0 0.0
      %2053 = vmatpush.msra.mxu0 0.0
      %2054 = vmatpush.msra.mxu0 0.0
      %2055 = vmatpush.msra.mxu0 0.0
      %2056 = vmatpush.msra.mxu0 0.0
      %2057 = vmatpush.msra.mxu0 0.0
      %2058 = vmatpush.msra.mxu0 0.0
      %2059 = vmatpush.msra.mxu0 %v2039
      %2060 = vmatmul.f32.gmra.mxu0 %v689
      %v2061 = vpop.f32.mrf.mxu0
      %v2062 = vadd.f32 0.0, %v2061
      %2063 = vdwg.mxu0
      %2064 = vmatpush.msra.mxu0 0.0
      %2065 = vmatpush.msra.mxu0 0.0
      %2066 = vmatpush.msra.mxu0 0.0
      %2067 = vmatpush.msra.mxu0 0.0
      %2068 = vmatpush.msra.mxu0 0.0
      %2069 = vmatpush.msra.mxu0 0.0
      %2070 = vmatpush.msra.mxu0 0.0
      %2071 = vmatpush.msra.mxu0 0.0
      %2072 = vmatpush.msra.mxu0 0.0
      %2073 = vmatpush.msra.mxu0 0.0
      %2074 = vmatpush.msra.mxu0 0.0
      %2075 = vmatpush.msra.mxu0 0.0
      %2076 = vmatpush.msra.mxu0 0.0
      %2077 = vmatpush.msra.mxu0 0.0
      %2078 = vmatpush.msra.mxu0 0.0
      %2079 = vmatpush.msra.mxu0 %v2040
      %2080 = vmatmul.f32.gmra.mxu0 %v689
      %v2081 = vpop.f32.mrf.mxu0
      %v2082 = vadd.f32 0.0, %v2081
      %2083 = vdwg.mxu0
      %2084 = vmatpush.msra.mxu0 0.0
      %2085 = vmatpush.msra.mxu0 0.0
      %2086 = vmatpush.msra.mxu0 0.0
      %2087 = vmatpush.msra.mxu0 0.0
      %2088 = vmatpush.msra.mxu0 0.0
      %2089 = vmatpush.msra.mxu0 0.0
      %2090 = vmatpush.msra.mxu0 0.0
      %2091 = vmatpush.msra.mxu0 0.0
      %2092 = vmatpush.msra.mxu0 0.0
      %2093 = vmatpush.msra.mxu0 0.0
      %2094 = vmatpush.msra.mxu0 0.0
      %2095 = vmatpush.msra.mxu0 0.0
      %2096 = vmatpush.msra.mxu0 0.0
      %2097 = vmatpush.msra.mxu0 0.0
      %2098 = vmatpush.msra.mxu0 0.0
      %2099 = vmatpush.msra.mxu0 %v2038
      %2100 = vmatmul.f32.gmra.mxu0 %v689
      %v2101 = vpop.f32.mrf.mxu0
      %v2102 = vadd.f32 0.0, %v2101
      %2103 = vdwg.mxu0
      %v2104 = vadd.f32 %v2030, %v2062
      %v2105 = vadd.f32 %v2031, %v2082
      %v2106 = vadd.f32 %v2032, %v2102
      %2107 = vrot.lane.b32.xlu0 %v1600, 91
      %v2108 = vpop.permute.xlu0 %2107
      %2109 = vrot.lane.b32.xlu0 %v1601, 91
      %v2110 = vpop.permute.xlu0 %2109
      %2111 = vrot.lane.b32.xlu0 %v1602, 91
      %v2112 = vpop.permute.xlu0 %2111
      %v2113 = vsel %vm760, %v2108, %v2110
      %v2114 = vsel %vm760, %v2110, %v2112
      %2118 = vmatpush.msra.mxu0 0.0
      %2119 = vmatpush.msra.mxu0 0.0
      %2120 = vmatpush.msra.mxu0 0.0
      %2121 = vmatpush.msra.mxu0 0.0
      %2122 = vmatpush.msra.mxu0 0.0
      %2123 = vmatpush.msra.mxu0 0.0
      %2124 = vmatpush.msra.mxu0 0.0
      %2125 = vmatpush.msra.mxu0 0.0
      %2126 = vmatpush.msra.mxu0 0.0
      %2127 = vmatpush.msra.mxu0 0.0
      %2128 = vmatpush.msra.mxu0 0.0
      %2129 = vmatpush.msra.mxu0 0.0
      %2130 = vmatpush.msra.mxu0 0.0
      %2131 = vmatpush.msra.mxu0 0.0
      %2132 = vmatpush.msra.mxu0 0.0
      %2133 = vmatpush.msra.mxu0 %v2113
      %2134 = vmatmul.f32.gmra.mxu0 %v767
      %v2135 = vpop.f32.mrf.mxu0
      %v2136 = vadd.f32 0.0, %v2135
      %2137 = vdwg.mxu0
      %2138 = vmatpush.msra.mxu0 0.0
      %2139 = vmatpush.msra.mxu0 0.0
      %2140 = vmatpush.msra.mxu0 0.0
      %2141 = vmatpush.msra.mxu0 0.0
      %2142 = vmatpush.msra.mxu0 0.0
      %2143 = vmatpush.msra.mxu0 0.0
      %2144 = vmatpush.msra.mxu0 0.0
      %2145 = vmatpush.msra.mxu0 0.0
      %2146 = vmatpush.msra.mxu0 0.0
      %2147 = vmatpush.msra.mxu0 0.0
      %2148 = vmatpush.msra.mxu0 0.0
      %2149 = vmatpush.msra.mxu0 0.0
      %2150 = vmatpush.msra.mxu0 0.0
      %2151 = vmatpush.msra.mxu0 0.0
      %2152 = vmatpush.msra.mxu0 0.0
      %2153 = vmatpush.msra.mxu0 %v2114
      %2154 = vmatmul.f32.gmra.mxu0 %v767
      %v2155 = vpop.f32.mrf.mxu0
      %v2156 = vadd.f32 0.0, %v2155
      %2157 = vdwg.mxu0
      %2158 = vmatpush.msra.mxu0 0.0
      %2159 = vmatpush.msra.mxu0 0.0
      %2160 = vmatpush.msra.mxu0 0.0
      %2161 = vmatpush.msra.mxu0 0.0
      %2162 = vmatpush.msra.mxu0 0.0
      %2163 = vmatpush.msra.mxu0 0.0
      %2164 = vmatpush.msra.mxu0 0.0
      %2165 = vmatpush.msra.mxu0 0.0
      %2166 = vmatpush.msra.mxu0 0.0
      %2167 = vmatpush.msra.mxu0 0.0
      %2168 = vmatpush.msra.mxu0 0.0
      %2169 = vmatpush.msra.mxu0 0.0
      %2170 = vmatpush.msra.mxu0 0.0
      %2171 = vmatpush.msra.mxu0 0.0
      %2172 = vmatpush.msra.mxu0 0.0
      %2173 = vmatpush.msra.mxu0 %v2112
      %2174 = vmatmul.f32.gmra.mxu0 %v767
      %v2175 = vpop.f32.mrf.mxu0
      %v2176 = vadd.f32 0.0, %v2175
      %2177 = vdwg.mxu0
      %v2178 = vadd.f32 %v2104, %v2136
      %v2179 = vadd.f32 %v2105, %v2156
      %v2180 = vadd.f32 %v2106, %v2176
      %2181 = vrot.lane.b32.xlu0 %v1600, 90
      %v2182 = vpop.permute.xlu0 %2181
      %2183 = vrot.lane.b32.xlu0 %v1601, 90
      %v2184 = vpop.permute.xlu0 %2183
      %2185 = vrot.lane.b32.xlu0 %v1602, 90
      %v2186 = vpop.permute.xlu0 %2185
      %v2187 = vsel %vm838, %v2182, %v2184
      %v2188 = vsel %vm838, %v2184, %v2186
      %2192 = vmatpush.msra.mxu0 0.0
      %2193 = vmatpush.msra.mxu0 0.0
      %2194 = vmatpush.msra.mxu0 0.0
      %2195 = vmatpush.msra.mxu0 0.0
      %2196 = vmatpush.msra.mxu0 0.0
      %2197 = vmatpush.msra.mxu0 0.0
      %2198 = vmatpush.msra.mxu0 0.0
      %2199 = vmatpush.msra.mxu0 0.0
      %2200 = vmatpush.msra.mxu0 0.0
      %2201 = vmatpush.msra.mxu0 0.0
      %2202 = vmatpush.msra.mxu0 0.0
      %2203 = vmatpush.msra.mxu0 0.0
      %2204 = vmatpush.msra.mxu0 0.0
      %2205 = vmatpush.msra.mxu0 0.0
      %2206 = vmatpush.msra.mxu0 0.0
      %2207 = vmatpush.msra.mxu0 %v2187
      %2208 = vmatmul.f32.gmra.mxu0 %v845
      %v2209 = vpop.f32.mrf.mxu0
      %v2210 = vadd.f32 0.0, %v2209
      %2211 = vdwg.mxu0
      %2212 = vmatpush.msra.mxu0 0.0
      %2213 = vmatpush.msra.mxu0 0.0
      %2214 = vmatpush.msra.mxu0 0.0
      %2215 = vmatpush.msra.mxu0 0.0
      %2216 = vmatpush.msra.mxu0 0.0
      %2217 = vmatpush.msra.mxu0 0.0
      %2218 = vmatpush.msra.mxu0 0.0
      %2219 = vmatpush.msra.mxu0 0.0
      %2220 = vmatpush.msra.mxu0 0.0
      %2221 = vmatpush.msra.mxu0 0.0
      %2222 = vmatpush.msra.mxu0 0.0
      %2223 = vmatpush.msra.mxu0 0.0
      %2224 = vmatpush.msra.mxu0 0.0
      %2225 = vmatpush.msra.mxu0 0.0
      %2226 = vmatpush.msra.mxu0 0.0
      %2227 = vmatpush.msra.mxu0 %v2188
      %2228 = vmatmul.f32.gmra.mxu0 %v845
      %v2229 = vpop.f32.mrf.mxu0
      %v2230 = vadd.f32 0.0, %v2229
      %2231 = vdwg.mxu0
      %2232 = vmatpush.msra.mxu0 0.0
      %2233 = vmatpush.msra.mxu0 0.0
      %2234 = vmatpush.msra.mxu0 0.0
      %2235 = vmatpush.msra.mxu0 0.0
      %2236 = vmatpush.msra.mxu0 0.0
      %2237 = vmatpush.msra.mxu0 0.0
      %2238 = vmatpush.msra.mxu0 0.0
      %2239 = vmatpush.msra.mxu0 0.0
      %2240 = vmatpush.msra.mxu0 0.0
      %2241 = vmatpush.msra.mxu0 0.0
      %2242 = vmatpush.msra.mxu0 0.0
      %2243 = vmatpush.msra.mxu0 0.0
      %2244 = vmatpush.msra.mxu0 0.0
      %2245 = vmatpush.msra.mxu0 0.0
      %2246 = vmatpush.msra.mxu0 0.0
      %2247 = vmatpush.msra.mxu0 %v2186
      %2248 = vmatmul.f32.gmra.mxu0 %v845
      %v2249 = vpop.f32.mrf.mxu0
      %v2250 = vadd.f32 0.0, %v2249
      %2251 = vdwg.mxu0
      %v2252 = vadd.f32 %v2178, %v2210
      %v2253 = vadd.f32 %v2179, %v2230
      %v2254 = vadd.f32 %v2180, %v2250
      %v2257 = vrot.slane %v2253, 4
      %v2258 = vsel %vm913, %v2252, %v2257
      %s2260 = scalar_lea.vmem %s190, 24
      %2261 = vst [vmem:[%s2260] sm:$0xff] %v2258
      %2262 = vst.msk [vmem:[%s2260 + $0x8] sm:$0xf] %vm917, %v2254
      %s2263 = scalar_lea.vmem %s180, 3
      %v2264 = vld [vmem:[%s2263] ss:$4 sm:$0x7]
      %v2266 = vperm.slane %v2264, 0
      %v2267 = vperm.slane %v2264, 1
      %v2268 = vperm.slane %v2264, 2
      %v2272 = vmul.f32 %v2266, %v208
      %v2273 = vmul.f32 %v2267, %v209
      %v2274 = vmul.f32 %v2268, %v210
      %2278 = vrot.lane.b32.xlu0 %v2272, 127
      %v2279 = vpop.permute.xlu0 %2278
      %2280 = vrot.lane.b32.xlu0 %v2273, 127
      %v2281 = vpop.permute.xlu0 %2280
      %2282 = vrot.lane.b32.xlu0 %v2274, 127
      %v2283 = vpop.permute.xlu0 %2282
      %v2284 = vsel %vm231, %v2279, %v2281
      %v2285 = vsel %vm231, %v2281, %v2283
      %2289 = vmatpush.msra.mxu0 0.0
      %2290 = vmatpush.msra.mxu0 0.0
      %2291 = vmatpush.msra.mxu0 0.0
      %2292 = vmatpush.msra.mxu0 0.0
      %2293 = vmatpush.msra.mxu0 0.0
      %2294 = vmatpush.msra.mxu0 0.0
      %2295 = vmatpush.msra.mxu0 0.0
      %2296 = vmatpush.msra.mxu0 0.0
      %2297 = vmatpush.msra.mxu0 0.0
      %2298 = vmatpush.msra.mxu0 0.0
      %2299 = vmatpush.msra.mxu0 0.0
      %2300 = vmatpush.msra.mxu0 0.0
      %2301 = vmatpush.msra.mxu0 0.0
      %2302 = vmatpush.msra.mxu0 0.0
      %2303 = vmatpush.msra.mxu0 0.0
      %2304 = vmatpush.msra.mxu0 %v2284
      %2305 = vmatmul.f32.gmra.mxu0 %v239
      %v2306 = vpop.f32.mrf.mxu0
      %v2307 = vadd.f32 0.0, %v2306
      %2308 = vdwg.mxu0
      %2309 = vmatpush.msra.mxu0 0.0
      %2310 = vmatpush.msra.mxu0 0.0
      %2311 = vmatpush.msra.mxu0 0.0
      %2312 = vmatpush.msra.mxu0 0.0
      %2313 = vmatpush.msra.mxu0 0.0
      %2314 = vmatpush.msra.mxu0 0.0
      %2315 = vmatpush.msra.mxu0 0.0
      %2316 = vmatpush.msra.mxu0 0.0
      %2317 = vmatpush.msra.mxu0 0.0
      %2318 = vmatpush.msra.mxu0 0.0
      %2319 = vmatpush.msra.mxu0 0.0
      %2320 = vmatpush.msra.mxu0 0.0
      %2321 = vmatpush.msra.mxu0 0.0
      %2322 = vmatpush.msra.mxu0 0.0
      %2323 = vmatpush.msra.mxu0 0.0
      %2324 = vmatpush.msra.mxu0 %v2285
      %2325 = vmatmul.f32.gmra.mxu0 %v239
      %v2326 = vpop.f32.mrf.mxu0
      %v2327 = vadd.f32 0.0, %v2326
      %2328 = vdwg.mxu0
      %2329 = vmatpush.msra.mxu0 0.0
      %2330 = vmatpush.msra.mxu0 0.0
      %2331 = vmatpush.msra.mxu0 0.0
      %2332 = vmatpush.msra.mxu0 0.0
      %2333 = vmatpush.msra.mxu0 0.0
      %2334 = vmatpush.msra.mxu0 0.0
      %2335 = vmatpush.msra.mxu0 0.0
      %2336 = vmatpush.msra.mxu0 0.0
      %2337 = vmatpush.msra.mxu0 0.0
      %2338 = vmatpush.msra.mxu0 0.0
      %2339 = vmatpush.msra.mxu0 0.0
      %2340 = vmatpush.msra.mxu0 0.0
      %2341 = vmatpush.msra.mxu0 0.0
      %2342 = vmatpush.msra.mxu0 0.0
      %2343 = vmatpush.msra.mxu0 0.0
      %2344 = vmatpush.msra.mxu0 %v2283
      %2345 = vmatmul.f32.gmra.mxu0 %v239
      %v2346 = vpop.f32.mrf.mxu0
      %v2347 = vadd.f32 0.0, %v2346
      %2348 = vdwg.mxu0
      %2349 = vmatpush.msra.mxu0 0.0
      %2350 = vmatpush.msra.mxu0 0.0
      %2351 = vmatpush.msra.mxu0 0.0
      %2352 = vmatpush.msra.mxu0 0.0
      %2353 = vmatpush.msra.mxu0 0.0
      %2354 = vmatpush.msra.mxu0 0.0
      %2355 = vmatpush.msra.mxu0 0.0
      %2356 = vmatpush.msra.mxu0 0.0
      %2357 = vmatpush.msra.mxu0 0.0
      %2358 = vmatpush.msra.mxu0 0.0
      %2359 = vmatpush.msra.mxu0 0.0
      %2360 = vmatpush.msra.mxu0 0.0
      %2361 = vmatpush.msra.mxu0 0.0
      %2362 = vmatpush.msra.mxu0 0.0
      %2363 = vmatpush.msra.mxu0 0.0
      %2364 = vmatpush.msra.mxu0 %v2272
      %2365 = vmatmul.f32.gmra.mxu0 %v302
      %v2366 = vpop.f32.mrf.mxu0
      %v2367 = vadd.f32 %v2307, %v2366
      %2368 = vdwg.mxu0
      %2369 = vmatpush.msra.mxu0 0.0
      %2370 = vmatpush.msra.mxu0 0.0
      %2371 = vmatpush.msra.mxu0 0.0
      %2372 = vmatpush.msra.mxu0 0.0
      %2373 = vmatpush.msra.mxu0 0.0
      %2374 = vmatpush.msra.mxu0 0.0
      %2375 = vmatpush.msra.mxu0 0.0
      %2376 = vmatpush.msra.mxu0 0.0
      %2377 = vmatpush.msra.mxu0 0.0
      %2378 = vmatpush.msra.mxu0 0.0
      %2379 = vmatpush.msra.mxu0 0.0
      %2380 = vmatpush.msra.mxu0 0.0
      %2381 = vmatpush.msra.mxu0 0.0
      %2382 = vmatpush.msra.mxu0 0.0
      %2383 = vmatpush.msra.mxu0 0.0
      %2384 = vmatpush.msra.mxu0 %v2273
      %2385 = vmatmul.f32.gmra.mxu0 %v302
      %v2386 = vpop.f32.mrf.mxu0
      %v2387 = vadd.f32 %v2327, %v2386
      %2388 = vdwg.mxu0
      %2389 = vmatpush.msra.mxu0 0.0
      %2390 = vmatpush.msra.mxu0 0.0
      %2391 = vmatpush.msra.mxu0 0.0
      %2392 = vmatpush.msra.mxu0 0.0
      %2393 = vmatpush.msra.mxu0 0.0
      %2394 = vmatpush.msra.mxu0 0.0
      %2395 = vmatpush.msra.mxu0 0.0
      %2396 = vmatpush.msra.mxu0 0.0
      %2397 = vmatpush.msra.mxu0 0.0
      %2398 = vmatpush.msra.mxu0 0.0
      %2399 = vmatpush.msra.mxu0 0.0
      %2400 = vmatpush.msra.mxu0 0.0
      %2401 = vmatpush.msra.mxu0 0.0
      %2402 = vmatpush.msra.mxu0 0.0
      %2403 = vmatpush.msra.mxu0 0.0
      %2404 = vmatpush.msra.mxu0 %v2274
      %2405 = vmatmul.f32.gmra.mxu0 %v302
      %v2406 = vpop.f32.mrf.mxu0
      %v2407 = vadd.f32 %v2347, %v2406
      %2408 = vdwg.mxu0
      %2409 = vrot.lane.b32.xlu0 %v2272, 126
      %v2410 = vpop.permute.xlu0 %2409
      %2411 = vrot.lane.b32.xlu0 %v2273, 126
      %v2412 = vpop.permute.xlu0 %2411
      %2413 = vrot.lane.b32.xlu0 %v2274, 126
      %v2414 = vpop.permute.xlu0 %2413
      %v2415 = vsel %vm370, %v2410, %v2412
      %v2416 = vsel %vm370, %v2412, %v2414
      %2420 = vmatpush.msra.mxu0 0.0
      %2421 = vmatpush.msra.mxu0 0.0
      %2422 = vmatpush.msra.mxu0 0.0
      %2423 = vmatpush.msra.mxu0 0.0
      %2424 = vmatpush.msra.mxu0 0.0
      %2425 = vmatpush.msra.mxu0 0.0
      %2426 = vmatpush.msra.mxu0 0.0
      %2427 = vmatpush.msra.mxu0 0.0
      %2428 = vmatpush.msra.mxu0 0.0
      %2429 = vmatpush.msra.mxu0 0.0
      %2430 = vmatpush.msra.mxu0 0.0
      %2431 = vmatpush.msra.mxu0 0.0
      %2432 = vmatpush.msra.mxu0 0.0
      %2433 = vmatpush.msra.mxu0 0.0
      %2434 = vmatpush.msra.mxu0 0.0
      %2435 = vmatpush.msra.mxu0 %v2415
      %2436 = vmatmul.f32.gmra.mxu0 %v377
      %v2437 = vpop.f32.mrf.mxu0
      %v2438 = vadd.f32 0.0, %v2437
      %2439 = vdwg.mxu0
      %2440 = vmatpush.msra.mxu0 0.0
      %2441 = vmatpush.msra.mxu0 0.0
      %2442 = vmatpush.msra.mxu0 0.0
      %2443 = vmatpush.msra.mxu0 0.0
      %2444 = vmatpush.msra.mxu0 0.0
      %2445 = vmatpush.msra.mxu0 0.0
      %2446 = vmatpush.msra.mxu0 0.0
      %2447 = vmatpush.msra.mxu0 0.0
      %2448 = vmatpush.msra.mxu0 0.0
      %2449 = vmatpush.msra.mxu0 0.0
      %2450 = vmatpush.msra.mxu0 0.0
      %2451 = vmatpush.msra.mxu0 0.0
      %2452 = vmatpush.msra.mxu0 0.0
      %2453 = vmatpush.msra.mxu0 0.0
      %2454 = vmatpush.msra.mxu0 0.0
      %2455 = vmatpush.msra.mxu0 %v2416
      %2456 = vmatmul.f32.gmra.mxu0 %v377
      %v2457 = vpop.f32.mrf.mxu0
      %v2458 = vadd.f32 0.0, %v2457
      %2459 = vdwg.mxu0
      %2460 = vmatpush.msra.mxu0 0.0
      %2461 = vmatpush.msra.mxu0 0.0
      %2462 = vmatpush.msra.mxu0 0.0
      %2463 = vmatpush.msra.mxu0 0.0
      %2464 = vmatpush.msra.mxu0 0.0
      %2465 = vmatpush.msra.mxu0 0.0
      %2466 = vmatpush.msra.mxu0 0.0
      %2467 = vmatpush.msra.mxu0 0.0
      %2468 = vmatpush.msra.mxu0 0.0
      %2469 = vmatpush.msra.mxu0 0.0
      %2470 = vmatpush.msra.mxu0 0.0
      %2471 = vmatpush.msra.mxu0 0.0
      %2472 = vmatpush.msra.mxu0 0.0
      %2473 = vmatpush.msra.mxu0 0.0
      %2474 = vmatpush.msra.mxu0 0.0
      %2475 = vmatpush.msra.mxu0 %v2414
      %2476 = vmatmul.f32.gmra.mxu0 %v377
      %v2477 = vpop.f32.mrf.mxu0
      %v2478 = vadd.f32 0.0, %v2477
      %2479 = vdwg.mxu0
      %v2480 = vadd.f32 %v2367, %v2438
      %v2481 = vadd.f32 %v2387, %v2458
      %v2482 = vadd.f32 %v2407, %v2478
      %2483 = vrot.lane.b32.xlu0 %v2272, 110
      %v2484 = vpop.permute.xlu0 %2483
      %2485 = vrot.lane.b32.xlu0 %v2273, 110
      %v2486 = vpop.permute.xlu0 %2485
      %2487 = vrot.lane.b32.xlu0 %v2274, 110
      %v2488 = vpop.permute.xlu0 %2487
      %v2489 = vsel %vm448, %v2484, %v2486
      %v2490 = vsel %vm448, %v2486, %v2488
      %2494 = vmatpush.msra.mxu0 0.0
      %2495 = vmatpush.msra.mxu0 0.0
      %2496 = vmatpush.msra.mxu0 0.0
      %2497 = vmatpush.msra.mxu0 0.0
      %2498 = vmatpush.msra.mxu0 0.0
      %2499 = vmatpush.msra.mxu0 0.0
      %2500 = vmatpush.msra.mxu0 0.0
      %2501 = vmatpush.msra.mxu0 0.0
      %2502 = vmatpush.msra.mxu0 0.0
      %2503 = vmatpush.msra.mxu0 0.0
      %2504 = vmatpush.msra.mxu0 0.0
      %2505 = vmatpush.msra.mxu0 0.0
      %2506 = vmatpush.msra.mxu0 0.0
      %2507 = vmatpush.msra.mxu0 0.0
      %2508 = vmatpush.msra.mxu0 0.0
      %2509 = vmatpush.msra.mxu0 %v2489
      %2510 = vmatmul.f32.gmra.mxu0 %v455
      %v2511 = vpop.f32.mrf.mxu0
      %v2512 = vadd.f32 0.0, %v2511
      %2513 = vdwg.mxu0
      %2514 = vmatpush.msra.mxu0 0.0
      %2515 = vmatpush.msra.mxu0 0.0
      %2516 = vmatpush.msra.mxu0 0.0
      %2517 = vmatpush.msra.mxu0 0.0
      %2518 = vmatpush.msra.mxu0 0.0
      %2519 = vmatpush.msra.mxu0 0.0
      %2520 = vmatpush.msra.mxu0 0.0
      %2521 = vmatpush.msra.mxu0 0.0
      %2522 = vmatpush.msra.mxu0 0.0
      %2523 = vmatpush.msra.mxu0 0.0
      %2524 = vmatpush.msra.mxu0 0.0
      %2525 = vmatpush.msra.mxu0 0.0
      %2526 = vmatpush.msra.mxu0 0.0
      %2527 = vmatpush.msra.mxu0 0.0
      %2528 = vmatpush.msra.mxu0 0.0
      %2529 = vmatpush.msra.mxu0 %v2490
      %2530 = vmatmul.f32.gmra.mxu0 %v455
      %v2531 = vpop.f32.mrf.mxu0
      %v2532 = vadd.f32 0.0, %v2531
      %2533 = vdwg.mxu0
      %2534 = vmatpush.msra.mxu0 0.0
      %2535 = vmatpush.msra.mxu0 0.0
      %2536 = vmatpush.msra.mxu0 0.0
      %2537 = vmatpush.msra.mxu0 0.0
      %2538 = vmatpush.msra.mxu0 0.0
      %2539 = vmatpush.msra.mxu0 0.0
      %2540 = vmatpush.msra.mxu0 0.0
      %2541 = vmatpush.msra.mxu0 0.0
      %2542 = vmatpush.msra.mxu0 0.0
      %2543 = vmatpush.msra.mxu0 0.0
      %2544 = vmatpush.msra.mxu0 0.0
      %2545 = vmatpush.msra.mxu0 0.0
      %2546 = vmatpush.msra.mxu0 0.0
      %2547 = vmatpush.msra.mxu0 0.0
      %2548 = vmatpush.msra.mxu0 0.0
      %2549 = vmatpush.msra.mxu0 %v2488
      %2550 = vmatmul.f32.gmra.mxu0 %v455
      %v2551 = vpop.f32.mrf.mxu0
      %v2552 = vadd.f32 0.0, %v2551
      %2553 = vdwg.mxu0
      %v2554 = vadd.f32 %v2480, %v2512
      %v2555 = vadd.f32 %v2481, %v2532
      %v2556 = vadd.f32 %v2482, %v2552
      %2557 = vrot.lane.b32.xlu0 %v2272, 109
      %v2558 = vpop.permute.xlu0 %2557
      %2559 = vrot.lane.b32.xlu0 %v2273, 109
      %v2560 = vpop.permute.xlu0 %2559
      %2561 = vrot.lane.b32.xlu0 %v2274, 109
      %v2562 = vpop.permute.xlu0 %2561
      %v2563 = vsel %vm526, %v2558, %v2560
      %v2564 = vsel %vm526, %v2560, %v2562
      %2568 = vmatpush.msra.mxu0 0.0
      %2569 = vmatpush.msra.mxu0 0.0
      %2570 = vmatpush.msra.mxu0 0.0
      %2571 = vmatpush.msra.mxu0 0.0
      %2572 = vmatpush.msra.mxu0 0.0
      %2573 = vmatpush.msra.mxu0 0.0
      %2574 = vmatpush.msra.mxu0 0.0
      %2575 = vmatpush.msra.mxu0 0.0
      %2576 = vmatpush.msra.mxu0 0.0
      %2577 = vmatpush.msra.mxu0 0.0
      %2578 = vmatpush.msra.mxu0 0.0
      %2579 = vmatpush.msra.mxu0 0.0
      %2580 = vmatpush.msra.mxu0 0.0
      %2581 = vmatpush.msra.mxu0 0.0
      %2582 = vmatpush.msra.mxu0 0.0
      %2583 = vmatpush.msra.mxu0 %v2563
      %2584 = vmatmul.f32.gmra.mxu0 %v533
      %v2585 = vpop.f32.mrf.mxu0
      %v2586 = vadd.f32 0.0, %v2585
      %2587 = vdwg.mxu0
      %2588 = vmatpush.msra.mxu0 0.0
      %2589 = vmatpush.msra.mxu0 0.0
      %2590 = vmatpush.msra.mxu0 0.0
      %2591 = vmatpush.msra.mxu0 0.0
      %2592 = vmatpush.msra.mxu0 0.0
      %2593 = vmatpush.msra.mxu0 0.0
      %2594 = vmatpush.msra.mxu0 0.0
      %2595 = vmatpush.msra.mxu0 0.0
      %2596 = vmatpush.msra.mxu0 0.0
      %2597 = vmatpush.msra.mxu0 0.0
      %2598 = vmatpush.msra.mxu0 0.0
      %2599 = vmatpush.msra.mxu0 0.0
      %2600 = vmatpush.msra.mxu0 0.0
      %2601 = vmatpush.msra.mxu0 0.0
      %2602 = vmatpush.msra.mxu0 0.0
      %2603 = vmatpush.msra.mxu0 %v2564
      %2604 = vmatmul.f32.gmra.mxu0 %v533
      %v2605 = vpop.f32.mrf.mxu0
      %v2606 = vadd.f32 0.0, %v2605
      %2607 = vdwg.mxu0
      %2608 = vmatpush.msra.mxu0 0.0
      %2609 = vmatpush.msra.mxu0 0.0
      %2610 = vmatpush.msra.mxu0 0.0
      %2611 = vmatpush.msra.mxu0 0.0
      %2612 = vmatpush.msra.mxu0 0.0
      %2613 = vmatpush.msra.mxu0 0.0
      %2614 = vmatpush.msra.mxu0 0.0
      %2615 = vmatpush.msra.mxu0 0.0
      %2616 = vmatpush.msra.mxu0 0.0
      %2617 = vmatpush.msra.mxu0 0.0
      %2618 = vmatpush.msra.mxu0 0.0
      %2619 = vmatpush.msra.mxu0 0.0
      %2620 = vmatpush.msra.mxu0 0.0
      %2621 = vmatpush.msra.mxu0 0.0
      %2622 = vmatpush.msra.mxu0 0.0
      %2623 = vmatpush.msra.mxu0 %v2562
      %2624 = vmatmul.f32.gmra.mxu0 %v533
      %v2625 = vpop.f32.mrf.mxu0
      %v2626 = vadd.f32 0.0, %v2625
      %2627 = vdwg.mxu0
      %v2628 = vadd.f32 %v2554, %v2586
      %v2629 = vadd.f32 %v2555, %v2606
      %v2630 = vadd.f32 %v2556, %v2626
      %2631 = vrot.lane.b32.xlu0 %v2272, 108
      %v2632 = vpop.permute.xlu0 %2631
      %2633 = vrot.lane.b32.xlu0 %v2273, 108
      %v2634 = vpop.permute.xlu0 %2633
      %2635 = vrot.lane.b32.xlu0 %v2274, 108
      %v2636 = vpop.permute.xlu0 %2635
      %v2637 = vsel %vm604, %v2632, %v2634
      %v2638 = vsel %vm604, %v2634, %v2636
      %2642 = vmatpush.msra.mxu0 0.0
      %2643 = vmatpush.msra.mxu0 0.0
      %2644 = vmatpush.msra.mxu0 0.0
      %2645 = vmatpush.msra.mxu0 0.0
      %2646 = vmatpush.msra.mxu0 0.0
      %2647 = vmatpush.msra.mxu0 0.0
      %2648 = vmatpush.msra.mxu0 0.0
      %2649 = vmatpush.msra.mxu0 0.0
      %2650 = vmatpush.msra.mxu0 0.0
      %2651 = vmatpush.msra.mxu0 0.0
      %2652 = vmatpush.msra.mxu0 0.0
      %2653 = vmatpush.msra.mxu0 0.0
      %2654 = vmatpush.msra.mxu0 0.0
      %2655 = vmatpush.msra.mxu0 0.0
      %2656 = vmatpush.msra.mxu0 0.0
      %2657 = vmatpush.msra.mxu0 %v2637
      %2658 = vmatmul.f32.gmra.mxu0 %v611
      %v2659 = vpop.f32.mrf.mxu0
      %v2660 = vadd.f32 0.0, %v2659
      %2661 = vdwg.mxu0
      %2662 = vmatpush.msra.mxu0 0.0
      %2663 = vmatpush.msra.mxu0 0.0
      %2664 = vmatpush.msra.mxu0 0.0
      %2665 = vmatpush.msra.mxu0 0.0
      %2666 = vmatpush.msra.mxu0 0.0
      %2667 = vmatpush.msra.mxu0 0.0
      %2668 = vmatpush.msra.mxu0 0.0
      %2669 = vmatpush.msra.mxu0 0.0
      %2670 = vmatpush.msra.mxu0 0.0
      %2671 = vmatpush.msra.mxu0 0.0
      %2672 = vmatpush.msra.mxu0 0.0
      %2673 = vmatpush.msra.mxu0 0.0
      %2674 = vmatpush.msra.mxu0 0.0
      %2675 = vmatpush.msra.mxu0 0.0
      %2676 = vmatpush.msra.mxu0 0.0
      %2677 = vmatpush.msra.mxu0 %v2638
      %2678 = vmatmul.f32.gmra.mxu0 %v611
      %v2679 = vpop.f32.mrf.mxu0
      %v2680 = vadd.f32 0.0, %v2679
      %2681 = vdwg.mxu0
      %2682 = vmatpush.msra.mxu0 0.0
      %2683 = vmatpush.msra.mxu0 0.0
      %2684 = vmatpush.msra.mxu0 0.0
      %2685 = vmatpush.msra.mxu0 0.0
      %2686 = vmatpush.msra.mxu0 0.0
      %2687 = vmatpush.msra.mxu0 0.0
      %2688 = vmatpush.msra.mxu0 0.0
      %2689 = vmatpush.msra.mxu0 0.0
      %2690 = vmatpush.msra.mxu0 0.0
      %2691 = vmatpush.msra.mxu0 0.0
      %2692 = vmatpush.msra.mxu0 0.0
      %2693 = vmatpush.msra.mxu0 0.0
      %2694 = vmatpush.msra.mxu0 0.0
      %2695 = vmatpush.msra.mxu0 0.0
      %2696 = vmatpush.msra.mxu0 0.0
      %2697 = vmatpush.msra.mxu0 %v2636
      %2698 = vmatmul.f32.gmra.mxu0 %v611
      %v2699 = vpop.f32.mrf.mxu0
      %v2700 = vadd.f32 0.0, %v2699
      %2701 = vdwg.mxu0
      %v2702 = vadd.f32 %v2628, %v2660
      %v2703 = vadd.f32 %v2629, %v2680
      %v2704 = vadd.f32 %v2630, %v2700
      %2705 = vrot.lane.b32.xlu0 %v2272, 92
      %v2706 = vpop.permute.xlu0 %2705
      %2707 = vrot.lane.b32.xlu0 %v2273, 92
      %v2708 = vpop.permute.xlu0 %2707
      %2709 = vrot.lane.b32.xlu0 %v2274, 92
      %v2710 = vpop.permute.xlu0 %2709
      %v2711 = vsel %vm682, %v2706, %v2708
      %v2712 = vsel %vm682, %v2708, %v2710
      %2716 = vmatpush.msra.mxu0 0.0
      %2717 = vmatpush.msra.mxu0 0.0
      %2718 = vmatpush.msra.mxu0 0.0
      %2719 = vmatpush.msra.mxu0 0.0
      %2720 = vmatpush.msra.mxu0 0.0
      %2721 = vmatpush.msra.mxu0 0.0
      %2722 = vmatpush.msra.mxu0 0.0
      %2723 = vmatpush.msra.mxu0 0.0
      %2724 = vmatpush.msra.mxu0 0.0
      %2725 = vmatpush.msra.mxu0 0.0
      %2726 = vmatpush.msra.mxu0 0.0
      %2727 = vmatpush.msra.mxu0 0.0
      %2728 = vmatpush.msra.mxu0 0.0
      %2729 = vmatpush.msra.mxu0 0.0
      %2730 = vmatpush.msra.mxu0 0.0
      %2731 = vmatpush.msra.mxu0 %v2711
      %2732 = vmatmul.f32.gmra.mxu0 %v689
      %v2733 = vpop.f32.mrf.mxu0
      %v2734 = vadd.f32 0.0, %v2733
      %2735 = vdwg.mxu0
      %2736 = vmatpush.msra.mxu0 0.0
      %2737 = vmatpush.msra.mxu0 0.0
      %2738 = vmatpush.msra.mxu0 0.0
      %2739 = vmatpush.msra.mxu0 0.0
      %2740 = vmatpush.msra.mxu0 0.0
      %2741 = vmatpush.msra.mxu0 0.0
      %2742 = vmatpush.msra.mxu0 0.0
      %2743 = vmatpush.msra.mxu0 0.0
      %2744 = vmatpush.msra.mxu0 0.0
      %2745 = vmatpush.msra.mxu0 0.0
      %2746 = vmatpush.msra.mxu0 0.0
      %2747 = vmatpush.msra.mxu0 0.0
      %2748 = vmatpush.msra.mxu0 0.0
      %2749 = vmatpush.msra.mxu0 0.0
      %2750 = vmatpush.msra.mxu0 0.0
      %2751 = vmatpush.msra.mxu0 %v2712
      %2752 = vmatmul.f32.gmra.mxu0 %v689
      %v2753 = vpop.f32.mrf.mxu0
      %v2754 = vadd.f32 0.0, %v2753
      %2755 = vdwg.mxu0
      %2756 = vmatpush.msra.mxu0 0.0
      %2757 = vmatpush.msra.mxu0 0.0
      %2758 = vmatpush.msra.mxu0 0.0
      %2759 = vmatpush.msra.mxu0 0.0
      %2760 = vmatpush.msra.mxu0 0.0
      %2761 = vmatpush.msra.mxu0 0.0
      %2762 = vmatpush.msra.mxu0 0.0
      %2763 = vmatpush.msra.mxu0 0.0
      %2764 = vmatpush.msra.mxu0 0.0
      %2765 = vmatpush.msra.mxu0 0.0
      %2766 = vmatpush.msra.mxu0 0.0
      %2767 = vmatpush.msra.mxu0 0.0
      %2768 = vmatpush.msra.mxu0 0.0
      %2769 = vmatpush.msra.mxu0 0.0
      %2770 = vmatpush.msra.mxu0 0.0
      %2771 = vmatpush.msra.mxu0 %v2710
      %2772 = vmatmul.f32.gmra.mxu0 %v689
      %v2773 = vpop.f32.mrf.mxu0
      %v2774 = vadd.f32 0.0, %v2773
      %2775 = vdwg.mxu0
      %v2776 = vadd.f32 %v2702, %v2734
      %v2777 = vadd.f32 %v2703, %v2754
      %v2778 = vadd.f32 %v2704, %v2774
      %2779 = vrot.lane.b32.xlu0 %v2272, 91
      %v2780 = vpop.permute.xlu0 %2779
      %2781 = vrot.lane.b32.xlu0 %v2273, 91
      %v2782 = vpop.permute.xlu0 %2781
      %2783 = vrot.lane.b32.xlu0 %v2274, 91
      %v2784 = vpop.permute.xlu0 %2783
      %v2785 = vsel %vm760, %v2780, %v2782
      %v2786 = vsel %vm760, %v2782, %v2784
      %2790 = vmatpush.msra.mxu0 0.0
      %2791 = vmatpush.msra.mxu0 0.0
      %2792 = vmatpush.msra.mxu0 0.0
      %2793 = vmatpush.msra.mxu0 0.0
      %2794 = vmatpush.msra.mxu0 0.0
      %2795 = vmatpush.msra.mxu0 0.0
      %2796 = vmatpush.msra.mxu0 0.0
      %2797 = vmatpush.msra.mxu0 0.0
      %2798 = vmatpush.msra.mxu0 0.0
      %2799 = vmatpush.msra.mxu0 0.0
      %2800 = vmatpush.msra.mxu0 0.0
      %2801 = vmatpush.msra.mxu0 0.0
      %2802 = vmatpush.msra.mxu0 0.0
      %2803 = vmatpush.msra.mxu0 0.0
      %2804 = vmatpush.msra.mxu0 0.0
      %2805 = vmatpush.msra.mxu0 %v2785
      %2806 = vmatmul.f32.gmra.mxu0 %v767
      %v2807 = vpop.f32.mrf.mxu0
      %v2808 = vadd.f32 0.0, %v2807
      %2809 = vdwg.mxu0
      %2810 = vmatpush.msra.mxu0 0.0
      %2811 = vmatpush.msra.mxu0 0.0
      %2812 = vmatpush.msra.mxu0 0.0
      %2813 = vmatpush.msra.mxu0 0.0
      %2814 = vmatpush.msra.mxu0 0.0
      %2815 = vmatpush.msra.mxu0 0.0
      %2816 = vmatpush.msra.mxu0 0.0
      %2817 = vmatpush.msra.mxu0 0.0
      %2818 = vmatpush.msra.mxu0 0.0
      %2819 = vmatpush.msra.mxu0 0.0
      %2820 = vmatpush.msra.mxu0 0.0
      %2821 = vmatpush.msra.mxu0 0.0
      %2822 = vmatpush.msra.mxu0 0.0
      %2823 = vmatpush.msra.mxu0 0.0
      %2824 = vmatpush.msra.mxu0 0.0
      %2825 = vmatpush.msra.mxu0 %v2786
      %2826 = vmatmul.f32.gmra.mxu0 %v767
      %v2827 = vpop.f32.mrf.mxu0
      %v2828 = vadd.f32 0.0, %v2827
      %2829 = vdwg.mxu0
      %2830 = vmatpush.msra.mxu0 0.0
      %2831 = vmatpush.msra.mxu0 0.0
      %2832 = vmatpush.msra.mxu0 0.0
      %2833 = vmatpush.msra.mxu0 0.0
      %2834 = vmatpush.msra.mxu0 0.0
      %2835 = vmatpush.msra.mxu0 0.0
      %2836 = vmatpush.msra.mxu0 0.0
      %2837 = vmatpush.msra.mxu0 0.0
      %2838 = vmatpush.msra.mxu0 0.0
      %2839 = vmatpush.msra.mxu0 0.0
      %2840 = vmatpush.msra.mxu0 0.0
      %2841 = vmatpush.msra.mxu0 0.0
      %2842 = vmatpush.msra.mxu0 0.0
      %2843 = vmatpush.msra.mxu0 0.0
      %2844 = vmatpush.msra.mxu0 0.0
      %2845 = vmatpush.msra.mxu0 %v2784
      %2846 = vmatmul.f32.gmra.mxu0 %v767
      %v2847 = vpop.f32.mrf.mxu0
      %v2848 = vadd.f32 0.0, %v2847
      %2849 = vdwg.mxu0
      %v2850 = vadd.f32 %v2776, %v2808
      %v2851 = vadd.f32 %v2777, %v2828
      %v2852 = vadd.f32 %v2778, %v2848
      %2853 = vrot.lane.b32.xlu0 %v2272, 90
      %v2854 = vpop.permute.xlu0 %2853
      %2855 = vrot.lane.b32.xlu0 %v2273, 90
      %v2856 = vpop.permute.xlu0 %2855
      %2857 = vrot.lane.b32.xlu0 %v2274, 90
      %v2858 = vpop.permute.xlu0 %2857
      %v2859 = vsel %vm838, %v2854, %v2856
      %v2860 = vsel %vm838, %v2856, %v2858
      %2864 = vmatpush.msra.mxu0 0.0
      %2865 = vmatpush.msra.mxu0 0.0
      %2866 = vmatpush.msra.mxu0 0.0
      %2867 = vmatpush.msra.mxu0 0.0
      %2868 = vmatpush.msra.mxu0 0.0
      %2869 = vmatpush.msra.mxu0 0.0
      %2870 = vmatpush.msra.mxu0 0.0
      %2871 = vmatpush.msra.mxu0 0.0
      %2872 = vmatpush.msra.mxu0 0.0
      %2873 = vmatpush.msra.mxu0 0.0
      %2874 = vmatpush.msra.mxu0 0.0
      %2875 = vmatpush.msra.mxu0 0.0
      %2876 = vmatpush.msra.mxu0 0.0
      %2877 = vmatpush.msra.mxu0 0.0
      %2878 = vmatpush.msra.mxu0 0.0
      %2879 = vmatpush.msra.mxu0 %v2859
      %2880 = vmatmul.f32.gmra.mxu0 %v845
      %v2881 = vpop.f32.mrf.mxu0
      %v2882 = vadd.f32 0.0, %v2881
      %2883 = vdwg.mxu0
      %2884 = vmatpush.msra.mxu0 0.0
      %2885 = vmatpush.msra.mxu0 0.0
      %2886 = vmatpush.msra.mxu0 0.0
      %2887 = vmatpush.msra.mxu0 0.0
      %2888 = vmatpush.msra.mxu0 0.0
      %2889 = vmatpush.msra.mxu0 0.0
      %2890 = vmatpush.msra.mxu0 0.0
      %2891 = vmatpush.msra.mxu0 0.0
      %2892 = vmatpush.msra.mxu0 0.0
      %2893 = vmatpush.msra.mxu0 0.0
      %2894 = vmatpush.msra.mxu0 0.0
      %2895 = vmatpush.msra.mxu0 0.0
      %2896 = vmatpush.msra.mxu0 0.0
      %2897 = vmatpush.msra.mxu0 0.0
      %2898 = vmatpush.msra.mxu0 0.0
      %2899 = vmatpush.msra.mxu0 %v2860
      %2900 = vmatmul.f32.gmra.mxu0 %v845
      %v2901 = vpop.f32.mrf.mxu0
      %v2902 = vadd.f32 0.0, %v2901
      %2903 = vdwg.mxu0
      %2904 = vmatpush.msra.mxu0 0.0
      %2905 = vmatpush.msra.mxu0 0.0
      %2906 = vmatpush.msra.mxu0 0.0
      %2907 = vmatpush.msra.mxu0 0.0
      %2908 = vmatpush.msra.mxu0 0.0
      %2909 = vmatpush.msra.mxu0 0.0
      %2910 = vmatpush.msra.mxu0 0.0
      %2911 = vmatpush.msra.mxu0 0.0
      %2912 = vmatpush.msra.mxu0 0.0
      %2913 = vmatpush.msra.mxu0 0.0
      %2914 = vmatpush.msra.mxu0 0.0
      %2915 = vmatpush.msra.mxu0 0.0
      %2916 = vmatpush.msra.mxu0 0.0
      %2917 = vmatpush.msra.mxu0 0.0
      %2918 = vmatpush.msra.mxu0 0.0
      %2919 = vmatpush.msra.mxu0 %v2858
      %2920 = vmatmul.f32.gmra.mxu0 %v845
      %v2921 = vpop.f32.mrf.mxu0
      %v2922 = vadd.f32 0.0, %v2921
      %2923 = vdwg.mxu0
      %v2924 = vadd.f32 %v2850, %v2882
      %v2925 = vadd.f32 %v2851, %v2902
      %v2926 = vadd.f32 %v2852, %v2922
      %v2929 = vrot.slane %v2925, 4
      %v2930 = vsel %vm913, %v2924, %v2929
      %s2932 = scalar_lea.vmem %s190, 36
      %2933 = vst [vmem:[%s2932] sm:$0xff] %v2930
      %2934 = vst.msk [vmem:[%s2932 + $0x8] sm:$0xf] %vm917, %v2926
      %p2935 = scmp.lt.s32.totalorder %s14, 1
      %s2936 = scalar_select %p2935, %s14, 1
      %s2937 = smul.addr %s2936, 12
      %s2938 = smul.addr %s2937, 4
      %s2939 = scalar_lea.vmem %s3, %s2938
      // Predicated region
      $region33: #{ops_draw_forward.1} parent=31 // pred_check
        %p2940 = pneg %p105
      $region34: #{ops_draw_forward.1} parent=31 // pred_check_branch
        %2942 = sbr.rel (%p2940) target = $region36
      $region35: #{ops_draw_forward.1} parent=31 // pred_region
        _
      $region36: #{ops_draw_forward.1} parent=31 // pred_fallthru
        _
    $region32: #{ops_draw_forward.1} parent=5 // pred_fallthru
      _
    %p2943 = scmp.le.s32.totalorder 2, %s9
    // Predicated region
    $region37: #{ops_draw_forward.1} parent=5 // pred_check
      %p2944 = pneg %p2943
    $region38: #{ops_draw_forward.1} parent=5 // pred_check_branch
      %2946 = sbr.rel (%p2944) target = $region40
    $region39: #{ops_draw_forward.1} parent=5 // pred_region
      %s2947 = ssub.s32 %s9, 2
      // Predicated region
      $region41: #{ops_draw_forward.1} parent=39 // pred_check
        %p2948 = pneg %p111
      $region42: #{ops_draw_forward.1} parent=39 // pred_check_branch
        %2950 = sbr.rel (%p2948) target = $region44
      $region43: #{ops_draw_forward.1} parent=39 // pred_region
        %p2951 = scmp.lt.s32.totalorder %s15, 1
        %s2952 = scalar_select %p2951, %s15, 1
        %s2953 = smul.addr %s2952, 12
        %s2954 = smul.addr %s2953, 4
        %s2955 = scalar_lea.vmem %s3, %s2954
      $region44: #{ops_draw_forward.1} parent=39 // pred_fallthru
        _
    $region40: #{ops_draw_forward.1} parent=5 // pred_fallthru
      _
  $region6: #{ops_draw_forward.1} parent=0 // loop_footer
    %s13 = sadd.s32 1, %s9
  $region7: #{ops_draw_forward.1} parent=0 // loop_footer_branch
    %8 = sbr.rel target = $region3
  $region8: #{ops_draw_forward.1} parent=0 // loop_exit
    _

</llo_original>
